<compile_context>
chip_gen: v7x
topology: tpu7x:2x2x1
jax: 0.10.0
libtpu: 0.0.40
codegen_flags: <defaults>
</compile_context>

<pallas_src>
import functools
import math

import jax
import jax.numpy as jnp
from jax.experimental import pallas as pl
from jax.experimental.pallas import tpu as pltpu


# ----------------------------- in-kernel helpers -----------------------------

def _layernorm(x, g, b, eps):
    mean = jnp.mean(x, axis=-1, keepdims=True)
    var = jnp.mean((x - mean) ** 2, axis=-1, keepdims=True)
    return (x - mean) * jax.lax.rsqrt(var + eps) * g + b


def _gelu(x):
    # exact (erf) GELU, as used by HF bert-base-uncased
    return 0.5 * x * (1.0 + jax.lax.erf(x * 0.7071067811865476))


# ----------------------------- fused encoder kernel -----------------------------

def _encoder_kernel(x_ref, embg_ref, embb_ref,
                    qkvw_ref, qkvb_ref, ow_ref, ob_ref, ln1g_ref, ln1b_ref,
                    ff1w_ref, ff1b_ref, ff2w_ref, ff2b_ref, ln2g_ref, ln2b_ref,
                    o_ref, ctx_ref,
                    *, B, S, nh, dh, scale, eps):
    """One grid step == one encoder layer.

    The activation lives in o_ref (constant out index_map -> kept resident in
    VMEM across the layer grid); layer l consumes the activation written by
    layer l-1.  Layer 0 additionally applies the embedding LayerNorm to the raw
    summed embeddings (x_ref), so embeddings->encoder is one pallas_call.
    """
    H = nh * dh

    @pl.when(pl.program_id(0) == 0)
    def _():
        o_ref[...] = _layernorm(x_ref[...].astype(jnp.float32),
                                embg_ref[...], embb_ref[...], eps
                                ).astype(o_ref.dtype)
        # embedding dropout p=0.1 -> identity (eval)

    x = o_ref[...].astype(jnp.float32)                      # (N, H) resident

    # --- fused QKV projection: one MXU pass, bf16 operands, f32 accumulation ---
    qkv = jnp.dot(x.astype(jnp.bfloat16), qkvw_ref[...],
                  preferred_element_type=jnp.float32) + qkvb_ref[...]
    q = qkv[:, 0 * H:1 * H]
    k = qkv[:, 1 * H:2 * H]
    v = qkv[:, 2 * H:3 * H]

    # --- scaled dot-product attention: all (batch, head) slices in-kernel ---
    for b in range(B):
        r0 = b * S
        for h in range(nh):
            c0 = h * dh
            qh = q[r0:r0 + S, c0:c0 + dh]
            kh = k[r0:r0 + S, c0:c0 + dh]
            vh = v[r0:r0 + S, c0:c0 + dh]
            s = jnp.einsum("qd,kd->qk", qh, kh,
                           preferred_element_type=jnp.float32) * scale
            m = jnp.max(s, axis=-1, keepdims=True)
            p = jnp.exp(s - m)
            p = p * pl.reciprocal(jnp.sum(p, axis=-1, keepdims=True), approx=True)
            ctx_ref[r0:r0 + S, c0:c0 + dh] = jnp.dot(
                p, vh, preferred_element_type=jnp.float32)

    # --- attention output projection + residual + LayerNorm (dropout=identity) ---
    attn = jnp.dot(ctx_ref[...].astype(jnp.bfloat16), ow_ref[...],
                   preferred_element_type=jnp.float32) + ob_ref[...]
    x1 = _layernorm(x + attn, ln1g_ref[...], ln1b_ref[...], eps)

    # --- feed-forward (GELU) + residual + LayerNorm ---
    ff = jnp.dot(x1.astype(jnp.bfloat16), ff1w_ref[...],
                 preferred_element_type=jnp.float32) + ff1b_ref[...]
    ff = _gelu(ff)
    ff = jnp.dot(ff.astype(jnp.bfloat16), ff2w_ref[...],
                 preferred_element_type=jnp.float32) + ff2b_ref[...]
    x2 = _layernorm(x1 + ff, ln2g_ref[...], ln2b_ref[...], eps)

    o_ref[...] = x2.astype(o_ref.dtype)


def pallas_encoder(x_sum, pk, B, S, cfg):
    """x_sum: (B*S, H) summed token+pos+type embeddings (pre-LayerNorm)."""
    H, I, L = cfg["hidden"], cfg["intermediate"], cfg["layers"]
    nh = cfg["heads"]
    dh = H // nh
    N = B * S

    def full(shape):            # whole array, resident across the layer grid
        return pl.BlockSpec(shape, lambda l: (0,) * len(shape))

    def per_layer(shape):       # leading layer dim indexed by grid, squeezed
        return pl.BlockSpec((None,) + shape, lambda l: (l,) + (0,) * len(shape))

    kernel = functools.partial(_encoder_kernel, B=B, S=S, nh=nh, dh=dh,
                               scale=1.0 / math.sqrt(dh), eps=1e-12)

    return pl.pallas_call(
        kernel,
        grid=(L,),
        in_specs=[
            full((N, H)),                      # summed embeddings
            full((1, H)), full((1, H)),        # embedding LN gamma / beta
            per_layer((H, 3 * H)), per_layer((1, 3 * H)),   # fused QKV
            per_layer((H, H)), per_layer((1, H)),           # attn out proj
            per_layer((1, H)), per_layer((1, H)),           # LN1
            per_layer((H, I)), per_layer((1, I)),           # FFN up
            per_layer((I, H)), per_layer((1, H)),           # FFN down
            per_layer((1, H)), per_layer((1, H)),           # LN2
        ],
        out_specs=full((N, H)),
        out_shape=jax.ShapeDtypeStruct((N, H), jnp.float32),
        scratch_shapes=[pltpu.VMEM((N, H), jnp.float32)],   # attention context
        compiler_params=pltpu.CompilerParams(
            dimension_semantics=("arbitrary",)),            # layers are sequential
    )(x_sum,
      pk["emb_ln_g"], pk["emb_ln_b"],
      pk["qkv_w"], pk["qkv_b"], pk["o_w"], pk["o_b"], pk["ln1_g"], pk["ln1_b"],
      pk["ff1_w"], pk["ff1_b"], pk["ff2_w"], pk["ff2_b"], pk["ln2_g"], pk["ln2_b"])


# ----------------------------- fused pooler + classifier kernel -----------------------------

def _head_kernel(cls_ref, pw_ref, pb_ref, fw_ref, fb_ref, o_ref):
    x = cls_ref[...].astype(jnp.float32)
    pooled = jnp.tanh(jnp.dot(x.astype(jnp.bfloat16), pw_ref[...],
                              preferred_element_type=jnp.float32) + pb_ref[...])
    # self.dropout(p=0.1) -> identity (eval)
    logits = jnp.dot(pooled.astype(jnp.bfloat16), fw_ref[...],
                     preferred_element_type=jnp.float32) + fb_ref[...]
    o_ref[...] = logits.astype(o_ref.dtype)


def pallas_head(cls, pool_w, pool_b, fc_w, fc_b):
    B, H = cls.shape
    C = fc_w.shape[1]

    def full(shape):
        return pl.BlockSpec(shape, lambda i: (0,) * len(shape))

    return pl.pallas_call(
        _head_kernel,
        grid=(1,),
        in_specs=[full((B, H)), full((H, H)), full((1, H)),
                  full((H, C)), full((1, C))],
        out_specs=full((B, C)),
        out_shape=jax.ShapeDtypeStruct((B, C), jnp.float32),
    )(cls, pool_w, pool_b, fc_w, fc_b)


# ----------------------------- model definition -----------------------------

CFG = dict(
    vocab_size=100,
    type_vocab_size=2,
    max_position=16,
    hidden=32,
    heads=4,
    intermediate=128,
    layers=2,
    num_classes=2,
)


def init_params(key, cfg):
    std = 0.02
    ks = iter(jax.random.split(key, 64))
    nrm = lambda shape: (std * jax.random.normal(next(ks), shape)).astype(jnp.float32)
    zeros = lambda shape: jnp.zeros(shape, jnp.float32)
    ones = lambda shape: jnp.ones(shape, jnp.float32)
    H, I = cfg["hidden"], cfg["intermediate"]

    params = dict(
        word_emb=nrm((cfg["vocab_size"], H)),
        pos_emb=nrm((cfg["max_position"], H)),
        type_emb=nrm((cfg["type_vocab_size"], H)),
        emb_ln_g=ones((H,)), emb_ln_b=zeros((H,)),
        pool_w=nrm((H, H)), pool_b=zeros((H,)),
        fc_w=nrm((H, cfg["num_classes"])), fc_b=zeros((cfg["num_classes"],)),
        layers=[],
    )
    for _ in range(cfg["layers"]):
        params["layers"].append(dict(
            q_w=nrm((H, H)), q_b=zeros((H,)),
            k_w=nrm((H, H)), k_b=zeros((H,)),
            v_w=nrm((H, H)), v_b=zeros((H,)),
            o_w=nrm((H, H)), o_b=zeros((H,)),
            ln1_g=ones((H,)), ln1_b=zeros((H,)),
            ff1_w=nrm((H, I)), ff1_b=zeros((I,)),
            ff2_w=nrm((I, H)), ff2_b=zeros((H,)),
            ln2_g=ones((H,)), ln2_b=zeros((H,)),
        ))
    return params


def pack_params(params):
    """Stack per-layer weights with a leading layer dim; cast matmul weights to bf16."""
    layers = params["layers"]
    bf = lambda a: a.astype(jnp.bfloat16)
    row = lambda a: a.reshape(1, -1)

    return dict(
        emb_ln_g=row(params["emb_ln_g"]),
        emb_ln_b=row(params["emb_ln_b"]),
        qkv_w=bf(jnp.stack([jnp.concatenate([l["q_w"], l["k_w"], l["v_w"]], axis=1)
                            for l in layers])),                               # (L, H, 3H)
        qkv_b=jnp.stack([row(jnp.concatenate([l["q_b"], l["k_b"], l["v_b"]]))
                         for l in layers]),                                   # (L, 1, 3H)
        o_w=bf(jnp.stack([l["o_w"] for l in layers])),
        o_b=jnp.stack([row(l["o_b"]) for l in layers]),
        ln1_g=jnp.stack([row(l["ln1_g"]) for l in layers]),
        ln1_b=jnp.stack([row(l["ln1_b"]) for l in layers]),
        ff1_w=bf(jnp.stack([l["ff1_w"] for l in layers])),
        ff1_b=jnp.stack([row(l["ff1_b"]) for l in layers]),
        ff2_w=bf(jnp.stack([l["ff2_w"] for l in layers])),
        ff2_b=jnp.stack([row(l["ff2_b"]) for l in layers]),
        ln2_g=jnp.stack([row(l["ln2_g"]) for l in layers]),
        ln2_b=jnp.stack([row(l["ln2_b"]) for l in layers]),
        pool_w=bf(params["pool_w"]),
        pool_b=row(params["pool_b"]),
        fc_w=bf(params["fc_w"]),
        fc_b=row(params["fc_b"]),
    )


def model_forward(params, packed, input_ids, token_type_ids, cfg):
    B, S = input_ids.shape
    H = cfg["hidden"]

    # --- bert.embeddings: gathers in JAX glue (tiny lookups), LN fused into encoder ---
    we = params["word_emb"][input_ids]                       # (B, S, H)
    pe = params["pos_emb"][jnp.arange(S)][None, :, :]        # (1, S, H)
    te = params["type_emb"][token_type_ids]                  # (B, S, H)
    x_sum = (we + pe + te).reshape(B * S, H)

    # --- embedding-LN + full encoder stack: ONE pallas_call ---
    x = pallas_encoder(x_sum, packed, B, S, cfg)             # (B*S, H)

    # --- bert.pooler (first token -> dense -> tanh) + dropout + fc: ONE pallas_call ---
    cls = x.reshape(B, S, H)[:, 0, :]                        # (B, H)
    logits = pallas_head(cls, packed["pool_w"], packed["pool_b"],
                         packed["fc_w"], packed["fc_b"])     # (B, 2)
    return logits


# ----------------------------- main -----------------------------

if __name__ == "__main__":
    key = jax.random.PRNGKey(0)
    k_param, k_ids, k_type = jax.random.split(key, 3)

    params = init_params(k_param, CFG)
    packed = pack_params(params)

    B, S = 2, 8
    input_ids = jax.random.randint(k_ids, (B, S), 0, CFG["vocab_size"], dtype=jnp.int32)
    input_ids = input_ids.at[:, 0].set(1)  # CLS-like token
    token_type_ids = jnp.zeros((B, S), dtype=jnp.int32)

    logits = model_forward(params, packed, input_ids, token_type_ids, CFG)
    logits = jax.block_until_ready(logits)

    assert logits.shape == (B, CFG["num_classes"])
    assert logits.dtype == jnp.float32
    assert bool(jnp.all(jnp.isfinite(logits)))
    print("KERNEL_OK")
</pallas_src>

<mosaic_0001>
module attributes {stable_mosaic.version = 11 : i64} {
  func.func @_encoder_kernel(%arg0: i32, %arg1: memref<16x32xf32, #tpu.memory_space<vmem>>, %arg2: memref<1x32xf32, #tpu.memory_space<vmem>>, %arg3: memref<1x32xf32, #tpu.memory_space<vmem>>, %arg4: memref<1x32x96xbf16, #tpu.memory_space<vmem>>, %arg5: memref<1x1x96xf32, #tpu.memory_space<vmem>>, %arg6: memref<1x32x32xbf16, #tpu.memory_space<vmem>>, %arg7: memref<1x1x32xf32, #tpu.memory_space<vmem>>, %arg8: memref<1x1x32xf32, #tpu.memory_space<vmem>>, %arg9: memref<1x1x32xf32, #tpu.memory_space<vmem>>, %arg10: memref<1x32x128xbf16, #tpu.memory_space<vmem>>, %arg11: memref<1x1x128xf32, #tpu.memory_space<vmem>>, %arg12: memref<1x128x32xbf16, #tpu.memory_space<vmem>>, %arg13: memref<1x1x32xf32, #tpu.memory_space<vmem>>, %arg14: memref<1x1x32xf32, #tpu.memory_space<vmem>>, %arg15: memref<1x1x32xf32, #tpu.memory_space<vmem>>, %arg16: memref<16x32xf32, #tpu.memory_space<vmem>>, %arg17: memref<16x32xf32, #tpu.memory_space<vmem>>) attributes {dimension_semantics = [#tpu.dimension_semantics<arbitrary>], iteration_bounds = array<i64: 2>, scalar_prefetch = 0 : i64, scratch_operands = 1 : i64, tpu.core_type = #tpu.core_type<tc>, window_params = [{pipeline_mode = #tpu.pipeline_mode<synchronous>, transform_indices = @transform_0, window_bounds = array<i64: 16, 32>}, {pipeline_mode = #tpu.pipeline_mode<synchronous>, transform_indices = @transform_1, window_bounds = array<i64: 1, 32>}, {pipeline_mode = #tpu.pipeline_mode<synchronous>, transform_indices = @transform_2, window_bounds = array<i64: 1, 32>}, {transform_indices = @transform_3, window_bounds = array<i64: 1, 32, 96>}, {transform_indices = @transform_4, window_bounds = array<i64: 1, 1, 96>}, {transform_indices = @transform_5, window_bounds = array<i64: 1, 32, 32>}, {transform_indices = @transform_6, window_bounds = array<i64: 1, 1, 32>}, {transform_indices = @transform_7, window_bounds = array<i64: 1, 1, 32>}, {transform_indices = @transform_8, window_bounds = array<i64: 1, 1, 32>}, {transform_indices = @transform_9, window_bounds = array<i64: 1, 32, 128>}, {transform_indices = @transform_10, window_bounds = array<i64: 1, 1, 128>}, {transform_indices = @transform_11, window_bounds = array<i64: 1, 128, 32>}, {transform_indices = @transform_12, window_bounds = array<i64: 1, 1, 32>}, {transform_indices = @transform_13, window_bounds = array<i64: 1, 1, 32>}, {transform_indices = @transform_14, window_bounds = array<i64: 1, 1, 32>}, {pipeline_mode = #tpu.pipeline_mode<synchronous>, transform_indices = @transform_15, window_bounds = array<i64: 16, 32>}]} {
    %c0_i32 = arith.constant 0 : i32
    %0 = arith.cmpi eq, %arg0, %c0_i32 : i32
    %1 = arith.extui %0 : i1 to i32
    %c0_i32_0 = arith.constant 0 : i32
    %2 = arith.cmpi ne, %1, %c0_i32_0 : i32
    scf.if %2 {
      %c0_111 = arith.constant 0 : index
      %c0_112 = arith.constant 0 : index
      %247 = vector.load %arg1[%c0_111, %c0_112] : memref<16x32xf32, #tpu.memory_space<vmem>>, vector<16x32xf32>
      %c0_113 = arith.constant 0 : index
      %c0_114 = arith.constant 0 : index
      %248 = vector.load %arg2[%c0_113, %c0_114] : memref<1x32xf32, #tpu.memory_space<vmem>>, vector<1x32xf32>
      %c0_115 = arith.constant 0 : index
      %c0_116 = arith.constant 0 : index
      %249 = vector.load %arg3[%c0_115, %c0_116] : memref<1x32xf32, #tpu.memory_space<vmem>>, vector<1x32xf32>
      %cst_117 = arith.constant dense<0.000000e+00> : vector<16xf32>
      %250 = vector.multi_reduction <add>, %247, %cst_117 [1] : vector<16x32xf32> to vector<16xf32>
      %251 = vector.shape_cast %250 : vector<16xf32> to vector<16x1xf32>
      %cst_118 = arith.constant 3.200000e+01 : f32
      %252 = vector.broadcast %cst_118 : f32 to vector<16x1xf32>
      %253 = arith.divf %251, %252 : vector<16x1xf32>
      %254 = vector.broadcast %253 : vector<16x1xf32> to vector<16x32xf32>
      %255 = arith.subf %247, %254 : vector<16x32xf32>
      %256 = arith.mulf %255, %255 : vector<16x32xf32>
      %cst_119 = arith.constant dense<0.000000e+00> : vector<16xf32>
      %257 = vector.multi_reduction <add>, %256, %cst_119 [1] : vector<16x32xf32> to vector<16xf32>
      %258 = vector.shape_cast %257 : vector<16xf32> to vector<16x1xf32>
      %cst_120 = arith.constant 3.200000e+01 : f32
      %259 = vector.broadcast %cst_120 : f32 to vector<16x1xf32>
      %260 = arith.divf %258, %259 : vector<16x1xf32>
      %261 = vector.broadcast %253 : vector<16x1xf32> to vector<16x32xf32>
      %262 = arith.subf %247, %261 : vector<16x32xf32>
      %cst_121 = arith.constant 9.99999996E-13 : f32
      %263 = vector.broadcast %cst_121 : f32 to vector<16x1xf32>
      %264 = arith.addf %260, %263 : vector<16x1xf32>
      %265 = math.rsqrt %264 : vector<16x1xf32>
      %266 = vector.broadcast %265 : vector<16x1xf32> to vector<16x32xf32>
      %267 = arith.mulf %262, %266 : vector<16x32xf32>
      %268 = vector.broadcast %248 : vector<1x32xf32> to vector<16x32xf32>
      %269 = arith.mulf %267, %268 : vector<16x32xf32>
      %270 = vector.broadcast %249 : vector<1x32xf32> to vector<16x32xf32>
      %271 = arith.addf %269, %270 : vector<16x32xf32>
      %c0_122 = arith.constant 0 : index
      %c0_123 = arith.constant 0 : index
      %272 = vector.load %arg16[%c0_122, %c0_123] : memref<16x32xf32, #tpu.memory_space<vmem>>, vector<16x32xf32>
      tpu.vector_store %arg16[%c0_122, %c0_123], %271 {strides = array<i32>} : memref<16x32xf32, #tpu.memory_space<vmem>>, vector<16x32xf32>,
    } else {
    }
    %c0 = arith.constant 0 : index
    %c0_1 = arith.constant 0 : index
    %3 = vector.load %arg16[%c0, %c0_1] : memref<16x32xf32, #tpu.memory_space<vmem>>, vector<16x32xf32>
    %4 = arith.truncf %3 : vector<16x32xf32> to vector<16x32xbf16>
    %c0_2 = arith.constant 0 : index
    %c0_3 = arith.constant 0 : index
    %c0_4 = arith.constant 0 : index
    %5 = vector.load %arg4[%c0_2, %c0_3, %c0_4] : memref<1x32x96xbf16, #tpu.memory_space<vmem>>, vector<1x32x96xbf16>
    %6 = vector.shape_cast %5 : vector<1x32x96xbf16> to vector<32x96xbf16>
    %cst = arith.constant dense<0.000000e+00> : vector<16x96xf32>
    %7 = tpu.matmul %4, %6, %cst {dimension_numbers = #tpu.dot_dimension_numbers<[1], [0], [0], [1], [0, 0, 1, 1], [], []>} : vector<16x32xbf16>, vector<32x96xbf16>, vector<16x96xf32> -> vector<16x96xf32>
    %c0_5 = arith.constant 0 : index
    %c0_6 = arith.constant 0 : index
    %c0_7 = arith.constant 0 : index
    %8 = vector.load %arg5[%c0_5, %c0_6, %c0_7] : memref<1x1x96xf32, #tpu.memory_space<vmem>>, vector<1x1x96xf32>
    %9 = vector.shape_cast %8 : vector<1x1x96xf32> to vector<1x96xf32>
    %10 = vector.broadcast %9 : vector<1x96xf32> to vector<16x96xf32>
    %11 = arith.addf %7, %10 : vector<16x96xf32>
    %12 = vector.extract_strided_slice %11 {offsets = [0, 0], sizes = [16, 32], strides = [1, 1]} : vector<16x96xf32> to vector<16x32xf32>
    %13 = vector.extract_strided_slice %11 {offsets = [0, 32], sizes = [16, 32], strides = [1, 1]} : vector<16x96xf32> to vector<16x32xf32>
    %14 = vector.extract_strided_slice %11 {offsets = [0, 64], sizes = [16, 32], strides = [1, 1]} : vector<16x96xf32> to vector<16x32xf32>
    %15 = vector.extract_strided_slice %12 {offsets = [0, 0], sizes = [8, 8], strides = [1, 1]} : vector<16x32xf32> to vector<8x8xf32>
    %16 = vector.extract_strided_slice %13 {offsets = [0, 0], sizes = [8, 8], strides = [1, 1]} : vector<16x32xf32> to vector<8x8xf32>
    %17 = vector.extract_strided_slice %14 {offsets = [0, 0], sizes = [8, 8], strides = [1, 1]} : vector<16x32xf32> to vector<8x8xf32>
    "tpu.trace_start"() <{level = 10 : i32, message = "qd,kd->qk"}> : () -> ()
    %cst_8 = arith.constant dense<0.000000e+00> : vector<8x8xf32>
    %18 = tpu.matmul %15, %16, %cst_8 {dimension_numbers = #tpu.dot_dimension_numbers<[1], [1], [0], [0], [0, 0, 1, 0], [], []>} : vector<8x8xf32>, vector<8x8xf32>, vector<8x8xf32> -> vector<8x8xf32>
    "tpu.trace_stop"() : () -> ()
    %cst_9 = arith.constant 0.353553385 : f32
    %19 = vector.broadcast %cst_9 : f32 to vector<8x8xf32>
    %20 = arith.mulf %18, %19 : vector<8x8xf32>
    %cst_10 = arith.constant dense<0xFF800000> : vector<8xf32>
    %21 = vector.multi_reduction <maximumf>, %20, %cst_10 [1] : vector<8x8xf32> to vector<8xf32>
    %22 = vector.shape_cast %21 : vector<8xf32> to vector<8x1xf32>
    %23 = vector.broadcast %22 : vector<8x1xf32> to vector<8x8xf32>
    %24 = arith.subf %20, %23 : vector<8x8xf32>
    %25 = math.exp %24 : vector<8x8xf32>
    %cst_11 = arith.constant dense<0.000000e+00> : vector<8xf32>
    %26 = vector.multi_reduction <add>, %25, %cst_11 [1] : vector<8x8xf32> to vector<8xf32>
    %27 = vector.shape_cast %26 : vector<8xf32> to vector<8x1xf32>
    %28 = tpu.reciprocal %27 {approx = true} : vector<8x1xf32> -> vector<8x1xf32>
    %29 = vector.broadcast %28 : vector<8x1xf32> to vector<8x8xf32>
    %30 = arith.mulf %25, %29 : vector<8x8xf32>
    %cst_12 = arith.constant dense<0.000000e+00> : vector<8x8xf32>
    %31 = tpu.matmul %30, %17, %cst_12 {dimension_numbers = #tpu.dot_dimension_numbers<[1], [0], [0], [1], [0, 0, 1, 1], [], []>} : vector<8x8xf32>, vector<8x8xf32>, vector<8x8xf32> -> vector<8x8xf32>
    %c0_13 = arith.constant 0 : index
    %c0_14 = arith.constant 0 : index
    %32 = vector.load %arg17[%c0_13, %c0_14] : memref<16x32xf32, #tpu.memory_space<vmem>>, vector<8x8xf32>
    tpu.vector_store %arg17[%c0_13, %c0_14], %31 {strides = array<i32>} : memref<16x32xf32, #tpu.memory_space<vmem>>, vector<8x8xf32>,
    %33 = vector.extract_strided_slice %12 {offsets = [0, 8], sizes = [8, 8], strides = [1, 1]} : vector<16x32xf32> to vector<8x8xf32>
    %34 = vector.extract_strided_slice %13 {offsets = [0, 8], sizes = [8, 8], strides = [1, 1]} : vector<16x32xf32> to vector<8x8xf32>
    %35 = vector.extract_strided_slice %14 {offsets = [0, 8], sizes = [8, 8], strides = [1, 1]} : vector<16x32xf32> to vector<8x8xf32>
    "tpu.trace_start"() <{level = 10 : i32, message = "qd,kd->qk"}> : () -> ()
    %cst_15 = arith.constant dense<0.000000e+00> : vector<8x8xf32>
    %36 = tpu.matmul %33, %34, %cst_15 {dimension_numbers = #tpu.dot_dimension_numbers<[1], [1], [0], [0], [0, 0, 1, 0], [], []>} : vector<8x8xf32>, vector<8x8xf32>, vector<8x8xf32> -> vector<8x8xf32>
    "tpu.trace_stop"() : () -> ()
    %cst_16 = arith.constant 0.353553385 : f32
    %37 = vector.broadcast %cst_16 : f32 to vector<8x8xf32>
    %38 = arith.mulf %36, %37 : vector<8x8xf32>
    %cst_17 = arith.constant dense<0xFF800000> : vector<8xf32>
    %39 = vector.multi_reduction <maximumf>, %38, %cst_17 [1] : vector<8x8xf32> to vector<8xf32>
    %40 = vector.shape_cast %39 : vector<8xf32> to vector<8x1xf32>
    %41 = vector.broadcast %40 : vector<8x1xf32> to vector<8x8xf32>
    %42 = arith.subf %38, %41 : vector<8x8xf32>
    %43 = math.exp %42 : vector<8x8xf32>
    %cst_18 = arith.constant dense<0.000000e+00> : vector<8xf32>
    %44 = vector.multi_reduction <add>, %43, %cst_18 [1] : vector<8x8xf32> to vector<8xf32>
    %45 = vector.shape_cast %44 : vector<8xf32> to vector<8x1xf32>
    %46 = tpu.reciprocal %45 {approx = true} : vector<8x1xf32> -> vector<8x1xf32>
    %47 = vector.broadcast %46 : vector<8x1xf32> to vector<8x8xf32>
    %48 = arith.mulf %43, %47 : vector<8x8xf32>
    %cst_19 = arith.constant dense<0.000000e+00> : vector<8x8xf32>
    %49 = tpu.matmul %48, %35, %cst_19 {dimension_numbers = #tpu.dot_dimension_numbers<[1], [0], [0], [1], [0, 0, 1, 1], [], []>} : vector<8x8xf32>, vector<8x8xf32>, vector<8x8xf32> -> vector<8x8xf32>
    %c0_20 = arith.constant 0 : index
    %c8 = arith.constant 8 : index
    %50 = vector.load %arg17[%c0_20, %c8] : memref<16x32xf32, #tpu.memory_space<vmem>>, vector<8x8xf32>
    tpu.vector_store %arg17[%c0_20, %c8], %49 {strides = array<i32>} : memref<16x32xf32, #tpu.memory_space<vmem>>, vector<8x8xf32>,
    %51 = vector.extract_strided_slice %12 {offsets = [0, 16], sizes = [8, 8], strides = [1, 1]} : vector<16x32xf32> to vector<8x8xf32>
    %52 = vector.extract_strided_slice %13 {offsets = [0, 16], sizes = [8, 8], strides = [1, 1]} : vector<16x32xf32> to vector<8x8xf32>
    %53 = vector.extract_strided_slice %14 {offsets = [0, 16], sizes = [8, 8], strides = [1, 1]} : vector<16x32xf32> to vector<8x8xf32>
    "tpu.trace_start"() <{level = 10 : i32, message = "qd,kd->qk"}> : () -> ()
    %cst_21 = arith.constant dense<0.000000e+00> : vector<8x8xf32>
    %54 = tpu.matmul %51, %52, %cst_21 {dimension_numbers = #tpu.dot_dimension_numbers<[1], [1], [0], [0], [0, 0, 1, 0], [], []>} : vector<8x8xf32>, vector<8x8xf32>, vector<8x8xf32> -> vector<8x8xf32>
    "tpu.trace_stop"() : () -> ()
    %cst_22 = arith.constant 0.353553385 : f32
    %55 = vector.broadcast %cst_22 : f32 to vector<8x8xf32>
    %56 = arith.mulf %54, %55 : vector<8x8xf32>
    %cst_23 = arith.constant dense<0xFF800000> : vector<8xf32>
    %57 = vector.multi_reduction <maximumf>, %56, %cst_23 [1] : vector<8x8xf32> to vector<8xf32>
    %58 = vector.shape_cast %57 : vector<8xf32> to vector<8x1xf32>
    %59 = vector.broadcast %58 : vector<8x1xf32> to vector<8x8xf32>
    %60 = arith.subf %56, %59 : vector<8x8xf32>
    %61 = math.exp %60 : vector<8x8xf32>
    %cst_24 = arith.constant dense<0.000000e+00> : vector<8xf32>
    %62 = vector.multi_reduction <add>, %61, %cst_24 [1] : vector<8x8xf32> to vector<8xf32>
    %63 = vector.shape_cast %62 : vector<8xf32> to vector<8x1xf32>
    %64 = tpu.reciprocal %63 {approx = true} : vector<8x1xf32> -> vector<8x1xf32>
    %65 = vector.broadcast %64 : vector<8x1xf32> to vector<8x8xf32>
    %66 = arith.mulf %61, %65 : vector<8x8xf32>
    %cst_25 = arith.constant dense<0.000000e+00> : vector<8x8xf32>
    %67 = tpu.matmul %66, %53, %cst_25 {dimension_numbers = #tpu.dot_dimension_numbers<[1], [0], [0], [1], [0, 0, 1, 1], [], []>} : vector<8x8xf32>, vector<8x8xf32>, vector<8x8xf32> -> vector<8x8xf32>
    %c0_26 = arith.constant 0 : index
    %c16 = arith.constant 16 : index
    %68 = vector.load %arg17[%c0_26, %c16] : memref<16x32xf32, #tpu.memory_space<vmem>>, vector<8x8xf32>
    tpu.vector_store %arg17[%c0_26, %c16], %67 {strides = array<i32>} : memref<16x32xf32, #tpu.memory_space<vmem>>, vector<8x8xf32>,
    %69 = vector.extract_strided_slice %12 {offsets = [0, 24], sizes = [8, 8], strides = [1, 1]} : vector<16x32xf32> to vector<8x8xf32>
    %70 = vector.extract_strided_slice %13 {offsets = [0, 24], sizes = [8, 8], strides = [1, 1]} : vector<16x32xf32> to vector<8x8xf32>
    %71 = vector.extract_strided_slice %14 {offsets = [0, 24], sizes = [8, 8], strides = [1, 1]} : vector<16x32xf32> to vector<8x8xf32>
    "tpu.trace_start"() <{level = 10 : i32, message = "qd,kd->qk"}> : () -> ()
    %cst_27 = arith.constant dense<0.000000e+00> : vector<8x8xf32>
    %72 = tpu.matmul %69, %70, %cst_27 {dimension_numbers = #tpu.dot_dimension_numbers<[1], [1], [0], [0], [0, 0, 1, 0], [], []>} : vector<8x8xf32>, vector<8x8xf32>, vector<8x8xf32> -> vector<8x8xf32>
    "tpu.trace_stop"() : () -> ()
    %cst_28 = arith.constant 0.353553385 : f32
    %73 = vector.broadcast %cst_28 : f32 to vector<8x8xf32>
    %74 = arith.mulf %72, %73 : vector<8x8xf32>
    %cst_29 = arith.constant dense<0xFF800000> : vector<8xf32>
    %75 = vector.multi_reduction <maximumf>, %74, %cst_29 [1] : vector<8x8xf32> to vector<8xf32>
    %76 = vector.shape_cast %75 : vector<8xf32> to vector<8x1xf32>
    %77 = vector.broadcast %76 : vector<8x1xf32> to vector<8x8xf32>
    %78 = arith.subf %74, %77 : vector<8x8xf32>
    %79 = math.exp %78 : vector<8x8xf32>
    %cst_30 = arith.constant dense<0.000000e+00> : vector<8xf32>
    %80 = vector.multi_reduction <add>, %79, %cst_30 [1] : vector<8x8xf32> to vector<8xf32>
    %81 = vector.shape_cast %80 : vector<8xf32> to vector<8x1xf32>
    %82 = tpu.reciprocal %81 {approx = true} : vector<8x1xf32> -> vector<8x1xf32>
    %83 = vector.broadcast %82 : vector<8x1xf32> to vector<8x8xf32>
    %84 = arith.mulf %79, %83 : vector<8x8xf32>
    %cst_31 = arith.constant dense<0.000000e+00> : vector<8x8xf32>
    %85 = tpu.matmul %84, %71, %cst_31 {dimension_numbers = #tpu.dot_dimension_numbers<[1], [0], [0], [1], [0, 0, 1, 1], [], []>} : vector<8x8xf32>, vector<8x8xf32>, vector<8x8xf32> -> vector<8x8xf32>
    %c0_32 = arith.constant 0 : index
    %c24 = arith.constant 24 : index
    %86 = vector.load %arg17[%c0_32, %c24] : memref<16x32xf32, #tpu.memory_space<vmem>>, vector<8x8xf32>
    tpu.vector_store %arg17[%c0_32, %c24], %85 {strides = array<i32>} : memref<16x32xf32, #tpu.memory_space<vmem>>, vector<8x8xf32>,
    %87 = vector.extract_strided_slice %12 {offsets = [8, 0], sizes = [8, 8], strides = [1, 1]} : vector<16x32xf32> to vector<8x8xf32>
    %88 = vector.extract_strided_slice %13 {offsets = [8, 0], sizes = [8, 8], strides = [1, 1]} : vector<16x32xf32> to vector<8x8xf32>
    %89 = vector.extract_strided_slice %14 {offsets = [8, 0], sizes = [8, 8], strides = [1, 1]} : vector<16x32xf32> to vector<8x8xf32>
    "tpu.trace_start"() <{level = 10 : i32, message = "qd,kd->qk"}> : () -> ()
    %cst_33 = arith.constant dense<0.000000e+00> : vector<8x8xf32>
    %90 = tpu.matmul %87, %88, %cst_33 {dimension_numbers = #tpu.dot_dimension_numbers<[1], [1], [0], [0], [0, 0, 1, 0], [], []>} : vector<8x8xf32>, vector<8x8xf32>, vector<8x8xf32> -> vector<8x8xf32>
    "tpu.trace_stop"() : () -> ()
    %cst_34 = arith.constant 0.353553385 : f32
    %91 = vector.broadcast %cst_34 : f32 to vector<8x8xf32>
    %92 = arith.mulf %90, %91 : vector<8x8xf32>
    %cst_35 = arith.constant dense<0xFF800000> : vector<8xf32>
    %93 = vector.multi_reduction <maximumf>, %92, %cst_35 [1] : vector<8x8xf32> to vector<8xf32>
    %94 = vector.shape_cast %93 : vector<8xf32> to vector<8x1xf32>
    %95 = vector.broadcast %94 : vector<8x1xf32> to vector<8x8xf32>
    %96 = arith.subf %92, %95 : vector<8x8xf32>
    %97 = math.exp %96 : vector<8x8xf32>
    %cst_36 = arith.constant dense<0.000000e+00> : vector<8xf32>
    %98 = vector.multi_reduction <add>, %97, %cst_36 [1] : vector<8x8xf32> to vector<8xf32>
    %99 = vector.shape_cast %98 : vector<8xf32> to vector<8x1xf32>
    %100 = tpu.reciprocal %99 {approx = true} : vector<8x1xf32> -> vector<8x1xf32>
    %101 = vector.broadcast %100 : vector<8x1xf32> to vector<8x8xf32>
    %102 = arith.mulf %97, %101 : vector<8x8xf32>
    %cst_37 = arith.constant dense<0.000000e+00> : vector<8x8xf32>
    %103 = tpu.matmul %102, %89, %cst_37 {dimension_numbers = #tpu.dot_dimension_numbers<[1], [0], [0], [1], [0, 0, 1, 1], [], []>} : vector<8x8xf32>, vector<8x8xf32>, vector<8x8xf32> -> vector<8x8xf32>
    %c8_38 = arith.constant 8 : index
    %c0_39 = arith.constant 0 : index
    %104 = vector.load %arg17[%c8_38, %c0_39] : memref<16x32xf32, #tpu.memory_space<vmem>>, vector<8x8xf32>
    tpu.vector_store %arg17[%c8_38, %c0_39], %103 {strides = array<i32>} : memref<16x32xf32, #tpu.memory_space<vmem>>, vector<8x8xf32>,
    %105 = vector.extract_strided_slice %12 {offsets = [8, 8], sizes = [8, 8], strides = [1, 1]} : vector<16x32xf32> to vector<8x8xf32>
    %106 = vector.extract_strided_slice %13 {offsets = [8, 8], sizes = [8, 8], strides = [1, 1]} : vector<16x32xf32> to vector<8x8xf32>
    %107 = vector.extract_strided_slice %14 {offsets = [8, 8], sizes = [8, 8], strides = [1, 1]} : vector<16x32xf32> to vector<8x8xf32>
    "tpu.trace_start"() <{level = 10 : i32, message = "qd,kd->qk"}> : () -> ()
    %cst_40 = arith.constant dense<0.000000e+00> : vector<8x8xf32>
    %108 = tpu.matmul %105, %106, %cst_40 {dimension_numbers = #tpu.dot_dimension_numbers<[1], [1], [0], [0], [0, 0, 1, 0], [], []>} : vector<8x8xf32>, vector<8x8xf32>, vector<8x8xf32> -> vector<8x8xf32>
    "tpu.trace_stop"() : () -> ()
    %cst_41 = arith.constant 0.353553385 : f32
    %109 = vector.broadcast %cst_41 : f32 to vector<8x8xf32>
    %110 = arith.mulf %108, %109 : vector<8x8xf32>
    %cst_42 = arith.constant dense<0xFF800000> : vector<8xf32>
    %111 = vector.multi_reduction <maximumf>, %110, %cst_42 [1] : vector<8x8xf32> to vector<8xf32>
    %112 = vector.shape_cast %111 : vector<8xf32> to vector<8x1xf32>
    %113 = vector.broadcast %112 : vector<8x1xf32> to vector<8x8xf32>
    %114 = arith.subf %110, %113 : vector<8x8xf32>
    %115 = math.exp %114 : vector<8x8xf32>
    %cst_43 = arith.constant dense<0.000000e+00> : vector<8xf32>
    %116 = vector.multi_reduction <add>, %115, %cst_43 [1] : vector<8x8xf32> to vector<8xf32>
    %117 = vector.shape_cast %116 : vector<8xf32> to vector<8x1xf32>
    %118 = tpu.reciprocal %117 {approx = true} : vector<8x1xf32> -> vector<8x1xf32>
    %119 = vector.broadcast %118 : vector<8x1xf32> to vector<8x8xf32>
    %120 = arith.mulf %115, %119 : vector<8x8xf32>
    %cst_44 = arith.constant dense<0.000000e+00> : vector<8x8xf32>
    %121 = tpu.matmul %120, %107, %cst_44 {dimension_numbers = #tpu.dot_dimension_numbers<[1], [0], [0], [1], [0, 0, 1, 1], [], []>} : vector<8x8xf32>, vector<8x8xf32>, vector<8x8xf32> -> vector<8x8xf32>
    %c8_45 = arith.constant 8 : index
    %c8_46 = arith.constant 8 : index
    %122 = vector.load %arg17[%c8_45, %c8_46] : memref<16x32xf32, #tpu.memory_space<vmem>>, vector<8x8xf32>
    tpu.vector_store %arg17[%c8_45, %c8_46], %121 {strides = array<i32>} : memref<16x32xf32, #tpu.memory_space<vmem>>, vector<8x8xf32>,
    %123 = vector.extract_strided_slice %12 {offsets = [8, 16], sizes = [8, 8], strides = [1, 1]} : vector<16x32xf32> to vector<8x8xf32>
    %124 = vector.extract_strided_slice %13 {offsets = [8, 16], sizes = [8, 8], strides = [1, 1]} : vector<16x32xf32> to vector<8x8xf32>
    %125 = vector.extract_strided_slice %14 {offsets = [8, 16], sizes = [8, 8], strides = [1, 1]} : vector<16x32xf32> to vector<8x8xf32>
    "tpu.trace_start"() <{level = 10 : i32, message = "qd,kd->qk"}> : () -> ()
    %cst_47 = arith.constant dense<0.000000e+00> : vector<8x8xf32>
    %126 = tpu.matmul %123, %124, %cst_47 {dimension_numbers = #tpu.dot_dimension_numbers<[1], [1], [0], [0], [0, 0, 1, 0], [], []>} : vector<8x8xf32>, vector<8x8xf32>, vector<8x8xf32> -> vector<8x8xf32>
    "tpu.trace_stop"() : () -> ()
    %cst_48 = arith.constant 0.353553385 : f32
    %127 = vector.broadcast %cst_48 : f32 to vector<8x8xf32>
    %128 = arith.mulf %126, %127 : vector<8x8xf32>
    %cst_49 = arith.constant dense<0xFF800000> : vector<8xf32>
    %129 = vector.multi_reduction <maximumf>, %128, %cst_49 [1] : vector<8x8xf32> to vector<8xf32>
    %130 = vector.shape_cast %129 : vector<8xf32> to vector<8x1xf32>
    %131 = vector.broadcast %130 : vector<8x1xf32> to vector<8x8xf32>
    %132 = arith.subf %128, %131 : vector<8x8xf32>
    %133 = math.exp %132 : vector<8x8xf32>
    %cst_50 = arith.constant dense<0.000000e+00> : vector<8xf32>
    %134 = vector.multi_reduction <add>, %133, %cst_50 [1] : vector<8x8xf32> to vector<8xf32>
    %135 = vector.shape_cast %134 : vector<8xf32> to vector<8x1xf32>
    %136 = tpu.reciprocal %135 {approx = true} : vector<8x1xf32> -> vector<8x1xf32>
    %137 = vector.broadcast %136 : vector<8x1xf32> to vector<8x8xf32>
    %138 = arith.mulf %133, %137 : vector<8x8xf32>
    %cst_51 = arith.constant dense<0.000000e+00> : vector<8x8xf32>
    %139 = tpu.matmul %138, %125, %cst_51 {dimension_numbers = #tpu.dot_dimension_numbers<[1], [0], [0], [1], [0, 0, 1, 1], [], []>} : vector<8x8xf32>, vector<8x8xf32>, vector<8x8xf32> -> vector<8x8xf32>
    %c8_52 = arith.constant 8 : index
    %c16_53 = arith.constant 16 : index
    %140 = vector.load %arg17[%c8_52, %c16_53] : memref<16x32xf32, #tpu.memory_space<vmem>>, vector<8x8xf32>
    tpu.vector_store %arg17[%c8_52, %c16_53], %139 {strides = array<i32>} : memref<16x32xf32, #tpu.memory_space<vmem>>, vector<8x8xf32>,
    %141 = vector.extract_strided_slice %12 {offsets = [8, 24], sizes = [8, 8], strides = [1, 1]} : vector<16x32xf32> to vector<8x8xf32>
    %142 = vector.extract_strided_slice %13 {offsets = [8, 24], sizes = [8, 8], strides = [1, 1]} : vector<16x32xf32> to vector<8x8xf32>
    %143 = vector.extract_strided_slice %14 {offsets = [8, 24], sizes = [8, 8], strides = [1, 1]} : vector<16x32xf32> to vector<8x8xf32>
    "tpu.trace_start"() <{level = 10 : i32, message = "qd,kd->qk"}> : () -> ()
    %cst_54 = arith.constant dense<0.000000e+00> : vector<8x8xf32>
    %144 = tpu.matmul %141, %142, %cst_54 {dimension_numbers = #tpu.dot_dimension_numbers<[1], [1], [0], [0], [0, 0, 1, 0], [], []>} : vector<8x8xf32>, vector<8x8xf32>, vector<8x8xf32> -> vector<8x8xf32>
    "tpu.trace_stop"() : () -> ()
    %cst_55 = arith.constant 0.353553385 : f32
    %145 = vector.broadcast %cst_55 : f32 to vector<8x8xf32>
    %146 = arith.mulf %144, %145 : vector<8x8xf32>
    %cst_56 = arith.constant dense<0xFF800000> : vector<8xf32>
    %147 = vector.multi_reduction <maximumf>, %146, %cst_56 [1] : vector<8x8xf32> to vector<8xf32>
    %148 = vector.shape_cast %147 : vector<8xf32> to vector<8x1xf32>
    %149 = vector.broadcast %148 : vector<8x1xf32> to vector<8x8xf32>
    %150 = arith.subf %146, %149 : vector<8x8xf32>
    %151 = math.exp %150 : vector<8x8xf32>
    %cst_57 = arith.constant dense<0.000000e+00> : vector<8xf32>
    %152 = vector.multi_reduction <add>, %151, %cst_57 [1] : vector<8x8xf32> to vector<8xf32>
    %153 = vector.shape_cast %152 : vector<8xf32> to vector<8x1xf32>
    %154 = tpu.reciprocal %153 {approx = true} : vector<8x1xf32> -> vector<8x1xf32>
    %155 = vector.broadcast %154 : vector<8x1xf32> to vector<8x8xf32>
    %156 = arith.mulf %151, %155 : vector<8x8xf32>
    %cst_58 = arith.constant dense<0.000000e+00> : vector<8x8xf32>
    %157 = tpu.matmul %156, %143, %cst_58 {dimension_numbers = #tpu.dot_dimension_numbers<[1], [0], [0], [1], [0, 0, 1, 1], [], []>} : vector<8x8xf32>, vector<8x8xf32>, vector<8x8xf32> -> vector<8x8xf32>
    %c8_59 = arith.constant 8 : index
    %c24_60 = arith.constant 24 : index
    %158 = vector.load %arg17[%c8_59, %c24_60] : memref<16x32xf32, #tpu.memory_space<vmem>>, vector<8x8xf32>
    tpu.vector_store %arg17[%c8_59, %c24_60], %157 {strides = array<i32>} : memref<16x32xf32, #tpu.memory_space<vmem>>, vector<8x8xf32>,
    %c0_61 = arith.constant 0 : index
    %c0_62 = arith.constant 0 : index
    %159 = vector.load %arg17[%c0_61, %c0_62] : memref<16x32xf32, #tpu.memory_space<vmem>>, vector<16x32xf32>
    %160 = arith.truncf %159 : vector<16x32xf32> to vector<16x32xbf16>
    %c0_63 = arith.constant 0 : index
    %c0_64 = arith.constant 0 : index
    %c0_65 = arith.constant 0 : index
    %161 = vector.load %arg6[%c0_63, %c0_64, %c0_65] : memref<1x32x32xbf16, #tpu.memory_space<vmem>>, vector<1x32x32xbf16>
    %162 = vector.shape_cast %161 : vector<1x32x32xbf16> to vector<32x32xbf16>
    %cst_66 = arith.constant dense<0.000000e+00> : vector<16x32xf32>
    %163 = tpu.matmul %160, %162, %cst_66 {dimension_numbers = #tpu.dot_dimension_numbers<[1], [0], [0], [1], [0, 0, 1, 1], [], []>} : vector<16x32xbf16>, vector<32x32xbf16>, vector<16x32xf32> -> vector<16x32xf32>
    %c0_67 = arith.constant 0 : index
    %c0_68 = arith.constant 0 : index
    %c0_69 = arith.constant 0 : index
    %164 = vector.load %arg7[%c0_67, %c0_68, %c0_69] : memref<1x1x32xf32, #tpu.memory_space<vmem>>, vector<1x1x32xf32>
    %165 = vector.shape_cast %164 : vector<1x1x32xf32> to vector<1x32xf32>
    %166 = vector.broadcast %165 : vector<1x32xf32> to vector<16x32xf32>
    %167 = arith.addf %163, %166 : vector<16x32xf32>
    %168 = arith.addf %3, %167 : vector<16x32xf32>
    %c0_70 = arith.constant 0 : index
    %c0_71 = arith.constant 0 : index
    %c0_72 = arith.constant 0 : index
    %169 = vector.load %arg8[%c0_70, %c0_71, %c0_72] : memref<1x1x32xf32, #tpu.memory_space<vmem>>, vector<1x1x32xf32>
    %170 = vector.shape_cast %169 : vector<1x1x32xf32> to vector<1x32xf32>
    %c0_73 = arith.constant 0 : index
    %c0_74 = arith.constant 0 : index
    %c0_75 = arith.constant 0 : index
    %171 = vector.load %arg9[%c0_73, %c0_74, %c0_75] : memref<1x1x32xf32, #tpu.memory_space<vmem>>, vector<1x1x32xf32>
    %172 = vector.shape_cast %171 : vector<1x1x32xf32> to vector<1x32xf32>
    %cst_76 = arith.constant dense<0.000000e+00> : vector<16xf32>
    %173 = vector.multi_reduction <add>, %168, %cst_76 [1] : vector<16x32xf32> to vector<16xf32>
    %174 = vector.shape_cast %173 : vector<16xf32> to vector<16x1xf32>
    %cst_77 = arith.constant 3.200000e+01 : f32
    %175 = vector.broadcast %cst_77 : f32 to vector<16x1xf32>
    %176 = arith.divf %174, %175 : vector<16x1xf32>
    %177 = vector.broadcast %176 : vector<16x1xf32> to vector<16x32xf32>
    %178 = arith.subf %168, %177 : vector<16x32xf32>
    %179 = arith.mulf %178, %178 : vector<16x32xf32>
    %cst_78 = arith.constant dense<0.000000e+00> : vector<16xf32>
    %180 = vector.multi_reduction <add>, %179, %cst_78 [1] : vector<16x32xf32> to vector<16xf32>
    %181 = vector.shape_cast %180 : vector<16xf32> to vector<16x1xf32>
    %cst_79 = arith.constant 3.200000e+01 : f32
    %182 = vector.broadcast %cst_79 : f32 to vector<16x1xf32>
    %183 = arith.divf %181, %182 : vector<16x1xf32>
    %184 = vector.broadcast %176 : vector<16x1xf32> to vector<16x32xf32>
    %185 = arith.subf %168, %184 : vector<16x32xf32>
    %cst_80 = arith.constant 9.99999996E-13 : f32
    %186 = vector.broadcast %cst_80 : f32 to vector<16x1xf32>
    %187 = arith.addf %183, %186 : vector<16x1xf32>
    %188 = math.rsqrt %187 : vector<16x1xf32>
    %189 = vector.broadcast %188 : vector<16x1xf32> to vector<16x32xf32>
    %190 = arith.mulf %185, %189 : vector<16x32xf32>
    %191 = vector.broadcast %170 : vector<1x32xf32> to vector<16x32xf32>
    %192 = arith.mulf %190, %191 : vector<16x32xf32>
    %193 = vector.broadcast %172 : vector<1x32xf32> to vector<16x32xf32>
    %194 = arith.addf %192, %193 : vector<16x32xf32>
    %195 = arith.truncf %194 : vector<16x32xf32> to vector<16x32xbf16>
    %c0_81 = arith.constant 0 : index
    %c0_82 = arith.constant 0 : index
    %c0_83 = arith.constant 0 : index
    %196 = vector.load %arg10[%c0_81, %c0_82, %c0_83] : memref<1x32x128xbf16, #tpu.memory_space<vmem>>, vector<1x32x128xbf16>
    %197 = vector.shape_cast %196 : vector<1x32x128xbf16> to vector<32x128xbf16>
    %cst_84 = arith.constant dense<0.000000e+00> : vector<16x128xf32>
    %198 = tpu.matmul %195, %197, %cst_84 {dimension_numbers = #tpu.dot_dimension_numbers<[1], [0], [0], [1], [0, 0, 1, 1], [], []>} : vector<16x32xbf16>, vector<32x128xbf16>, vector<16x128xf32> -> vector<16x128xf32>
    %c0_85 = arith.constant 0 : index
    %c0_86 = arith.constant 0 : index
    %c0_87 = arith.constant 0 : index
    %199 = vector.load %arg11[%c0_85, %c0_86, %c0_87] : memref<1x1x128xf32, #tpu.memory_space<vmem>>, vector<1x1x128xf32>
    %200 = vector.shape_cast %199 : vector<1x1x128xf32> to vector<1x128xf32>
    %201 = vector.broadcast %200 : vector<1x128xf32> to vector<16x128xf32>
    %202 = arith.addf %198, %201 : vector<16x128xf32>
    %cst_88 = arith.constant 5.000000e-01 : f32
    %203 = vector.broadcast %cst_88 : f32 to vector<16x128xf32>
    %204 = arith.mulf %203, %202 : vector<16x128xf32>
    %cst_89 = arith.constant 0.707106769 : f32
    %205 = vector.broadcast %cst_89 : f32 to vector<16x128xf32>
    %206 = arith.mulf %202, %205 : vector<16x128xf32>
    %207 = math.erf %206 : vector<16x128xf32>
    %cst_90 = arith.constant 1.000000e+00 : f32
    %208 = vector.broadcast %cst_90 : f32 to vector<16x128xf32>
    %209 = arith.addf %208, %207 : vector<16x128xf32>
    %210 = arith.mulf %204, %209 : vector<16x128xf32>
    %211 = arith.truncf %210 : vector<16x128xf32> to vector<16x128xbf16>
    %c0_91 = arith.constant 0 : index
    %c0_92 = arith.constant 0 : index
    %c0_93 = arith.constant 0 : index
    %212 = vector.load %arg12[%c0_91, %c0_92, %c0_93] : memref<1x128x32xbf16, #tpu.memory_space<vmem>>, vector<1x128x32xbf16>
    %213 = vector.shape_cast %212 : vector<1x128x32xbf16> to vector<128x32xbf16>
    %cst_94 = arith.constant dense<0.000000e+00> : vector<16x32xf32>
    %214 = tpu.matmul %211, %213, %cst_94 {dimension_numbers = #tpu.dot_dimension_numbers<[1], [0], [0], [1], [0, 0, 1, 1], [], []>} : vector<16x128xbf16>, vector<128x32xbf16>, vector<16x32xf32> -> vector<16x32xf32>
    %c0_95 = arith.constant 0 : index
    %c0_96 = arith.constant 0 : index
    %c0_97 = arith.constant 0 : index
    %215 = vector.load %arg13[%c0_95, %c0_96, %c0_97] : memref<1x1x32xf32, #tpu.memory_space<vmem>>, vector<1x1x32xf32>
    %216 = vector.shape_cast %215 : vector<1x1x32xf32> to vector<1x32xf32>
    %217 = vector.broadcast %216 : vector<1x32xf32> to vector<16x32xf32>
    %218 = arith.addf %214, %217 : vector<16x32xf32>
    %219 = arith.addf %194, %218 : vector<16x32xf32>
    %c0_98 = arith.constant 0 : index
    %c0_99 = arith.constant 0 : index
    %c0_100 = arith.constant 0 : index
    %220 = vector.load %arg14[%c0_98, %c0_99, %c0_100] : memref<1x1x32xf32, #tpu.memory_space<vmem>>, vector<1x1x32xf32>
    %221 = vector.shape_cast %220 : vector<1x1x32xf32> to vector<1x32xf32>
    %c0_101 = arith.constant 0 : index
    %c0_102 = arith.constant 0 : index
    %c0_103 = arith.constant 0 : index
    %222 = vector.load %arg15[%c0_101, %c0_102, %c0_103] : memref<1x1x32xf32, #tpu.memory_space<vmem>>, vector<1x1x32xf32>
    %223 = vector.shape_cast %222 : vector<1x1x32xf32> to vector<1x32xf32>
    %cst_104 = arith.constant dense<0.000000e+00> : vector<16xf32>
    %224 = vector.multi_reduction <add>, %219, %cst_104 [1] : vector<16x32xf32> to vector<16xf32>
    %225 = vector.shape_cast %224 : vector<16xf32> to vector<16x1xf32>
    %cst_105 = arith.constant 3.200000e+01 : f32
    %226 = vector.broadcast %cst_105 : f32 to vector<16x1xf32>
    %227 = arith.divf %225, %226 : vector<16x1xf32>
    %228 = vector.broadcast %227 : vector<16x1xf32> to vector<16x32xf32>
    %229 = arith.subf %219, %228 : vector<16x32xf32>
    %230 = arith.mulf %229, %229 : vector<16x32xf32>
    %cst_106 = arith.constant dense<0.000000e+00> : vector<16xf32>
    %231 = vector.multi_reduction <add>, %230, %cst_106 [1] : vector<16x32xf32> to vector<16xf32>
    %232 = vector.shape_cast %231 : vector<16xf32> to vector<16x1xf32>
    %cst_107 = arith.constant 3.200000e+01 : f32
    %233 = vector.broadcast %cst_107 : f32 to vector<16x1xf32>
    %234 = arith.divf %232, %233 : vector<16x1xf32>
    %235 = vector.broadcast %227 : vector<16x1xf32> to vector<16x32xf32>
    %236 = arith.subf %219, %235 : vector<16x32xf32>
    %cst_108 = arith.constant 9.99999996E-13 : f32
    %237 = vector.broadcast %cst_108 : f32 to vector<16x1xf32>
    %238 = arith.addf %234, %237 : vector<16x1xf32>
    %239 = math.rsqrt %238 : vector<16x1xf32>
    %240 = vector.broadcast %239 : vector<16x1xf32> to vector<16x32xf32>
    %241 = arith.mulf %236, %240 : vector<16x32xf32>
    %242 = vector.broadcast %221 : vector<1x32xf32> to vector<16x32xf32>
    %243 = arith.mulf %241, %242 : vector<16x32xf32>
    %244 = vector.broadcast %223 : vector<1x32xf32> to vector<16x32xf32>
    %245 = arith.addf %243, %244 : vector<16x32xf32>
    %c0_109 = arith.constant 0 : index
    %c0_110 = arith.constant 0 : index
    %246 = vector.load %arg16[%c0_109, %c0_110] : memref<16x32xf32, #tpu.memory_space<vmem>>, vector<16x32xf32>
    tpu.vector_store %arg16[%c0_109, %c0_110], %245 {strides = array<i32>} : memref<16x32xf32, #tpu.memory_space<vmem>>, vector<16x32xf32>,
    return
  }
  func.func @transform_0(%arg0: i32) -> (i32, i32) {
    %c0_i32 = arith.constant 0 : i32
    %c0_i32_0 = arith.constant 0 : i32
    %c0_i32_1 = arith.constant 0 : i32
    return %c0_i32, %c0_i32_0 : i32, i32
  }
  func.func @transform_1(%arg0: i32) -> (i32, i32) {
    %c0_i32 = arith.constant 0 : i32
    %c0_i32_0 = arith.constant 0 : i32
    %c0_i32_1 = arith.constant 0 : i32
    return %c0_i32, %c0_i32_0 : i32, i32
  }
  func.func @transform_2(%arg0: i32) -> (i32, i32) {
    %c0_i32 = arith.constant 0 : i32
    %c0_i32_0 = arith.constant 0 : i32
    %c0_i32_1 = arith.constant 0 : i32
    return %c0_i32, %c0_i32_0 : i32, i32
  }
  func.func @transform_3(%arg0: i32) -> (i32, i32, i32) {
    %c0_i32 = arith.constant 0 : i32
    %c0_i32_0 = arith.constant 0 : i32
    %c0_i32_1 = arith.constant 0 : i32
    return %arg0, %c0_i32, %c0_i32_0 : i32, i32, i32
  }
  func.func @transform_4(%arg0: i32) -> (i32, i32, i32) {
    %c0_i32 = arith.constant 0 : i32
    %c0_i32_0 = arith.constant 0 : i32
    %c0_i32_1 = arith.constant 0 : i32
    return %arg0, %c0_i32, %c0_i32_0 : i32, i32, i32
  }
  func.func @transform_5(%arg0: i32) -> (i32, i32, i32) {
    %c0_i32 = arith.constant 0 : i32
    %c0_i32_0 = arith.constant 0 : i32
    %c0_i32_1 = arith.constant 0 : i32
    return %arg0, %c0_i32, %c0_i32_0 : i32, i32, i32
  }
  func.func @transform_6(%arg0: i32) -> (i32, i32, i32) {
    %c0_i32 = arith.constant 0 : i32
    %c0_i32_0 = arith.constant 0 : i32
    %c0_i32_1 = arith.constant 0 : i32
    return %arg0, %c0_i32, %c0_i32_0 : i32, i32, i32
  }
  func.func @transform_7(%arg0: i32) -> (i32, i32, i32) {
    %c0_i32 = arith.constant 0 : i32
    %c0_i32_0 = arith.constant 0 : i32
    %c0_i32_1 = arith.constant 0 : i32
    return %arg0, %c0_i32, %c0_i32_0 : i32, i32, i32
  }
  func.func @transform_8(%arg0: i32) -> (i32, i32, i32) {
    %c0_i32 = arith.constant 0 : i32
    %c0_i32_0 = arith.constant 0 : i32
    %c0_i32_1 = arith.constant 0 : i32
    return %arg0, %c0_i32, %c0_i32_0 : i32, i32, i32
  }
  func.func @transform_9(%arg0: i32) -> (i32, i32, i32) {
    %c0_i32 = arith.constant 0 : i32
    %c0_i32_0 = arith.constant 0 : i32
    %c0_i32_1 = arith.constant 0 : i32
    return %arg0, %c0_i32, %c0_i32_0 : i32, i32, i32
  }
  func.func @transform_10(%arg0: i32) -> (i32, i32, i32) {
    %c0_i32 = arith.constant 0 : i32
    %c0_i32_0 = arith.constant 0 : i32
    %c0_i32_1 = arith.constant 0 : i32
    return %arg0, %c0_i32, %c0_i32_0 : i32, i32, i32
  }
  func.func @transform_11(%arg0: i32) -> (i32, i32, i32) {
    %c0_i32 = arith.constant 0 : i32
    %c0_i32_0 = arith.constant 0 : i32
    %c0_i32_1 = arith.constant 0 : i32
    return %arg0, %c0_i32, %c0_i32_0 : i32, i32, i32
  }
  func.func @transform_12(%arg0: i32) -> (i32, i32, i32) {
    %c0_i32 = arith.constant 0 : i32
    %c0_i32_0 = arith.constant 0 : i32
    %c0_i32_1 = arith.constant 0 : i32
    return %arg0, %c0_i32, %c0_i32_0 : i32, i32, i32
  }
  func.func @transform_13(%arg0: i32) -> (i32, i32, i32) {
    %c0_i32 = arith.constant 0 : i32
    %c0_i32_0 = arith.constant 0 : i32
    %c0_i32_1 = arith.constant 0 : i32
    return %arg0, %c0_i32, %c0_i32_0 : i32, i32, i32
  }
  func.func @transform_14(%arg0: i32) -> (i32, i32, i32) {
    %c0_i32 = arith.constant 0 : i32
    %c0_i32_0 = arith.constant 0 : i32
    %c0_i32_1 = arith.constant 0 : i32
    return %arg0, %c0_i32, %c0_i32_0 : i32, i32, i32
  }
  func.func @transform_15(%arg0: i32) -> (i32, i32) {
    %c0_i32 = arith.constant 0 : i32
    %c0_i32_0 = arith.constant 0 : i32
    %c0_i32_1 = arith.constant 0 : i32
    return %c0_i32, %c0_i32_0 : i32, i32
  }
}

</mosaic_0001>

<llo_original>
// kernel: tpu_custom_call.1
$region0: #{tpu_custom_call.1}
  #allocation0 [shape = 'u32[]', space=smem, size = 0x4, offset = 0x4, fixed_abs, tag = 'smem constant byte address 0x4 - core index']
  #allocation1 [shape = 'u32[144,128]{1,0:T(1,128)}', space=vmem, size = 0x12000, scoped, tag = 'internal scratch']
  #allocation2 [shape = 'f32[16,32]{1,0:T(8,128)}', space=vmem, size = 0x2000, scoped, tag = 'scratch operand']
  %s0 = inlined_call_operand.vmem [shape: f32[16,32], index: 0, kind: input, shape index: {}]
  %s1 = inlined_call_operand.vmem [shape: f32[1,32], index: 1, kind: input, shape index: {}]
  %s2 = inlined_call_operand.vmem [shape: f32[1,32], index: 2, kind: input, shape index: {}]
  %s3 = inlined_call_operand.vmem [shape: bf16[2,32,96], index: 3, kind: input, shape index: {}]
  %s4 = inlined_call_operand.vmem [shape: f32[2,1,96], index: 4, kind: input, shape index: {}]
  %s5 = inlined_call_operand.vmem [shape: bf16[2,32,32], index: 5, kind: input, shape index: {}]
  %s6 = inlined_call_operand.vmem [shape: f32[2,1,32], index: 6, kind: input, shape index: {}]
  %s7 = inlined_call_operand.vmem [shape: f32[2,1,32], index: 7, kind: input, shape index: {}]
  %s8 = inlined_call_operand.vmem [shape: f32[2,1,32], index: 8, kind: input, shape index: {}]
  %s9 = inlined_call_operand.vmem [shape: bf16[2,32,128], index: 9, kind: input, shape index: {}]
  %s10 = inlined_call_operand.vmem [shape: f32[2,1,128], index: 10, kind: input, shape index: {}]
  %s11 = inlined_call_operand.vmem [shape: bf16[2,128,32], index: 11, kind: input, shape index: {}]
  %s12 = inlined_call_operand.vmem [shape: f32[2,1,32], index: 12, kind: input, shape index: {}]
  %s13 = inlined_call_operand.vmem [shape: f32[2,1,32], index: 13, kind: input, shape index: {}]
  %s14 = inlined_call_operand.vmem [shape: f32[2,1,32], index: 14, kind: input, shape index: {}]
  %s15 = inlined_call_operand.hbm [shape: f32[16,32], index: 15, kind: output, shape index: {}]
  %s16 = sld [smem:[#allocation0]]
  $region97: #{tpu_custom_call.1} parent=0
    _
  %s18 = ssub.s32 1, %s16
  %s19 = scalar_select 0, %s18, %s16
  $region1: #{tpu_custom_call.1} parent=0
    #allocation3 [shape = 'u8[8192]{0}', space=vmem, size = 0x2000, scoped, tag = 'output window, operand 0, single buffered']
    #allocation4 [shape = 's32[2]{0}', space=sflag, size = 0x8, scoped, tag = 'scoped memory for tpu_custom_call.1']
    %20 = vsyncpa [#allocation4], 0
    loop: start=0, step=1, limit=4
    $region2: #{tpu_custom_call.1} parent=1 // loop_pre_header
      _
    $region3: #{tpu_custom_call.1} parent=1 // loop_header
      %s22 = sphi 0, %s26
      %p23 = scmp.ge.s32.totalorder %s22, 4
      %s30 = sphi 0, %s30
      %s32 = sphi 0, %s30
      %s33 = sphi 0, %s32
      %s47 = sphi 0, %s33
      %s51 = sphi 0, %s51
      %s53 = sphi 0, %s51
      %s54 = sphi 0, %s53
      %s68 = sphi 0, %s54
      %s72 = sphi 0, %s72
      %s74 = sphi 0, %s72
      %s75 = sphi 0, %s74
      %s89 = sphi 0, %s75
      %s95 = sphi 0, %s97
      %s98 = sphi 0, %s95
      %s99 = sphi 0, %s98
      %s115 = sphi 0, %s99
      %s121 = sphi 0, %s123
      %s124 = sphi 0, %s121
      %s125 = sphi 0, %s124
      %s141 = sphi 0, %s125
      %s147 = sphi 0, %s149
      %s150 = sphi 0, %s147
      %s151 = sphi 0, %s150
      %s167 = sphi 0, %s151
      %s173 = sphi 0, %s175
      %s176 = sphi 0, %s173
      %s177 = sphi 0, %s176
      %s193 = sphi 0, %s177
      %s199 = sphi 0, %s201
      %s202 = sphi 0, %s199
      %s203 = sphi 0, %s202
      %s219 = sphi 0, %s203
      %s225 = sphi 0, %s227
      %s228 = sphi 0, %s225
      %s229 = sphi 0, %s228
      %s245 = sphi 0, %s229
      %s251 = sphi 0, %s253
      %s254 = sphi 0, %s251
      %s255 = sphi 0, %s254
      %s271 = sphi 0, %s255
      %s277 = sphi 0, %s279
      %s280 = sphi 0, %s277
      %s281 = sphi 0, %s280
      %s297 = sphi 0, %s281
      %s303 = sphi 0, %s305
      %s306 = sphi 0, %s303
      %s307 = sphi 0, %s306
      %s323 = sphi 0, %s307
      %s329 = sphi 0, %s331
      %s332 = sphi 0, %s329
      %s333 = sphi 0, %s332
      %s349 = sphi 0, %s333
      %s355 = sphi 0, %s357
      %s358 = sphi 0, %s355
      %s359 = sphi 0, %s358
      %s375 = sphi 0, %s359
      %s381 = sphi 0, %s383
      %s384 = sphi 0, %s381
      %s385 = sphi 0, %s384
      %s401 = sphi 0, %s385
      %s405 = sphi 0, %s405
      %s407 = sphi 0, %s405
      %s408 = sphi 0, %s407
      %s422 = sphi 0, %s408
    $region4: #{tpu_custom_call.1} parent=1 // loop_header_branch
      %25 = sbr.rel (%p23) target = $region8
    $region5: #{tpu_custom_call.1} parent=1 // loop_body
      %s27 = ssub.s32 %s22, 1
      %s28 = ssub.s32 %s22, 2
      %s29 = sadd.s32 %s22, 1
      %s31 = sadd.s32 %s30, 1
      %p34 = scmp.eq.s32.totalorder %s22, 1
      %p35 = scmp.ne.s32.totalorder %s30, %s32
      %p36 = scmp.eq.s32.totalorder %s22, 0
      %p37 = por %p35, %p36
      %p38 = scmp.ne.s32.totalorder %s30, %s32
      %p39 = scmp.eq.s32.totalorder %s27, 1
      %p40 = por %p38, %p39
      %p41 = scmp.ne.s32.totalorder %s32, %s33
      %p42 = scmp.eq.s32.totalorder %s27, 0
      %p43 = por %p41, %p42
      %p44 = scmp.ne.s32.totalorder %s32, %s33
      %p45 = scmp.eq.s32.totalorder %s28, 1
      %p46 = por %p44, %p45
      %p48 = scmp.ne.s32.totalorder %s33, %s47
      %p49 = scmp.eq.s32.totalorder %s28, 0
      %p50 = por %p48, %p49
      %s52 = sadd.s32 %s51, 1
      %p55 = scmp.eq.s32.totalorder %s22, 1
      %p56 = scmp.ne.s32.totalorder %s51, %s53
      %p57 = scmp.eq.s32.totalorder %s22, 0
      %p58 = por %p56, %p57
      %p59 = scmp.ne.s32.totalorder %s51, %s53
      %p60 = scmp.eq.s32.totalorder %s27, 1
      %p61 = por %p59, %p60
      %p62 = scmp.ne.s32.totalorder %s53, %s54
      %p63 = scmp.eq.s32.totalorder %s27, 0
      %p64 = por %p62, %p63
      %p65 = scmp.ne.s32.totalorder %s53, %s54
      %p66 = scmp.eq.s32.totalorder %s28, 1
      %p67 = por %p65, %p66
      %p69 = scmp.ne.s32.totalorder %s54, %s68
      %p70 = scmp.eq.s32.totalorder %s28, 0
      %p71 = por %p69, %p70
      %s73 = sadd.s32 %s72, 1
      %p76 = scmp.eq.s32.totalorder %s22, 1
      %p77 = scmp.ne.s32.totalorder %s72, %s74
      %p78 = scmp.eq.s32.totalorder %s22, 0
      %p79 = por %p77, %p78
      %p80 = scmp.ne.s32.totalorder %s72, %s74
      %p81 = scmp.eq.s32.totalorder %s27, 1
      %p82 = por %p80, %p81
      %p83 = scmp.ne.s32.totalorder %s74, %s75
      %p84 = scmp.eq.s32.totalorder %s27, 0
      %p85 = por %p83, %p84
      %p86 = scmp.ne.s32.totalorder %s74, %s75
      %p87 = scmp.eq.s32.totalorder %s28, 1
      %p88 = por %p86, %p87
      %p90 = scmp.ne.s32.totalorder %s75, %s89
      %p91 = scmp.eq.s32.totalorder %s28, 0
      %p92 = por %p90, %p91
      %s93 = ssub.s32 %s22, %s29
      %p94 = scmp.eq.s32.totalorder %s93, 0
      %s96 = sadd.s32 %s95, 1
      %s97 = scalar_select %p94, %s95, %s96
      %p100 = pneg %p94
      %p101 = scmp.eq.s32.totalorder %s22, 1
      %p102 = por %p100, %p101
      %p103 = scmp.ne.s32.totalorder %s95, %s98
      %p104 = scmp.eq.s32.totalorder %s22, 0
      %p105 = por %p103, %p104
      %p106 = scmp.ne.s32.totalorder %s95, %s98
      %p107 = scmp.eq.s32.totalorder %s27, 1
      %p108 = por %p106, %p107
      %p109 = scmp.ne.s32.totalorder %s98, %s99
      %p110 = scmp.eq.s32.totalorder %s27, 0
      %p111 = por %p109, %p110
      %p112 = scmp.ne.s32.totalorder %s98, %s99
      %p113 = scmp.eq.s32.totalorder %s28, 1
      %p114 = por %p112, %p113
      %p116 = scmp.ne.s32.totalorder %s99, %s115
      %p117 = scmp.eq.s32.totalorder %s28, 0
      %p118 = por %p116, %p117
      %s119 = ssub.s32 %s22, %s29
      %p120 = scmp.eq.s32.totalorder %s119, 0
      %s122 = sadd.s32 %s121, 1
      %s123 = scalar_select %p120, %s121, %s122
      %p126 = pneg %p120
      %p127 = scmp.eq.s32.totalorder %s22, 1
      %p128 = por %p126, %p127
      %p129 = scmp.ne.s32.totalorder %s121, %s124
      %p130 = scmp.eq.s32.totalorder %s22, 0
      %p131 = por %p129, %p130
      %p132 = scmp.ne.s32.totalorder %s121, %s124
      %p133 = scmp.eq.s32.totalorder %s27, 1
      %p134 = por %p132, %p133
      %p135 = scmp.ne.s32.totalorder %s124, %s125
      %p136 = scmp.eq.s32.totalorder %s27, 0
      %p137 = por %p135, %p136
      %p138 = scmp.ne.s32.totalorder %s124, %s125
      %p139 = scmp.eq.s32.totalorder %s28, 1
      %p140 = por %p138, %p139
      %p142 = scmp.ne.s32.totalorder %s125, %s141
      %p143 = scmp.eq.s32.totalorder %s28, 0
      %p144 = por %p142, %p143
      %s145 = ssub.s32 %s22, %s29
      %p146 = scmp.eq.s32.totalorder %s145, 0
      %s148 = sadd.s32 %s147, 1
      %s149 = scalar_select %p146, %s147, %s148
      %p152 = pneg %p146
      %p153 = scmp.eq.s32.totalorder %s22, 1
      %p154 = por %p152, %p153
      %p155 = scmp.ne.s32.totalorder %s147, %s150
      %p156 = scmp.eq.s32.totalorder %s22, 0
      %p157 = por %p155, %p156
      %p158 = scmp.ne.s32.totalorder %s147, %s150
      %p159 = scmp.eq.s32.totalorder %s27, 1
      %p160 = por %p158, %p159
      %p161 = scmp.ne.s32.totalorder %s150, %s151
      %p162 = scmp.eq.s32.totalorder %s27, 0
      %p163 = por %p161, %p162
      %p164 = scmp.ne.s32.totalorder %s150, %s151
      %p165 = scmp.eq.s32.totalorder %s28, 1
      %p166 = por %p164, %p165
      %p168 = scmp.ne.s32.totalorder %s151, %s167
      %p169 = scmp.eq.s32.totalorder %s28, 0
      %p170 = por %p168, %p169
      %s171 = ssub.s32 %s22, %s29
      %p172 = scmp.eq.s32.totalorder %s171, 0
      %s174 = sadd.s32 %s173, 1
      %s175 = scalar_select %p172, %s173, %s174
      %p178 = pneg %p172
      %p179 = scmp.eq.s32.totalorder %s22, 1
      %p180 = por %p178, %p179
      %p181 = scmp.ne.s32.totalorder %s173, %s176
      %p182 = scmp.eq.s32.totalorder %s22, 0
      %p183 = por %p181, %p182
      %p184 = scmp.ne.s32.totalorder %s173, %s176
      %p185 = scmp.eq.s32.totalorder %s27, 1
      %p186 = por %p184, %p185
      %p187 = scmp.ne.s32.totalorder %s176, %s177
      %p188 = scmp.eq.s32.totalorder %s27, 0
      %p189 = por %p187, %p188
      %p190 = scmp.ne.s32.totalorder %s176, %s177
      %p191 = scmp.eq.s32.totalorder %s28, 1
      %p192 = por %p190, %p191
      %p194 = scmp.ne.s32.totalorder %s177, %s193
      %p195 = scmp.eq.s32.totalorder %s28, 0
      %p196 = por %p194, %p195
      %s197 = ssub.s32 %s22, %s29
      %p198 = scmp.eq.s32.totalorder %s197, 0
      %s200 = sadd.s32 %s199, 1
      %s201 = scalar_select %p198, %s199, %s200
      %p204 = pneg %p198
      %p205 = scmp.eq.s32.totalorder %s22, 1
      %p206 = por %p204, %p205
      %p207 = scmp.ne.s32.totalorder %s199, %s202
      %p208 = scmp.eq.s32.totalorder %s22, 0
      %p209 = por %p207, %p208
      %p210 = scmp.ne.s32.totalorder %s199, %s202
      %p211 = scmp.eq.s32.totalorder %s27, 1
      %p212 = por %p210, %p211
      %p213 = scmp.ne.s32.totalorder %s202, %s203
      %p214 = scmp.eq.s32.totalorder %s27, 0
      %p215 = por %p213, %p214
      %p216 = scmp.ne.s32.totalorder %s202, %s203
      %p217 = scmp.eq.s32.totalorder %s28, 1
      %p218 = por %p216, %p217
      %p220 = scmp.ne.s32.totalorder %s203, %s219
      %p221 = scmp.eq.s32.totalorder %s28, 0
      %p222 = por %p220, %p221
      %s223 = ssub.s32 %s22, %s29
      %p224 = scmp.eq.s32.totalorder %s223, 0
      %s226 = sadd.s32 %s225, 1
      %s227 = scalar_select %p224, %s225, %s226
      %p230 = pneg %p224
      %p231 = scmp.eq.s32.totalorder %s22, 1
      %p232 = por %p230, %p231
      %p233 = scmp.ne.s32.totalorder %s225, %s228
      %p234 = scmp.eq.s32.totalorder %s22, 0
      %p235 = por %p233, %p234
      %p236 = scmp.ne.s32.totalorder %s225, %s228
      %p237 = scmp.eq.s32.totalorder %s27, 1
      %p238 = por %p236, %p237
      %p239 = scmp.ne.s32.totalorder %s228, %s229
      %p240 = scmp.eq.s32.totalorder %s27, 0
      %p241 = por %p239, %p240
      %p242 = scmp.ne.s32.totalorder %s228, %s229
      %p243 = scmp.eq.s32.totalorder %s28, 1
      %p244 = por %p242, %p243
      %p246 = scmp.ne.s32.totalorder %s229, %s245
      %p247 = scmp.eq.s32.totalorder %s28, 0
      %p248 = por %p246, %p247
      %s249 = ssub.s32 %s22, %s29
      %p250 = scmp.eq.s32.totalorder %s249, 0
      %s252 = sadd.s32 %s251, 1
      %s253 = scalar_select %p250, %s251, %s252
      %p256 = pneg %p250
      %p257 = scmp.eq.s32.totalorder %s22, 1
      %p258 = por %p256, %p257
      %p259 = scmp.ne.s32.totalorder %s251, %s254
      %p260 = scmp.eq.s32.totalorder %s22, 0
      %p261 = por %p259, %p260
      %p262 = scmp.ne.s32.totalorder %s251, %s254
      %p263 = scmp.eq.s32.totalorder %s27, 1
      %p264 = por %p262, %p263
      %p265 = scmp.ne.s32.totalorder %s254, %s255
      %p266 = scmp.eq.s32.totalorder %s27, 0
      %p267 = por %p265, %p266
      %p268 = scmp.ne.s32.totalorder %s254, %s255
      %p269 = scmp.eq.s32.totalorder %s28, 1
      %p270 = por %p268, %p269
      %p272 = scmp.ne.s32.totalorder %s255, %s271
      %p273 = scmp.eq.s32.totalorder %s28, 0
      %p274 = por %p272, %p273
      %s275 = ssub.s32 %s22, %s29
      %p276 = scmp.eq.s32.totalorder %s275, 0
      %s278 = sadd.s32 %s277, 1
      %s279 = scalar_select %p276, %s277, %s278
      %p282 = pneg %p276
      %p283 = scmp.eq.s32.totalorder %s22, 1
      %p284 = por %p282, %p283
      %p285 = scmp.ne.s32.totalorder %s277, %s280
      %p286 = scmp.eq.s32.totalorder %s22, 0
      %p287 = por %p285, %p286
      %p288 = scmp.ne.s32.totalorder %s277, %s280
      %p289 = scmp.eq.s32.totalorder %s27, 1
      %p290 = por %p288, %p289
      %p291 = scmp.ne.s32.totalorder %s280, %s281
      %p292 = scmp.eq.s32.totalorder %s27, 0
      %p293 = por %p291, %p292
      %p294 = scmp.ne.s32.totalorder %s280, %s281
      %p295 = scmp.eq.s32.totalorder %s28, 1
      %p296 = por %p294, %p295
      %p298 = scmp.ne.s32.totalorder %s281, %s297
      %p299 = scmp.eq.s32.totalorder %s28, 0
      %p300 = por %p298, %p299
      %s301 = ssub.s32 %s22, %s29
      %p302 = scmp.eq.s32.totalorder %s301, 0
      %s304 = sadd.s32 %s303, 1
      %s305 = scalar_select %p302, %s303, %s304
      %p308 = pneg %p302
      %p309 = scmp.eq.s32.totalorder %s22, 1
      %p310 = por %p308, %p309
      %p311 = scmp.ne.s32.totalorder %s303, %s306
      %p312 = scmp.eq.s32.totalorder %s22, 0
      %p313 = por %p311, %p312
      %p314 = scmp.ne.s32.totalorder %s303, %s306
      %p315 = scmp.eq.s32.totalorder %s27, 1
      %p316 = por %p314, %p315
      %p317 = scmp.ne.s32.totalorder %s306, %s307
      %p318 = scmp.eq.s32.totalorder %s27, 0
      %p319 = por %p317, %p318
      %p320 = scmp.ne.s32.totalorder %s306, %s307
      %p321 = scmp.eq.s32.totalorder %s28, 1
      %p322 = por %p320, %p321
      %p324 = scmp.ne.s32.totalorder %s307, %s323
      %p325 = scmp.eq.s32.totalorder %s28, 0
      %p326 = por %p324, %p325
      %s327 = ssub.s32 %s22, %s29
      %p328 = scmp.eq.s32.totalorder %s327, 0
      %s330 = sadd.s32 %s329, 1
      %s331 = scalar_select %p328, %s329, %s330
      %p334 = pneg %p328
      %p335 = scmp.eq.s32.totalorder %s22, 1
      %p336 = por %p334, %p335
      %p337 = scmp.ne.s32.totalorder %s329, %s332
      %p338 = scmp.eq.s32.totalorder %s22, 0
      %p339 = por %p337, %p338
      %p340 = scmp.ne.s32.totalorder %s329, %s332
      %p341 = scmp.eq.s32.totalorder %s27, 1
      %p342 = por %p340, %p341
      %p343 = scmp.ne.s32.totalorder %s332, %s333
      %p344 = scmp.eq.s32.totalorder %s27, 0
      %p345 = por %p343, %p344
      %p346 = scmp.ne.s32.totalorder %s332, %s333
      %p347 = scmp.eq.s32.totalorder %s28, 1
      %p348 = por %p346, %p347
      %p350 = scmp.ne.s32.totalorder %s333, %s349
      %p351 = scmp.eq.s32.totalorder %s28, 0
      %p352 = por %p350, %p351
      %s353 = ssub.s32 %s22, %s29
      %p354 = scmp.eq.s32.totalorder %s353, 0
      %s356 = sadd.s32 %s355, 1
      %s357 = scalar_select %p354, %s355, %s356
      %p360 = pneg %p354
      %p361 = scmp.eq.s32.totalorder %s22, 1
      %p362 = por %p360, %p361
      %p363 = scmp.ne.s32.totalorder %s355, %s358
      %p364 = scmp.eq.s32.totalorder %s22, 0
      %p365 = por %p363, %p364
      %p366 = scmp.ne.s32.totalorder %s355, %s358
      %p367 = scmp.eq.s32.totalorder %s27, 1
      %p368 = por %p366, %p367
      %p369 = scmp.ne.s32.totalorder %s358, %s359
      %p370 = scmp.eq.s32.totalorder %s27, 0
      %p371 = por %p369, %p370
      %p372 = scmp.ne.s32.totalorder %s358, %s359
      %p373 = scmp.eq.s32.totalorder %s28, 1
      %p374 = por %p372, %p373
      %p376 = scmp.ne.s32.totalorder %s359, %s375
      %p377 = scmp.eq.s32.totalorder %s28, 0
      %p378 = por %p376, %p377
      %s379 = ssub.s32 %s22, %s29
      %p380 = scmp.eq.s32.totalorder %s379, 0
      %s382 = sadd.s32 %s381, 1
      %s383 = scalar_select %p380, %s381, %s382
      %p386 = pneg %p380
      %p387 = scmp.eq.s32.totalorder %s22, 1
      %p388 = por %p386, %p387
      %p389 = scmp.ne.s32.totalorder %s381, %s384
      %p390 = scmp.eq.s32.totalorder %s22, 0
      %p391 = por %p389, %p390
      %p392 = scmp.ne.s32.totalorder %s381, %s384
      %p393 = scmp.eq.s32.totalorder %s27, 1
      %p394 = por %p392, %p393
      %p395 = scmp.ne.s32.totalorder %s384, %s385
      %p396 = scmp.eq.s32.totalorder %s27, 0
      %p397 = por %p395, %p396
      %p398 = scmp.ne.s32.totalorder %s384, %s385
      %p399 = scmp.eq.s32.totalorder %s28, 1
      %p400 = por %p398, %p399
      %p402 = scmp.ne.s32.totalorder %s385, %s401
      %p403 = scmp.eq.s32.totalorder %s28, 0
      %p404 = por %p402, %p403
      %s406 = sadd.s32 %s405, 1
      %p409 = scmp.eq.s32.totalorder %s22, 1
      %p410 = scmp.ne.s32.totalorder %s405, %s407
      %p411 = scmp.eq.s32.totalorder %s22, 0
      %p412 = por %p410, %p411
      %p413 = scmp.ne.s32.totalorder %s405, %s407
      %p414 = scmp.eq.s32.totalorder %s27, 1
      %p415 = por %p413, %p414
      %p416 = scmp.ne.s32.totalorder %s407, %s408
      %p417 = scmp.eq.s32.totalorder %s27, 0
      %p418 = por %p416, %p417
      %p419 = scmp.ne.s32.totalorder %s407, %s408
      %p420 = scmp.eq.s32.totalorder %s28, 1
      %p421 = por %p419, %p420
      %p423 = scmp.ne.s32.totalorder %s408, %s422
      %p424 = scmp.eq.s32.totalorder %s28, 0
      %p425 = por %p423, %p424
      %p426 = scmp.le.s32.totalorder 1, %s22
      %p427 = scmp.lt.s32.totalorder %s22, 3
      %p428 = pnand %p426, %p427
      %p429 = pneg %p428
      // Predicated region
      $region9: #{tpu_custom_call.1} parent=5 // pred_check
        _
      $region10: #{tpu_custom_call.1} parent=5 // pred_check_branch
        %431 = sbr.rel (%p428) target = $region12
      $region11: #{tpu_custom_call.1} parent=5 // pred_region
        %s432 = ssub.s32 %s22, 1
        // Predicated region
        $region13: #{tpu_custom_call.1} parent=11 // pred_check
          %p433 = pneg %p43
        $region14: #{tpu_custom_call.1} parent=11 // pred_check_branch
          %435 = sbr.rel (%p433) target = $region16
        $region15: #{tpu_custom_call.1} parent=11 // pred_region
          _
        $region16: #{tpu_custom_call.1} parent=11 // pred_fallthru
          _
        // Predicated region
        $region17: #{tpu_custom_call.1} parent=11 // pred_check
          %p436 = pneg %p64
        $region18: #{tpu_custom_call.1} parent=11 // pred_check_branch
          %438 = sbr.rel (%p436) target = $region20
        $region19: #{tpu_custom_call.1} parent=11 // pred_region
          _
        $region20: #{tpu_custom_call.1} parent=11 // pred_fallthru
          _
        // Predicated region
        $region21: #{tpu_custom_call.1} parent=11 // pred_check
          %p439 = pneg %p85
        $region22: #{tpu_custom_call.1} parent=11 // pred_check_branch
          %441 = sbr.rel (%p439) target = $region24
        $region23: #{tpu_custom_call.1} parent=11 // pred_region
          _
        $region24: #{tpu_custom_call.1} parent=11 // pred_fallthru
          _
      $region12: #{tpu_custom_call.1} parent=5 // pred_fallthru
        _
      %p442 = scmp.lt.s32.totalorder %s22, 2
      // Predicated region
      $region25: #{tpu_custom_call.1} parent=5 // pred_check
        %p443 = pneg %p442
      $region26: #{tpu_custom_call.1} parent=5 // pred_check_branch
        %445 = sbr.rel (%p443) target = $region28
      $region27: #{tpu_custom_call.1} parent=5 // pred_region
        // Predicated region
        $region29: #{tpu_custom_call.1} parent=27 // pred_check
          %p446 = pneg %p105
        $region30: #{tpu_custom_call.1} parent=27 // pred_check_branch
          %448 = sbr.rel (%p446) target = $region32
        $region31: #{tpu_custom_call.1} parent=27 // pred_region
          %p449 = scmp.lt.s32.totalorder %s22, 1
          %s450 = scalar_select %p449, %s22, 1
          %s451 = smul.addr %s450, 4
          %s452 = smul.addr %s451, 4
          %s453 = scalar_lea.vmem %s3, %s452
        $region32: #{tpu_custom_call.1} parent=27 // pred_fallthru
          _
        // Predicated region
        $region33: #{tpu_custom_call.1} parent=27 // pred_check
          %p454 = pneg %p131
        $region34: #{tpu_custom_call.1} parent=27 // pred_check_branch
          %456 = sbr.rel (%p454) target = $region36
        $region35: #{tpu_custom_call.1} parent=27 // pred_region
          %p457 = scmp.lt.s32.totalorder %s22, 1
          %s458 = scalar_select %p457, %s22, 1
          %s459 = scalar_lea.vmem %s4, %s458
        $region36: #{tpu_custom_call.1} parent=27 // pred_fallthru
          _
        // Predicated region
        $region37: #{tpu_custom_call.1} parent=27 // pred_check
          %p460 = pneg %p157
        $region38: #{tpu_custom_call.1} parent=27 // pred_check_branch
          %462 = sbr.rel (%p460) target = $region40
        $region39: #{tpu_custom_call.1} parent=27 // pred_region
          %p463 = scmp.lt.s32.totalorder %s22, 1
          %s464 = scalar_select %p463, %s22, 1
          %s465 = smul.addr %s464, 4
          %s466 = smul.addr %s465, 4
          %s467 = scalar_lea.vmem %s5, %s466
        $region40: #{tpu_custom_call.1} parent=27 // pred_fallthru
          _
        // Predicated region
        $region41: #{tpu_custom_call.1} parent=27 // pred_check
          %p468 = pneg %p183
        $region42: #{tpu_custom_call.1} parent=27 // pred_check_branch
          %470 = sbr.rel (%p468) target = $region44
        $region43: #{tpu_custom_call.1} parent=27 // pred_region
          %p471 = scmp.lt.s32.totalorder %s22, 1
          %s472 = scalar_select %p471, %s22, 1
          %s473 = scalar_lea.vmem %s6, %s472
        $region44: #{tpu_custom_call.1} parent=27 // pred_fallthru
          _
        // Predicated region
        $region45: #{tpu_custom_call.1} parent=27 // pred_check
          %p474 = pneg %p209
        $region46: #{tpu_custom_call.1} parent=27 // pred_check_branch
          %476 = sbr.rel (%p474) target = $region48
        $region47: #{tpu_custom_call.1} parent=27 // pred_region
          %p477 = scmp.lt.s32.totalorder %s22, 1
          %s478 = scalar_select %p477, %s22, 1
          %s479 = scalar_lea.vmem %s7, %s478
        $region48: #{tpu_custom_call.1} parent=27 // pred_fallthru
          _
        // Predicated region
        $region49: #{tpu_custom_call.1} parent=27 // pred_check
          %p480 = pneg %p235
        $region50: #{tpu_custom_call.1} parent=27 // pred_check_branch
          %482 = sbr.rel (%p480) target = $region52
        $region51: #{tpu_custom_call.1} parent=27 // pred_region
          %p483 = scmp.lt.s32.totalorder %s22, 1
          %s484 = scalar_select %p483, %s22, 1
          %s485 = scalar_lea.vmem %s8, %s484
        $region52: #{tpu_custom_call.1} parent=27 // pred_fallthru
          _
        // Predicated region
        $region53: #{tpu_custom_call.1} parent=27 // pred_check
          %p486 = pneg %p261
        $region54: #{tpu_custom_call.1} parent=27 // pred_check_branch
          %488 = sbr.rel (%p486) target = $region56
        $region55: #{tpu_custom_call.1} parent=27 // pred_region
          %p489 = scmp.lt.s32.totalorder %s22, 1
          %s490 = scalar_select %p489, %s22, 1
          %s491 = smul.addr %s490, 4
          %s492 = smul.addr %s491, 4
          %s493 = scalar_lea.vmem %s9, %s492
        $region56: #{tpu_custom_call.1} parent=27 // pred_fallthru
          _
        // Predicated region
        $region57: #{tpu_custom_call.1} parent=27 // pred_check
          %p494 = pneg %p287
        $region58: #{tpu_custom_call.1} parent=27 // pred_check_branch
          %496 = sbr.rel (%p494) target = $region60
        $region59: #{tpu_custom_call.1} parent=27 // pred_region
          %p497 = scmp.lt.s32.totalorder %s22, 1
          %s498 = scalar_select %p497, %s22, 1
          %s499 = scalar_lea.vmem %s10, %s498
        $region60: #{tpu_custom_call.1} parent=27 // pred_fallthru
          _
        // Predicated region
        $region61: #{tpu_custom_call.1} parent=27 // pred_check
          %p500 = pneg %p313
        $region62: #{tpu_custom_call.1} parent=27 // pred_check_branch
          %502 = sbr.rel (%p500) target = $region64
        $region63: #{tpu_custom_call.1} parent=27 // pred_region
          %p503 = scmp.lt.s32.totalorder %s22, 1
          %s504 = scalar_select %p503, %s22, 1
          %s505 = smul.addr %s504, 16
          %s506 = smul.addr %s505, 4
          %s507 = scalar_lea.vmem %s11, %s506
        $region64: #{tpu_custom_call.1} parent=27 // pred_fallthru
          _
        // Predicated region
        $region65: #{tpu_custom_call.1} parent=27 // pred_check
          %p508 = pneg %p339
        $region66: #{tpu_custom_call.1} parent=27 // pred_check_branch
          %510 = sbr.rel (%p508) target = $region68
        $region67: #{tpu_custom_call.1} parent=27 // pred_region
          %p511 = scmp.lt.s32.totalorder %s22, 1
          %s512 = scalar_select %p511, %s22, 1
          %s513 = scalar_lea.vmem %s12, %s512
        $region68: #{tpu_custom_call.1} parent=27 // pred_fallthru
          _
        // Predicated region
        $region69: #{tpu_custom_call.1} parent=27 // pred_check
          %p514 = pneg %p365
        $region70: #{tpu_custom_call.1} parent=27 // pred_check_branch
          %516 = sbr.rel (%p514) target = $region72
        $region71: #{tpu_custom_call.1} parent=27 // pred_region
          %p517 = scmp.lt.s32.totalorder %s22, 1
          %s518 = scalar_select %p517, %s22, 1
          %s519 = scalar_lea.vmem %s13, %s518
        $region72: #{tpu_custom_call.1} parent=27 // pred_fallthru
          _
        // Predicated region
        $region73: #{tpu_custom_call.1} parent=27 // pred_check
          %p520 = pneg %p391
        $region74: #{tpu_custom_call.1} parent=27 // pred_check_branch
          %522 = sbr.rel (%p520) target = $region76
        $region75: #{tpu_custom_call.1} parent=27 // pred_region
          %p523 = scmp.lt.s32.totalorder %s22, 1
          %s524 = scalar_select %p523, %s22, 1
          %s525 = scalar_lea.vmem %s14, %s524
        $region76: #{tpu_custom_call.1} parent=27 // pred_fallthru
          _
      $region28: #{tpu_custom_call.1} parent=5 // pred_fallthru
        _
      %p526 = scmp.le.s32.totalorder 1, %s22
      %p527 = scmp.lt.s32.totalorder %s22, 3
      %p528 = pnand %p526, %p527
      %p529 = pneg %p528
      // Predicated region
      $region77: #{tpu_custom_call.1} parent=5 // pred_check
        _
      $region78: #{tpu_custom_call.1} parent=5 // pred_check_branch
        %531 = sbr.rel (%p528) target = $region80
      $region79: #{tpu_custom_call.1} parent=5 // pred_region
        %s532 = ssub.s32 %s22, 1
        %p533 = pneg %p43
        %p534 = pneg %p40
        %p535 = pneg %p64
        %p536 = pneg %p61
        %p537 = pneg %p85
        %p538 = pneg %p82
        %p539 = scmp.lt.s32.totalorder %s27, 1
        %s540 = scalar_select %p539, %s27, 1
        %s541 = smul.addr %s540, 4
        %s542 = smul.addr %s541, 4
        %s543 = scalar_lea.vmem %s3, %s542
        %p544 = pneg %p111
        %p545 = pneg %p108
        %p546 = scmp.lt.s32.totalorder %s27, 1
        %s547 = scalar_select %p546, %s27, 1
        %s548 = scalar_lea.vmem %s4, %s547
        %p549 = pneg %p137
        %p550 = pneg %p134
        %p551 = scmp.lt.s32.totalorder %s27, 1
        %s552 = scalar_select %p551, %s27, 1
        %s553 = smul.addr %s552, 4
        %s554 = smul.addr %s553, 4
        %s555 = scalar_lea.vmem %s5, %s554
        %p556 = pneg %p163
        %p557 = pneg %p160
        %p558 = scmp.lt.s32.totalorder %s27, 1
        %s559 = scalar_select %p558, %s27, 1
        %s560 = scalar_lea.vmem %s6, %s559
        %p561 = pneg %p189
        %p562 = pneg %p186
        %p563 = scmp.lt.s32.totalorder %s27, 1
        %s564 = scalar_select %p563, %s27, 1
        %s565 = scalar_lea.vmem %s7, %s564
        %p566 = pneg %p215
        %p567 = pneg %p212
        %p568 = scmp.lt.s32.totalorder %s27, 1
        %s569 = scalar_select %p568, %s27, 1
        %s570 = scalar_lea.vmem %s8, %s569
        %p571 = pneg %p241
        %p572 = pneg %p238
        %p573 = scmp.lt.s32.totalorder %s27, 1
        %s574 = scalar_select %p573, %s27, 1
        %s575 = smul.addr %s574, 4
        %s576 = smul.addr %s575, 4
        %s577 = scalar_lea.vmem %s9, %s576
        %p578 = pneg %p267
        %p579 = pneg %p264
        %p580 = scmp.lt.s32.totalorder %s27, 1
        %s581 = scalar_select %p580, %s27, 1
        %s582 = scalar_lea.vmem %s10, %s581
        %p583 = pneg %p293
        %p584 = pneg %p290
        %p585 = scmp.lt.s32.totalorder %s27, 1
        %s586 = scalar_select %p585, %s27, 1
        %s587 = smul.addr %s586, 16
        %s588 = smul.addr %s587, 4
        %s589 = scalar_lea.vmem %s11, %s588
        %p590 = pneg %p319
        %p591 = pneg %p316
        %p592 = scmp.lt.s32.totalorder %s27, 1
        %s593 = scalar_select %p592, %s27, 1
        %s594 = scalar_lea.vmem %s12, %s593
        %p595 = pneg %p345
        %p596 = pneg %p342
        %p597 = scmp.lt.s32.totalorder %s27, 1
        %s598 = scalar_select %p597, %s27, 1
        %s599 = scalar_lea.vmem %s13, %s598
        %p600 = pneg %p371
        %p601 = pneg %p368
        %p602 = scmp.lt.s32.totalorder %s27, 1
        %s603 = scalar_select %p602, %s27, 1
        %s604 = scalar_lea.vmem %s14, %s603
        %p605 = pneg %p397
        %p606 = pneg %p394
        %p607 = pneg %p418
        %p608 = pneg %p415
        %p609 = scmp.lt.s32.totalorder %s27, 1
        %s610 = scalar_select %p609, %s27, 1
        %s611 = smul.addr %s610, 4
        %s612 = smul.addr %s611, 4
        %s613 = scalar_lea.vmem %s3, %s612
        %p614 = scmp.lt.s32.totalorder %s27, 1
        %s615 = scalar_select %p614, %s27, 1
        %s616 = scalar_lea.vmem %s4, %s615
        %p617 = scmp.lt.s32.totalorder %s27, 1
        %s618 = scalar_select %p617, %s27, 1
        %s619 = smul.addr %s618, 4
        %s620 = smul.addr %s619, 4
        %s621 = scalar_lea.vmem %s5, %s620
        %p622 = scmp.lt.s32.totalorder %s27, 1
        %s623 = scalar_select %p622, %s27, 1
        %s624 = scalar_lea.vmem %s6, %s623
        %p625 = scmp.lt.s32.totalorder %s27, 1
        %s626 = scalar_select %p625, %s27, 1
        %s627 = scalar_lea.vmem %s7, %s626
        %p628 = scmp.lt.s32.totalorder %s27, 1
        %s629 = scalar_select %p628, %s27, 1
        %s630 = scalar_lea.vmem %s8, %s629
        %p631 = scmp.lt.s32.totalorder %s27, 1
        %s632 = scalar_select %p631, %s27, 1
        %s633 = smul.addr %s632, 4
        %s634 = smul.addr %s633, 4
        %s635 = scalar_lea.vmem %s9, %s634
        %p636 = scmp.lt.s32.totalorder %s27, 1
        %s637 = scalar_select %p636, %s27, 1
        %s638 = scalar_lea.vmem %s10, %s637
        %p639 = scmp.lt.s32.totalorder %s27, 1
        %s640 = scalar_select %p639, %s27, 1
        %s641 = smul.addr %s640, 16
        %s642 = smul.addr %s641, 4
        %s643 = scalar_lea.vmem %s11, %s642
        %p644 = scmp.lt.s32.totalorder %s27, 1
        %s645 = scalar_select %p644, %s27, 1
        %s646 = scalar_lea.vmem %s12, %s645
        %p647 = scmp.lt.s32.totalorder %s27, 1
        %s648 = scalar_select %p647, %s27, 1
        %s649 = scalar_lea.vmem %s13, %s648
        %p650 = scmp.lt.s32.totalorder %s27, 1
        %s651 = scalar_select %p650, %s27, 1
        %s652 = scalar_lea.vmem %s14, %s651
        %p654 = scmp.eq.s32.totalorder %s27, 0
        // Predicated region
        $region81: #{tpu_custom_call.1} parent=79 // pred_check
          %p655 = pneg %p654
        $region82: #{tpu_custom_call.1} parent=79 // pred_check_branch
          %657 = sbr.rel (%p655) target = $region84
        $region83: #{tpu_custom_call.1} parent=79 // pred_region
          %v658 = vld [vmem:[%s0] sm:$0xff]
          %v659 = vld [vmem:[%s0 + $0x8] sm:$0xff]
          %v660 = vld [vmem:[%s1] sm:$0x1]
          %v661 = vld [vmem:[%s2] sm:$0x1]
          %vm662 = vcmask 261120
          %v663 = vsel %vm662, %v658, 0.0
          %664 = vadd.xlane.f32.xlu0 %v663
          %v665 = vpop.xlane.xlu0 %664
          %v666 = vsel %vm662, %v659, 0.0
          %667 = vadd.xlane.f32.xlu0 %v666
          %v668 = vpop.xlane.xlu0 %667
          %v669 = vrcp.pop 32.0
          %v670 = vmul.f32 %v665, %v669
          %v671 = vmul.f32 %v668, %v669
          %v672 = vsub.f32 %v658, %v670
          %v673 = vsub.f32 %v659, %v671
          %v674 = vmul.f32 %v672, %v672
          %v675 = vmul.f32 %v673, %v673
          %v676 = vsel %vm662, %v674, 0.0
          %677 = vadd.xlane.f32.xlu0 %v676
          %v678 = vpop.xlane.xlu0 %677
          %v679 = vsel %vm662, %v675, 0.0
          %680 = vadd.xlane.f32.xlu0 %v679
          %v681 = vpop.xlane.xlu0 %680
          %v682 = vmul.f32 %v678, %v669
          %v683 = vmul.f32 %v681, %v669
          %v684 = vadd.f32 %v682, 1e-12
          %v685 = vadd.f32 %v683, 1e-12
          %v686 = vrsqrt.pop %v684
          %v687 = vrsqrt.pop %v685
          %v688 = vmul.f32 %v672, %v686
          %v689 = vmul.f32 %v673, %v687
          %v691 = vlaneseq
          %v692 = vshrl.u32 %v691, 7
          %v693 = vsub.s32 0, %v692
          %v694 = vrot.slane %v660, %v693
          %v696 = vmul.f32 %v688, %v694
          %v697 = vmul.f32 %v689, %v694
          %v699 = vlaneseq
          %v700 = vshrl.u32 %v699, 7
          %v701 = vsub.s32 0, %v700
          %v702 = vrot.slane %v661, %v701
          %v704 = vadd.f32 %v696, %v702
          %v705 = vadd.f32 %v697, %v702
          %706 = vst.msk [vmem:[#allocation3] sm:$0xff] %vm662, %v704
          %707 = vst.msk [vmem:[#allocation3 + $0x8] sm:$0xff] %vm662, %v705
        $region84: #{tpu_custom_call.1} parent=79 // pred_fallthru
          _
        %v708 = vld [vmem:[#allocation3] sm:$0xff]
        %v709 = vld [vmem:[#allocation3 + $0x8] sm:$0xff]
        %v710 = vpack.c.bf16 %v709, %v708
        %v711 = vld [vmem:[%s613] sm:$0xf]
        %v712 = vld [vmem:[%s613 + $0x4] sm:$0xf]
        %v713 = vld [vmem:[%s613 + $0x8] sm:$0xf]
        %v714 = vld [vmem:[%s613 + $0xc] sm:$0xf]
        %v715 = vld [vmem:[%s616] sm:$0x1]
        %v717 = vlaneseq
        %v718 = vshrl.u32 %v717, 7
        %v719 = vsub.s32 0, %v718
        %v720 = vrot.slane %v715, %v719
        %v726 = vunpack.c.l.b16 %v711
        %v727 = vunpack.c.l.b16 %v712
        %v728 = vunpack.c.l.b16 %v713
        %v729 = vunpack.c.l.b16 %v714
        %v730 = vpack.c.b16 %v727, %v726
        %v731 = vpack.c.b16 %v729, %v728
        %vm734 = vcmask 261120
        %v736 = vsel %vm734, %v710, 0
        %738 = vmatprep.subr.bf16.mxu0 0
        %739 = vmatpush1.bf16.msra.mxu0 %v730
        %740 = vmatprep.subr.bf16.mxu0 0
        %741 = vmatpush1.bf16.msra.mxu0 %v731
        %742 = vmatprep.subr.bf16.mxu0 0
        %743 = vmatpush1.bf16.msra.mxu0 0
        %744 = vmatprep.subr.bf16.mxu0 0
        %745 = vmatpush1.bf16.msra.mxu0 0
        %746 = vmatprep.subr.bf16.mxu0 0
        %747 = vmatpush1.bf16.msra.mxu0 0
        %748 = vmatprep.subr.bf16.mxu0 0
        %749 = vmatpush1.bf16.msra.mxu0 0
        %750 = vmatprep.subr.bf16.mxu0 0
        %751 = vmatpush1.bf16.msra.mxu0 0
        %752 = vmatprep.subr.bf16.mxu0 0
        %753 = vmatpush1.bf16.msra.mxu0 0
        %754 = vmatprep.subr.bf16.mxu0 0
        %755 = vmatpush1.bf16.msra.mxu0 0
        %756 = vmatprep.subr.bf16.mxu0 0
        %757 = vmatpush1.bf16.msra.mxu0 0
        %758 = vmatprep.subr.bf16.mxu0 0
        %759 = vmatpush1.bf16.msra.mxu0 0
        %760 = vmatprep.subr.bf16.mxu0 0
        %761 = vmatpush1.bf16.msra.mxu0 0
        %762 = vmatprep.subr.bf16.mxu0 0
        %763 = vmatpush1.bf16.msra.mxu0 0
        %764 = vmatprep.subr.bf16.mxu0 0
        %765 = vmatpush1.bf16.msra.mxu0 0
        %766 = vmatprep.subr.bf16.mxu0 0
        %767 = vmatpush1.bf16.msra.mxu0 0
        %768 = vmatprep.subr.bf16.mxu0 0
        %769 = vmatpush1.bf16.msra.mxu0 0
        %770 = vmatprep.mubr.bf16.mxu0 0
        %771 = vmatmul.mubr.bf16.gmra.mrb[0].mxu0 %v736
        %v772 = vpop.f32.mrb[0].mxu0
        %v773 = vadd.f32 %v720, %v772
        %v774 = vpop.f32.mrb[0].mxu0
        %v775 = vpop.f32.mrb[0].mxu0
        %v776 = vadd.f32 %v720, %v775
        %v777 = vpop.f32.mrb[0].mxu0
        %778 = vdwg.mxu0
        %780 = vrot.lane.b32.xlu0 %v773, 96
        %v781 = vpop.permute.xlu0 %780
        %vm782 = vcmask 64512
        %v783 = vsel %vm782, %v773, 0
        %v785 = vsel %vm782, %v781, 0
        %787 = vmatprep.subr.mxu0 0.0
        %788 = vmatpush1.xpose.msra.mxu0 %v785
        %789 = vmatprep.subr.mxu0 0.0
        %790 = vmatpush1.xpose.msra.mxu0 0.0
        %791 = vmatprep.subr.mxu0 0.0
        %792 = vmatpush1.xpose.msra.mxu0 0.0
        %793 = vmatprep.subr.mxu0 0.0
        %794 = vmatpush1.xpose.msra.mxu0 0.0
        %795 = vmatprep.subr.mxu0 0.0
        %796 = vmatpush1.xpose.msra.mxu0 0.0
        %797 = vmatprep.subr.mxu0 0.0
        %798 = vmatpush1.xpose.msra.mxu0 0.0
        %799 = vmatprep.subr.mxu0 0.0
        %800 = vmatpush1.xpose.msra.mxu0 0.0
        %801 = vmatprep.subr.mxu0 0.0
        %802 = vmatpush1.xpose.msra.mxu0 0.0
        %803 = vmatprep.subr.mxu0 0.0
        %804 = vmatpush1.xpose.msra.mxu0 0.0
        %805 = vmatprep.subr.mxu0 0.0
        %806 = vmatpush1.xpose.msra.mxu0 0.0
        %807 = vmatprep.subr.mxu0 0.0
        %808 = vmatpush1.xpose.msra.mxu0 0.0
        %809 = vmatprep.subr.mxu0 0.0
        %810 = vmatpush1.xpose.msra.mxu0 0.0
        %811 = vmatprep.subr.mxu0 0.0
        %812 = vmatpush1.xpose.msra.mxu0 0.0
        %813 = vmatprep.subr.mxu0 0.0
        %814 = vmatpush1.xpose.msra.mxu0 0.0
        %815 = vmatprep.subr.mxu0 0.0
        %816 = vmatpush1.xpose.msra.mxu0 0.0
        %817 = vmatprep.subr.mxu0 0.0
        %818 = vmatpush1.xpose.msra.mxu0 0.0
        %819 = vmatprep.subr.mxu0 0.0
        %820 = vmatpush1.xpose.msra.mxu0 0.0
        %821 = vmatprep.subr.mxu0 0.0
        %822 = vmatpush1.xpose.msra.mxu0 0.0
        %823 = vmatprep.subr.mxu0 0.0
        %824 = vmatpush1.xpose.msra.mxu0 0.0
        %825 = vmatprep.subr.mxu0 0.0
        %826 = vmatpush1.xpose.msra.mxu0 0.0
        %827 = vmatprep.subr.mxu0 0.0
        %828 = vmatpush1.xpose.msra.mxu0 0.0
        %829 = vmatprep.subr.mxu0 0.0
        %830 = vmatpush1.xpose.msra.mxu0 0.0
        %831 = vmatprep.subr.mxu0 0.0
        %832 = vmatpush1.xpose.msra.mxu0 0.0
        %833 = vmatprep.subr.mxu0 0.0
        %834 = vmatpush1.xpose.msra.mxu0 0.0
        %835 = vmatprep.subr.mxu0 0.0
        %836 = vmatpush1.xpose.msra.mxu0 0.0
        %837 = vmatprep.subr.mxu0 0.0
        %838 = vmatpush1.xpose.msra.mxu0 0.0
        %839 = vmatprep.subr.mxu0 0.0
        %840 = vmatpush1.xpose.msra.mxu0 0.0
        %841 = vmatprep.subr.mxu0 0.0
        %842 = vmatpush1.xpose.msra.mxu0 0.0
        %843 = vmatprep.subr.mxu0 0.0
        %844 = vmatpush1.xpose.msra.mxu0 0.0
        %845 = vmatprep.subr.mxu0 0.0
        %846 = vmatpush1.xpose.msra.mxu0 0.0
        %847 = vmatprep.subr.mxu0 0.0
        %848 = vmatpush1.xpose.msra.mxu0 0.0
        %849 = vmatprep.subr.mxu0 0.0
        %850 = vmatpush1.xpose.msra.mxu0 0.0
        %851 = vmatprep.mubr.f32.mxu0 0.0
        %852 = vmatmul.mubr.f32.gmra.mrb[0].mxu0 %v783
        %v853 = vpop.f32.mrb[0].mxu0
        %v854 = vadd.f32 0.0, %v853
        %v855 = vpop.f32.mrb[0].mxu0
        %856 = vdwg.mxu0
        %v857 = vmul.f32 %v854, 0.35355338
        %v858 = vsel %vm782, %v857, -inf
        %859 = vmax.xlane.f32.xlu0 %v858
        %v860 = vpop.xlane.xlu0 %859
        %v861 = vsub.f32 %v857, %v860
        %v862 = vmul.f32 %v861, 1.442695
        %v863 = vpow.pop %v862
        %v864 = vsel %vm782, %v863, 0.0
        %865 = vadd.xlane.f32.xlu0 %v864
        %v866 = vpop.xlane.xlu0 %865
        %v867 = vrcp.pop %v866
        %v868 = vmul.f32 %v863, %v867
        %869 = vrot.lane.b32.xlu0 %v773, 64
        %v870 = vpop.permute.xlu0 %869
        %v873 = vsel %vm782, %v868, 0
        %875 = vmatprep.subr.mxu0 0.0
        %876 = vmatpush1.msra.mxu0 %v870
        %877 = vmatprep.subr.mxu0 0.0
        %878 = vmatpush1.msra.mxu0 0.0
        %879 = vmatprep.subr.mxu0 0.0
        %880 = vmatpush1.msra.mxu0 0.0
        %881 = vmatprep.subr.mxu0 0.0
        %882 = vmatpush1.msra.mxu0 0.0
        %883 = vmatprep.subr.mxu0 0.0
        %884 = vmatpush1.msra.mxu0 0.0
        %885 = vmatprep.subr.mxu0 0.0
        %886 = vmatpush1.msra.mxu0 0.0
        %887 = vmatprep.subr.mxu0 0.0
        %888 = vmatpush1.msra.mxu0 0.0
        %889 = vmatprep.subr.mxu0 0.0
        %890 = vmatpush1.msra.mxu0 0.0
        %891 = vmatprep.subr.mxu0 0.0
        %892 = vmatpush1.msra.mxu0 0.0
        %893 = vmatprep.subr.mxu0 0.0
        %894 = vmatpush1.msra.mxu0 0.0
        %895 = vmatprep.subr.mxu0 0.0
        %896 = vmatpush1.msra.mxu0 0.0
        %897 = vmatprep.subr.mxu0 0.0
        %898 = vmatpush1.msra.mxu0 0.0
        %899 = vmatprep.subr.mxu0 0.0
        %900 = vmatpush1.msra.mxu0 0.0
        %901 = vmatprep.subr.mxu0 0.0
        %902 = vmatpush1.msra.mxu0 0.0
        %903 = vmatprep.subr.mxu0 0.0
        %904 = vmatpush1.msra.mxu0 0.0
        %905 = vmatprep.subr.mxu0 0.0
        %906 = vmatpush1.msra.mxu0 0.0
        %907 = vmatprep.subr.mxu0 0.0
        %908 = vmatpush1.msra.mxu0 0.0
        %909 = vmatprep.subr.mxu0 0.0
        %910 = vmatpush1.msra.mxu0 0.0
        %911 = vmatprep.subr.mxu0 0.0
        %912 = vmatpush1.msra.mxu0 0.0
        %913 = vmatprep.subr.mxu0 0.0
        %914 = vmatpush1.msra.mxu0 0.0
        %915 = vmatprep.subr.mxu0 0.0
        %916 = vmatpush1.msra.mxu0 0.0
        %917 = vmatprep.subr.mxu0 0.0
        %918 = vmatpush1.msra.mxu0 0.0
        %919 = vmatprep.subr.mxu0 0.0
        %920 = vmatpush1.msra.mxu0 0.0
        %921 = vmatprep.subr.mxu0 0.0
        %922 = vmatpush1.msra.mxu0 0.0
        %923 = vmatprep.subr.mxu0 0.0
        %924 = vmatpush1.msra.mxu0 0.0
        %925 = vmatprep.subr.mxu0 0.0
        %926 = vmatpush1.msra.mxu0 0.0
        %927 = vmatprep.subr.mxu0 0.0
        %928 = vmatpush1.msra.mxu0 0.0
        %929 = vmatprep.subr.mxu0 0.0
        %930 = vmatpush1.msra.mxu0 0.0
        %931 = vmatprep.subr.mxu0 0.0
        %932 = vmatpush1.msra.mxu0 0.0
        %933 = vmatprep.subr.mxu0 0.0
        %934 = vmatpush1.msra.mxu0 0.0
        %935 = vmatprep.subr.mxu0 0.0
        %936 = vmatpush1.msra.mxu0 0.0
        %937 = vmatprep.subr.mxu0 0.0
        %938 = vmatpush1.msra.mxu0 0.0
        %939 = vmatprep.mubr.f32.mxu0 0.0
        %940 = vmatmul.mubr.f32.gmra.mrb[0].mxu0 %v873
        %v941 = vpop.f32.mrb[0].mxu0
        %v942 = vadd.f32 0.0, %v941
        %v943 = vpop.f32.mrb[0].mxu0
        %944 = vdwg.mxu0
        %945 = vst.msk [vmem:[#allocation2] sm:$0xff] %vm782, %v942
        %946 = vrot.lane.b32.xlu0 %v773, 120
        %v947 = vpop.permute.xlu0 %946
        %948 = vrot.lane.b32.xlu0 %v773, 88
        %v949 = vpop.permute.xlu0 %948
        %v950 = vsel %vm782, %v947, 0
        %v952 = vsel %vm782, %v949, 0
        %954 = vmatprep.subr.mxu0 0.0
        %955 = vmatpush1.xpose.msra.mxu0 %v952
        %956 = vmatprep.subr.mxu0 0.0
        %957 = vmatpush1.xpose.msra.mxu0 0.0
        %958 = vmatprep.subr.mxu0 0.0
        %959 = vmatpush1.xpose.msra.mxu0 0.0
        %960 = vmatprep.subr.mxu0 0.0
        %961 = vmatpush1.xpose.msra.mxu0 0.0
        %962 = vmatprep.subr.mxu0 0.0
        %963 = vmatpush1.xpose.msra.mxu0 0.0
        %964 = vmatprep.subr.mxu0 0.0
        %965 = vmatpush1.xpose.msra.mxu0 0.0
        %966 = vmatprep.subr.mxu0 0.0
        %967 = vmatpush1.xpose.msra.mxu0 0.0
        %968 = vmatprep.subr.mxu0 0.0
        %969 = vmatpush1.xpose.msra.mxu0 0.0
        %970 = vmatprep.subr.mxu0 0.0
        %971 = vmatpush1.xpose.msra.mxu0 0.0
        %972 = vmatprep.subr.mxu0 0.0
        %973 = vmatpush1.xpose.msra.mxu0 0.0
        %974 = vmatprep.subr.mxu0 0.0
        %975 = vmatpush1.xpose.msra.mxu0 0.0
        %976 = vmatprep.subr.mxu0 0.0
        %977 = vmatpush1.xpose.msra.mxu0 0.0
        %978 = vmatprep.subr.mxu0 0.0
        %979 = vmatpush1.xpose.msra.mxu0 0.0
        %980 = vmatprep.subr.mxu0 0.0
        %981 = vmatpush1.xpose.msra.mxu0 0.0
        %982 = vmatprep.subr.mxu0 0.0
        %983 = vmatpush1.xpose.msra.mxu0 0.0
        %984 = vmatprep.subr.mxu0 0.0
        %985 = vmatpush1.xpose.msra.mxu0 0.0
        %986 = vmatprep.subr.mxu0 0.0
        %987 = vmatpush1.xpose.msra.mxu0 0.0
        %988 = vmatprep.subr.mxu0 0.0
        %989 = vmatpush1.xpose.msra.mxu0 0.0
        %990 = vmatprep.subr.mxu0 0.0
        %991 = vmatpush1.xpose.msra.mxu0 0.0
        %992 = vmatprep.subr.mxu0 0.0
        %993 = vmatpush1.xpose.msra.mxu0 0.0
        %994 = vmatprep.subr.mxu0 0.0
        %995 = vmatpush1.xpose.msra.mxu0 0.0
        %996 = vmatprep.subr.mxu0 0.0
        %997 = vmatpush1.xpose.msra.mxu0 0.0
        %998 = vmatprep.subr.mxu0 0.0
        %999 = vmatpush1.xpose.msra.mxu0 0.0
        %1000 = vmatprep.subr.mxu0 0.0
        %1001 = vmatpush1.xpose.msra.mxu0 0.0
        %1002 = vmatprep.subr.mxu0 0.0
        %1003 = vmatpush1.xpose.msra.mxu0 0.0
        %1004 = vmatprep.subr.mxu0 0.0
        %1005 = vmatpush1.xpose.msra.mxu0 0.0
        %1006 = vmatprep.subr.mxu0 0.0
        %1007 = vmatpush1.xpose.msra.mxu0 0.0
        %1008 = vmatprep.subr.mxu0 0.0
        %1009 = vmatpush1.xpose.msra.mxu0 0.0
        %1010 = vmatprep.subr.mxu0 0.0
        %1011 = vmatpush1.xpose.msra.mxu0 0.0
        %1012 = vmatprep.subr.mxu0 0.0
        %1013 = vmatpush1.xpose.msra.mxu0 0.0
        %1014 = vmatprep.subr.mxu0 0.0
        %1015 = vmatpush1.xpose.msra.mxu0 0.0
        %1016 = vmatprep.subr.mxu0 0.0
        %1017 = vmatpush1.xpose.msra.mxu0 0.0
        %1018 = vmatprep.mubr.f32.mxu0 0.0
        %1019 = vmatmul.mubr.f32.gmra.mrb[0].mxu0 %v950
        %v1020 = vpop.f32.mrb[0].mxu0
        %v1021 = vadd.f32 0.0, %v1020
        %v1022 = vpop.f32.mrb[0].mxu0
        %1023 = vdwg.mxu0
        %v1024 = vmul.f32 %v1021, 0.35355338
        %v1025 = vsel %vm782, %v1024, -inf
        %1026 = vmax.xlane.f32.xlu0 %v1025
        %v1027 = vpop.xlane.xlu0 %1026
        %v1028 = vsub.f32 %v1024, %v1027
        %v1029 = vmul.f32 %v1028, 1.442695
        %v1030 = vpow.pop %v1029
        %v1031 = vsel %vm782, %v1030, 0.0
        %1032 = vadd.xlane.f32.xlu0 %v1031
        %v1033 = vpop.xlane.xlu0 %1032
        %v1034 = vrcp.pop %v1033
        %v1035 = vmul.f32 %v1030, %v1034
        %1036 = vrot.lane.b32.xlu0 %v773, 56
        %v1037 = vpop.permute.xlu0 %1036
        %v1040 = vsel %vm782, %v1035, 0
        %1042 = vmatprep.subr.mxu0 0.0
        %1043 = vmatpush1.msra.mxu0 %v1037
        %1044 = vmatprep.subr.mxu0 0.0
        %1045 = vmatpush1.msra.mxu0 0.0
        %1046 = vmatprep.subr.mxu0 0.0
        %1047 = vmatpush1.msra.mxu0 0.0
        %1048 = vmatprep.subr.mxu0 0.0
        %1049 = vmatpush1.msra.mxu0 0.0
        %1050 = vmatprep.subr.mxu0 0.0
        %1051 = vmatpush1.msra.mxu0 0.0
        %1052 = vmatprep.subr.mxu0 0.0
        %1053 = vmatpush1.msra.mxu0 0.0
        %1054 = vmatprep.subr.mxu0 0.0
        %1055 = vmatpush1.msra.mxu0 0.0
        %1056 = vmatprep.subr.mxu0 0.0
        %1057 = vmatpush1.msra.mxu0 0.0
        %1058 = vmatprep.subr.mxu0 0.0
        %1059 = vmatpush1.msra.mxu0 0.0
        %1060 = vmatprep.subr.mxu0 0.0
        %1061 = vmatpush1.msra.mxu0 0.0
        %1062 = vmatprep.subr.mxu0 0.0
        %1063 = vmatpush1.msra.mxu0 0.0
        %1064 = vmatprep.subr.mxu0 0.0
        %1065 = vmatpush1.msra.mxu0 0.0
        %1066 = vmatprep.subr.mxu0 0.0
        %1067 = vmatpush1.msra.mxu0 0.0
        %1068 = vmatprep.subr.mxu0 0.0
        %1069 = vmatpush1.msra.mxu0 0.0
        %1070 = vmatprep.subr.mxu0 0.0
        %1071 = vmatpush1.msra.mxu0 0.0
        %1072 = vmatprep.subr.mxu0 0.0
        %1073 = vmatpush1.msra.mxu0 0.0
        %1074 = vmatprep.subr.mxu0 0.0
        %1075 = vmatpush1.msra.mxu0 0.0
        %1076 = vmatprep.subr.mxu0 0.0
        %1077 = vmatpush1.msra.mxu0 0.0
        %1078 = vmatprep.subr.mxu0 0.0
        %1079 = vmatpush1.msra.mxu0 0.0
        %1080 = vmatprep.subr.mxu0 0.0
        %1081 = vmatpush1.msra.mxu0 0.0
        %1082 = vmatprep.subr.mxu0 0.0
        %1083 = vmatpush1.msra.mxu0 0.0
        %1084 = vmatprep.subr.mxu0 0.0
        %1085 = vmatpush1.msra.mxu0 0.0
        %1086 = vmatprep.subr.mxu0 0.0
        %1087 = vmatpush1.msra.mxu0 0.0
        %1088 = vmatprep.subr.mxu0 0.0
        %1089 = vmatpush1.msra.mxu0 0.0
        %1090 = vmatprep.subr.mxu0 0.0
        %1091 = vmatpush1.msra.mxu0 0.0
        %1092 = vmatprep.subr.mxu0 0.0
        %1093 = vmatpush1.msra.mxu0 0.0
        %1094 = vmatprep.subr.mxu0 0.0
        %1095 = vmatpush1.msra.mxu0 0.0
        %1096 = vmatprep.subr.mxu0 0.0
        %1097 = vmatpush1.msra.mxu0 0.0
        %1098 = vmatprep.subr.mxu0 0.0
        %1099 = vmatpush1.msra.mxu0 0.0
        %1100 = vmatprep.subr.mxu0 0.0
        %1101 = vmatpush1.msra.mxu0 0.0
        %1102 = vmatprep.subr.mxu0 0.0
        %1103 = vmatpush1.msra.mxu0 0.0
        %1104 = vmatprep.subr.mxu0 0.0
        %1105 = vmatpush1.msra.mxu0 0.0
        %1106 = vmatprep.mubr.f32.mxu0 0.0
        %1107 = vmatmul.mubr.f32.gmra.mrb[0].mxu0 %v1040
        %v1108 = vpop.f32.mrb[0].mxu0
        %v1109 = vadd.f32 0.0, %v1108
        %v1110 = vpop.f32.mrb[0].mxu0
        %1111 = vdwg.mxu0
        %1113 = vrot.lane.b32.xlu0 %v1109, 8
        %v1114 = vpop.permute.xlu0 %1113
        %vm1116 = vcmask 130112
        %1117 = vst.msk [vmem:[#allocation2] sm:$0xff] %vm1116, %v1114
        %1118 = vrot.lane.b32.xlu0 %v773, 112
        %v1119 = vpop.permute.xlu0 %1118
        %1120 = vrot.lane.b32.xlu0 %v773, 80
        %v1121 = vpop.permute.xlu0 %1120
        %v1122 = vsel %vm782, %v1119, 0
        %v1124 = vsel %vm782, %v1121, 0
        %1126 = vmatprep.subr.mxu0 0.0
        %1127 = vmatpush1.xpose.msra.mxu0 %v1124
        %1128 = vmatprep.subr.mxu0 0.0
        %1129 = vmatpush1.xpose.msra.mxu0 0.0
        %1130 = vmatprep.subr.mxu0 0.0
        %1131 = vmatpush1.xpose.msra.mxu0 0.0
        %1132 = vmatprep.subr.mxu0 0.0
        %1133 = vmatpush1.xpose.msra.mxu0 0.0
        %1134 = vmatprep.subr.mxu0 0.0
        %1135 = vmatpush1.xpose.msra.mxu0 0.0
        %1136 = vmatprep.subr.mxu0 0.0
        %1137 = vmatpush1.xpose.msra.mxu0 0.0
        %1138 = vmatprep.subr.mxu0 0.0
        %1139 = vmatpush1.xpose.msra.mxu0 0.0
        %1140 = vmatprep.subr.mxu0 0.0
        %1141 = vmatpush1.xpose.msra.mxu0 0.0
        %1142 = vmatprep.subr.mxu0 0.0
        %1143 = vmatpush1.xpose.msra.mxu0 0.0
        %1144 = vmatprep.subr.mxu0 0.0
        %1145 = vmatpush1.xpose.msra.mxu0 0.0
        %1146 = vmatprep.subr.mxu0 0.0
        %1147 = vmatpush1.xpose.msra.mxu0 0.0
        %1148 = vmatprep.subr.mxu0 0.0
        %1149 = vmatpush1.xpose.msra.mxu0 0.0
        %1150 = vmatprep.subr.mxu0 0.0
        %1151 = vmatpush1.xpose.msra.mxu0 0.0
        %1152 = vmatprep.subr.mxu0 0.0
        %1153 = vmatpush1.xpose.msra.mxu0 0.0
        %1154 = vmatprep.subr.mxu0 0.0
        %1155 = vmatpush1.xpose.msra.mxu0 0.0
        %1156 = vmatprep.subr.mxu0 0.0
        %1157 = vmatpush1.xpose.msra.mxu0 0.0
        %1158 = vmatprep.subr.mxu0 0.0
        %1159 = vmatpush1.xpose.msra.mxu0 0.0
        %1160 = vmatprep.subr.mxu0 0.0
        %1161 = vmatpush1.xpose.msra.mxu0 0.0
        %1162 = vmatprep.subr.mxu0 0.0
        %1163 = vmatpush1.xpose.msra.mxu0 0.0
        %1164 = vmatprep.subr.mxu0 0.0
        %1165 = vmatpush1.xpose.msra.mxu0 0.0
        %1166 = vmatprep.subr.mxu0 0.0
        %1167 = vmatpush1.xpose.msra.mxu0 0.0
        %1168 = vmatprep.subr.mxu0 0.0
        %1169 = vmatpush1.xpose.msra.mxu0 0.0
        %1170 = vmatprep.subr.mxu0 0.0
        %1171 = vmatpush1.xpose.msra.mxu0 0.0
        %1172 = vmatprep.subr.mxu0 0.0
        %1173 = vmatpush1.xpose.msra.mxu0 0.0
        %1174 = vmatprep.subr.mxu0 0.0
        %1175 = vmatpush1.xpose.msra.mxu0 0.0
        %1176 = vmatprep.subr.mxu0 0.0
        %1177 = vmatpush1.xpose.msra.mxu0 0.0
        %1178 = vmatprep.subr.mxu0 0.0
        %1179 = vmatpush1.xpose.msra.mxu0 0.0
        %1180 = vmatprep.subr.mxu0 0.0
        %1181 = vmatpush1.xpose.msra.mxu0 0.0
        %1182 = vmatprep.subr.mxu0 0.0
        %1183 = vmatpush1.xpose.msra.mxu0 0.0
        %1184 = vmatprep.subr.mxu0 0.0
        %1185 = vmatpush1.xpose.msra.mxu0 0.0
        %1186 = vmatprep.subr.mxu0 0.0
        %1187 = vmatpush1.xpose.msra.mxu0 0.0
        %1188 = vmatprep.subr.mxu0 0.0
        %1189 = vmatpush1.xpose.msra.mxu0 0.0
        %1190 = vmatprep.mubr.f32.mxu0 0.0
        %1191 = vmatmul.mubr.f32.gmra.mrb[0].mxu0 %v1122
        %v1192 = vpop.f32.mrb[0].mxu0
        %v1193 = vadd.f32 0.0, %v1192
        %v1194 = vpop.f32.mrb[0].mxu0
        %1195 = vdwg.mxu0
        %v1196 = vmul.f32 %v1193, 0.35355338
        %v1197 = vsel %vm782, %v1196, -inf
        %1198 = vmax.xlane.f32.xlu0 %v1197
        %v1199 = vpop.xlane.xlu0 %1198
        %v1200 = vsub.f32 %v1196, %v1199
        %v1201 = vmul.f32 %v1200, 1.442695
        %v1202 = vpow.pop %v1201
        %v1203 = vsel %vm782, %v1202, 0.0
        %1204 = vadd.xlane.f32.xlu0 %v1203
        %v1205 = vpop.xlane.xlu0 %1204
        %v1206 = vrcp.pop %v1205
        %v1207 = vmul.f32 %v1202, %v1206
        %1208 = vrot.lane.b32.xlu0 %v773, 48
        %v1209 = vpop.permute.xlu0 %1208
        %v1212 = vsel %vm782, %v1207, 0
        %1214 = vmatprep.subr.mxu0 0.0
        %1215 = vmatpush1.msra.mxu0 %v1209
        %1216 = vmatprep.subr.mxu0 0.0
        %1217 = vmatpush1.msra.mxu0 0.0
        %1218 = vmatprep.subr.mxu0 0.0
        %1219 = vmatpush1.msra.mxu0 0.0
        %1220 = vmatprep.subr.mxu0 0.0
        %1221 = vmatpush1.msra.mxu0 0.0
        %1222 = vmatprep.subr.mxu0 0.0
        %1223 = vmatpush1.msra.mxu0 0.0
        %1224 = vmatprep.subr.mxu0 0.0
        %1225 = vmatpush1.msra.mxu0 0.0
        %1226 = vmatprep.subr.mxu0 0.0
        %1227 = vmatpush1.msra.mxu0 0.0
        %1228 = vmatprep.subr.mxu0 0.0
        %1229 = vmatpush1.msra.mxu0 0.0
        %1230 = vmatprep.subr.mxu0 0.0
        %1231 = vmatpush1.msra.mxu0 0.0
        %1232 = vmatprep.subr.mxu0 0.0
        %1233 = vmatpush1.msra.mxu0 0.0
        %1234 = vmatprep.subr.mxu0 0.0
        %1235 = vmatpush1.msra.mxu0 0.0
        %1236 = vmatprep.subr.mxu0 0.0
        %1237 = vmatpush1.msra.mxu0 0.0
        %1238 = vmatprep.subr.mxu0 0.0
        %1239 = vmatpush1.msra.mxu0 0.0
        %1240 = vmatprep.subr.mxu0 0.0
        %1241 = vmatpush1.msra.mxu0 0.0
        %1242 = vmatprep.subr.mxu0 0.0
        %1243 = vmatpush1.msra.mxu0 0.0
        %1244 = vmatprep.subr.mxu0 0.0
        %1245 = vmatpush1.msra.mxu0 0.0
        %1246 = vmatprep.subr.mxu0 0.0
        %1247 = vmatpush1.msra.mxu0 0.0
        %1248 = vmatprep.subr.mxu0 0.0
        %1249 = vmatpush1.msra.mxu0 0.0
        %1250 = vmatprep.subr.mxu0 0.0
        %1251 = vmatpush1.msra.mxu0 0.0
        %1252 = vmatprep.subr.mxu0 0.0
        %1253 = vmatpush1.msra.mxu0 0.0
        %1254 = vmatprep.subr.mxu0 0.0
        %1255 = vmatpush1.msra.mxu0 0.0
        %1256 = vmatprep.subr.mxu0 0.0
        %1257 = vmatpush1.msra.mxu0 0.0
        %1258 = vmatprep.subr.mxu0 0.0
        %1259 = vmatpush1.msra.mxu0 0.0
        %1260 = vmatprep.subr.mxu0 0.0
        %1261 = vmatpush1.msra.mxu0 0.0
        %1262 = vmatprep.subr.mxu0 0.0
        %1263 = vmatpush1.msra.mxu0 0.0
        %1264 = vmatprep.subr.mxu0 0.0
        %1265 = vmatpush1.msra.mxu0 0.0
        %1266 = vmatprep.subr.mxu0 0.0
        %1267 = vmatpush1.msra.mxu0 0.0
        %1268 = vmatprep.subr.mxu0 0.0
        %1269 = vmatpush1.msra.mxu0 0.0
        %1270 = vmatprep.subr.mxu0 0.0
        %1271 = vmatpush1.msra.mxu0 0.0
        %1272 = vmatprep.subr.mxu0 0.0
        %1273 = vmatpush1.msra.mxu0 0.0
        %1274 = vmatprep.subr.mxu0 0.0
        %1275 = vmatpush1.msra.mxu0 0.0
        %1276 = vmatprep.subr.mxu0 0.0
        %1277 = vmatpush1.msra.mxu0 0.0
        %1278 = vmatprep.mubr.f32.mxu0 0.0
        %1279 = vmatmul.mubr.f32.gmra.mrb[0].mxu0 %v1212
        %v1280 = vpop.f32.mrb[0].mxu0
        %v1281 = vadd.f32 0.0, %v1280
        %v1282 = vpop.f32.mrb[0].mxu0
        %1283 = vdwg.mxu0
        %1285 = vrot.lane.b32.xlu0 %v1281, 16
        %v1286 = vpop.permute.xlu0 %1285
        %vm1288 = vcmask 195712
        %1289 = vst.msk [vmem:[#allocation2] sm:$0xff] %vm1288, %v1286
        %1290 = vrot.lane.b32.xlu0 %v773, 104
        %v1291 = vpop.permute.xlu0 %1290
        %1292 = vrot.lane.b32.xlu0 %v773, 72
        %v1293 = vpop.permute.xlu0 %1292
        %v1294 = vsel %vm782, %v1291, 0
        %v1296 = vsel %vm782, %v1293, 0
        %1298 = vmatprep.subr.mxu0 0.0
        %1299 = vmatpush1.xpose.msra.mxu0 %v1296
        %1300 = vmatprep.subr.mxu0 0.0
        %1301 = vmatpush1.xpose.msra.mxu0 0.0
        %1302 = vmatprep.subr.mxu0 0.0
        %1303 = vmatpush1.xpose.msra.mxu0 0.0
        %1304 = vmatprep.subr.mxu0 0.0
        %1305 = vmatpush1.xpose.msra.mxu0 0.0
        %1306 = vmatprep.subr.mxu0 0.0
        %1307 = vmatpush1.xpose.msra.mxu0 0.0
        %1308 = vmatprep.subr.mxu0 0.0
        %1309 = vmatpush1.xpose.msra.mxu0 0.0
        %1310 = vmatprep.subr.mxu0 0.0
        %1311 = vmatpush1.xpose.msra.mxu0 0.0
        %1312 = vmatprep.subr.mxu0 0.0
        %1313 = vmatpush1.xpose.msra.mxu0 0.0
        %1314 = vmatprep.subr.mxu0 0.0
        %1315 = vmatpush1.xpose.msra.mxu0 0.0
        %1316 = vmatprep.subr.mxu0 0.0
        %1317 = vmatpush1.xpose.msra.mxu0 0.0
        %1318 = vmatprep.subr.mxu0 0.0
        %1319 = vmatpush1.xpose.msra.mxu0 0.0
        %1320 = vmatprep.subr.mxu0 0.0
        %1321 = vmatpush1.xpose.msra.mxu0 0.0
        %1322 = vmatprep.subr.mxu0 0.0
        %1323 = vmatpush1.xpose.msra.mxu0 0.0
        %1324 = vmatprep.subr.mxu0 0.0
        %1325 = vmatpush1.xpose.msra.mxu0 0.0
        %1326 = vmatprep.subr.mxu0 0.0
        %1327 = vmatpush1.xpose.msra.mxu0 0.0
        %1328 = vmatprep.subr.mxu0 0.0
        %1329 = vmatpush1.xpose.msra.mxu0 0.0
        %1330 = vmatprep.subr.mxu0 0.0
        %1331 = vmatpush1.xpose.msra.mxu0 0.0
        %1332 = vmatprep.subr.mxu0 0.0
        %1333 = vmatpush1.xpose.msra.mxu0 0.0
        %1334 = vmatprep.subr.mxu0 0.0
        %1335 = vmatpush1.xpose.msra.mxu0 0.0
        %1336 = vmatprep.subr.mxu0 0.0
        %1337 = vmatpush1.xpose.msra.mxu0 0.0
        %1338 = vmatprep.subr.mxu0 0.0
        %1339 = vmatpush1.xpose.msra.mxu0 0.0
        %1340 = vmatprep.subr.mxu0 0.0
        %1341 = vmatpush1.xpose.msra.mxu0 0.0
        %1342 = vmatprep.subr.mxu0 0.0
        %1343 = vmatpush1.xpose.msra.mxu0 0.0
        %1344 = vmatprep.subr.mxu0 0.0
        %1345 = vmatpush1.xpose.msra.mxu0 0.0
        %1346 = vmatprep.subr.mxu0 0.0
        %1347 = vmatpush1.xpose.msra.mxu0 0.0
        %1348 = vmatprep.subr.mxu0 0.0
        %1349 = vmatpush1.xpose.msra.mxu0 0.0
        %1350 = vmatprep.subr.mxu0 0.0
        %1351 = vmatpush1.xpose.msra.mxu0 0.0
        %1352 = vmatprep.subr.mxu0 0.0
        %1353 = vmatpush1.xpose.msra.mxu0 0.0
        %1354 = vmatprep.subr.mxu0 0.0
        %1355 = vmatpush1.xpose.msra.mxu0 0.0
        %1356 = vmatprep.subr.mxu0 0.0
        %1357 = vmatpush1.xpose.msra.mxu0 0.0
        %1358 = vmatprep.subr.mxu0 0.0
        %1359 = vmatpush1.xpose.msra.mxu0 0.0
        %1360 = vmatprep.subr.mxu0 0.0
        %1361 = vmatpush1.xpose.msra.mxu0 0.0
        %1362 = vmatprep.mubr.f32.mxu0 0.0
        %1363 = vmatmul.mubr.f32.gmra.mrb[0].mxu0 %v1294
        %v1364 = vpop.f32.mrb[0].mxu0
        %v1365 = vadd.f32 0.0, %v1364
        %v1366 = vpop.f32.mrb[0].mxu0
        %1367 = vdwg.mxu0
        %v1368 = vmul.f32 %v1365, 0.35355338
        %v1369 = vsel %vm782, %v1368, -inf
        %1370 = vmax.xlane.f32.xlu0 %v1369
        %v1371 = vpop.xlane.xlu0 %1370
        %v1372 = vsub.f32 %v1368, %v1371
        %v1373 = vmul.f32 %v1372, 1.442695
        %v1374 = vpow.pop %v1373
        %v1375 = vsel %vm782, %v1374, 0.0
        %1376 = vadd.xlane.f32.xlu0 %v1375
        %v1377 = vpop.xlane.xlu0 %1376
        %v1378 = vrcp.pop %v1377
        %v1379 = vmul.f32 %v1374, %v1378
        %1380 = vrot.lane.b32.xlu0 %v773, 40
        %v1381 = vpop.permute.xlu0 %1380
        %v1384 = vsel %vm782, %v1379, 0
        %1386 = vmatprep.subr.mxu0 0.0
        %1387 = vmatpush1.msra.mxu0 %v1381
        %1388 = vmatprep.subr.mxu0 0.0
        %1389 = vmatpush1.msra.mxu0 0.0
        %1390 = vmatprep.subr.mxu0 0.0
        %1391 = vmatpush1.msra.mxu0 0.0
        %1392 = vmatprep.subr.mxu0 0.0
        %1393 = vmatpush1.msra.mxu0 0.0
        %1394 = vmatprep.subr.mxu0 0.0
        %1395 = vmatpush1.msra.mxu0 0.0
        %1396 = vmatprep.subr.mxu0 0.0
        %1397 = vmatpush1.msra.mxu0 0.0
        %1398 = vmatprep.subr.mxu0 0.0
        %1399 = vmatpush1.msra.mxu0 0.0
        %1400 = vmatprep.subr.mxu0 0.0
        %1401 = vmatpush1.msra.mxu0 0.0
        %1402 = vmatprep.subr.mxu0 0.0
        %1403 = vmatpush1.msra.mxu0 0.0
        %1404 = vmatprep.subr.mxu0 0.0
        %1405 = vmatpush1.msra.mxu0 0.0
        %1406 = vmatprep.subr.mxu0 0.0
        %1407 = vmatpush1.msra.mxu0 0.0
        %1408 = vmatprep.subr.mxu0 0.0
        %1409 = vmatpush1.msra.mxu0 0.0
        %1410 = vmatprep.subr.mxu0 0.0
        %1411 = vmatpush1.msra.mxu0 0.0
        %1412 = vmatprep.subr.mxu0 0.0
        %1413 = vmatpush1.msra.mxu0 0.0
        %1414 = vmatprep.subr.mxu0 0.0
        %1415 = vmatpush1.msra.mxu0 0.0
        %1416 = vmatprep.subr.mxu0 0.0
        %1417 = vmatpush1.msra.mxu0 0.0
        %1418 = vmatprep.subr.mxu0 0.0
        %1419 = vmatpush1.msra.mxu0 0.0
        %1420 = vmatprep.subr.mxu0 0.0
        %1421 = vmatpush1.msra.mxu0 0.0
        %1422 = vmatprep.subr.mxu0 0.0
        %1423 = vmatpush1.msra.mxu0 0.0
        %1424 = vmatprep.subr.mxu0 0.0
        %1425 = vmatpush1.msra.mxu0 0.0
        %1426 = vmatprep.subr.mxu0 0.0
        %1427 = vmatpush1.msra.mxu0 0.0
        %1428 = vmatprep.subr.mxu0 0.0
        %1429 = vmatpush1.msra.mxu0 0.0
        %1430 = vmatprep.subr.mxu0 0.0
        %1431 = vmatpush1.msra.mxu0 0.0
        %1432 = vmatprep.subr.mxu0 0.0
        %1433 = vmatpush1.msra.mxu0 0.0
        %1434 = vmatprep.subr.mxu0 0.0
        %1435 = vmatpush1.msra.mxu0 0.0
        %1436 = vmatprep.subr.mxu0 0.0
        %1437 = vmatpush1.msra.mxu0 0.0
        %1438 = vmatprep.subr.mxu0 0.0
        %1439 = vmatpush1.msra.mxu0 0.0
        %1440 = vmatprep.subr.mxu0 0.0
        %1441 = vmatpush1.msra.mxu0 0.0
        %1442 = vmatprep.subr.mxu0 0.0
        %1443 = vmatpush1.msra.mxu0 0.0
        %1444 = vmatprep.subr.mxu0 0.0
        %1445 = vmatpush1.msra.mxu0 0.0
        %1446 = vmatprep.subr.mxu0 0.0
        %1447 = vmatpush1.msra.mxu0 0.0
        %1448 = vmatprep.subr.mxu0 0.0
        %1449 = vmatpush1.msra.mxu0 0.0
        %1450 = vmatprep.mubr.f32.mxu0 0.0
        %1451 = vmatmul.mubr.f32.gmra.mrb[0].mxu0 %v1384
        %v1452 = vpop.f32.mrb[0].mxu0
        %v1453 = vadd.f32 0.0, %v1452
        %v1454 = vpop.f32.mrb[0].mxu0
        %1455 = vdwg.mxu0
        %1457 = vrot.lane.b32.xlu0 %v1453, 24
        %v1458 = vpop.permute.xlu0 %1457
        %vm1460 = vcmask 261312
        %1461 = vst.msk [vmem:[#allocation2] sm:$0xff] %vm1460, %v1458
        %1463 = vrot.lane.b32.xlu0 %v776, 96
        %v1464 = vpop.permute.xlu0 %1463
        %v1465 = vsel %vm782, %v776, 0
        %v1467 = vsel %vm782, %v1464, 0
        %1469 = vmatprep.subr.mxu0 0.0
        %1470 = vmatpush1.xpose.msra.mxu0 %v1467
        %1471 = vmatprep.subr.mxu0 0.0
        %1472 = vmatpush1.xpose.msra.mxu0 0.0
        %1473 = vmatprep.subr.mxu0 0.0
        %1474 = vmatpush1.xpose.msra.mxu0 0.0
        %1475 = vmatprep.subr.mxu0 0.0
        %1476 = vmatpush1.xpose.msra.mxu0 0.0
        %1477 = vmatprep.subr.mxu0 0.0
        %1478 = vmatpush1.xpose.msra.mxu0 0.0
        %1479 = vmatprep.subr.mxu0 0.0
        %1480 = vmatpush1.xpose.msra.mxu0 0.0
        %1481 = vmatprep.subr.mxu0 0.0
        %1482 = vmatpush1.xpose.msra.mxu0 0.0
        %1483 = vmatprep.subr.mxu0 0.0
        %1484 = vmatpush1.xpose.msra.mxu0 0.0
        %1485 = vmatprep.subr.mxu0 0.0
        %1486 = vmatpush1.xpose.msra.mxu0 0.0
        %1487 = vmatprep.subr.mxu0 0.0
        %1488 = vmatpush1.xpose.msra.mxu0 0.0
        %1489 = vmatprep.subr.mxu0 0.0
        %1490 = vmatpush1.xpose.msra.mxu0 0.0
        %1491 = vmatprep.subr.mxu0 0.0
        %1492 = vmatpush1.xpose.msra.mxu0 0.0
        %1493 = vmatprep.subr.mxu0 0.0
        %1494 = vmatpush1.xpose.msra.mxu0 0.0
        %1495 = vmatprep.subr.mxu0 0.0
        %1496 = vmatpush1.xpose.msra.mxu0 0.0
        %1497 = vmatprep.subr.mxu0 0.0
        %1498 = vmatpush1.xpose.msra.mxu0 0.0
        %1499 = vmatprep.subr.mxu0 0.0
        %1500 = vmatpush1.xpose.msra.mxu0 0.0
        %1501 = vmatprep.subr.mxu0 0.0
        %1502 = vmatpush1.xpose.msra.mxu0 0.0
        %1503 = vmatprep.subr.mxu0 0.0
        %1504 = vmatpush1.xpose.msra.mxu0 0.0
        %1505 = vmatprep.subr.mxu0 0.0
        %1506 = vmatpush1.xpose.msra.mxu0 0.0
        %1507 = vmatprep.subr.mxu0 0.0
        %1508 = vmatpush1.xpose.msra.mxu0 0.0
        %1509 = vmatprep.subr.mxu0 0.0
        %1510 = vmatpush1.xpose.msra.mxu0 0.0
        %1511 = vmatprep.subr.mxu0 0.0
        %1512 = vmatpush1.xpose.msra.mxu0 0.0
        %1513 = vmatprep.subr.mxu0 0.0
        %1514 = vmatpush1.xpose.msra.mxu0 0.0
        %1515 = vmatprep.subr.mxu0 0.0
        %1516 = vmatpush1.xpose.msra.mxu0 0.0
        %1517 = vmatprep.subr.mxu0 0.0
        %1518 = vmatpush1.xpose.msra.mxu0 0.0
        %1519 = vmatprep.subr.mxu0 0.0
        %1520 = vmatpush1.xpose.msra.mxu0 0.0
        %1521 = vmatprep.subr.mxu0 0.0
        %1522 = vmatpush1.xpose.msra.mxu0 0.0
        %1523 = vmatprep.subr.mxu0 0.0
        %1524 = vmatpush1.xpose.msra.mxu0 0.0
        %1525 = vmatprep.subr.mxu0 0.0
        %1526 = vmatpush1.xpose.msra.mxu0 0.0
        %1527 = vmatprep.subr.mxu0 0.0
        %1528 = vmatpush1.xpose.msra.mxu0 0.0
        %1529 = vmatprep.subr.mxu0 0.0
        %1530 = vmatpush1.xpose.msra.mxu0 0.0
        %1531 = vmatprep.subr.mxu0 0.0
        %1532 = vmatpush1.xpose.msra.mxu0 0.0
        %1533 = vmatprep.mubr.f32.mxu0 0.0
        %1534 = vmatmul.mubr.f32.gmra.mrb[0].mxu0 %v1465
        %v1535 = vpop.f32.mrb[0].mxu0
        %v1536 = vadd.f32 0.0, %v1535
        %v1537 = vpop.f32.mrb[0].mxu0
        %1538 = vdwg.mxu0
        %v1539 = vmul.f32 %v1536, 0.35355338
        %v1540 = vsel %vm782, %v1539, -inf
        %1541 = vmax.xlane.f32.xlu0 %v1540
        %v1542 = vpop.xlane.xlu0 %1541
        %v1543 = vsub.f32 %v1539, %v1542
        %v1544 = vmul.f32 %v1543, 1.442695
        %v1545 = vpow.pop %v1544
        %v1546 = vsel %vm782, %v1545, 0.0
        %1547 = vadd.xlane.f32.xlu0 %v1546
        %v1548 = vpop.xlane.xlu0 %1547
        %v1549 = vrcp.pop %v1548
        %v1550 = vmul.f32 %v1545, %v1549
        %1551 = vrot.lane.b32.xlu0 %v776, 64
        %v1552 = vpop.permute.xlu0 %1551
        %v1555 = vsel %vm782, %v1550, 0
        %1557 = vmatprep.subr.mxu0 0.0
        %1558 = vmatpush1.msra.mxu0 %v1552
        %1559 = vmatprep.subr.mxu0 0.0
        %1560 = vmatpush1.msra.mxu0 0.0
        %1561 = vmatprep.subr.mxu0 0.0
        %1562 = vmatpush1.msra.mxu0 0.0
        %1563 = vmatprep.subr.mxu0 0.0
        %1564 = vmatpush1.msra.mxu0 0.0
        %1565 = vmatprep.subr.mxu0 0.0
        %1566 = vmatpush1.msra.mxu0 0.0
        %1567 = vmatprep.subr.mxu0 0.0
        %1568 = vmatpush1.msra.mxu0 0.0
        %1569 = vmatprep.subr.mxu0 0.0
        %1570 = vmatpush1.msra.mxu0 0.0
        %1571 = vmatprep.subr.mxu0 0.0
        %1572 = vmatpush1.msra.mxu0 0.0
        %1573 = vmatprep.subr.mxu0 0.0
        %1574 = vmatpush1.msra.mxu0 0.0
        %1575 = vmatprep.subr.mxu0 0.0
        %1576 = vmatpush1.msra.mxu0 0.0
        %1577 = vmatprep.subr.mxu0 0.0
        %1578 = vmatpush1.msra.mxu0 0.0
        %1579 = vmatprep.subr.mxu0 0.0
        %1580 = vmatpush1.msra.mxu0 0.0
        %1581 = vmatprep.subr.mxu0 0.0
        %1582 = vmatpush1.msra.mxu0 0.0
        %1583 = vmatprep.subr.mxu0 0.0
        %1584 = vmatpush1.msra.mxu0 0.0
        %1585 = vmatprep.subr.mxu0 0.0
        %1586 = vmatpush1.msra.mxu0 0.0
        %1587 = vmatprep.subr.mxu0 0.0
        %1588 = vmatpush1.msra.mxu0 0.0
        %1589 = vmatprep.subr.mxu0 0.0
        %1590 = vmatpush1.msra.mxu0 0.0
        %1591 = vmatprep.subr.mxu0 0.0
        %1592 = vmatpush1.msra.mxu0 0.0
        %1593 = vmatprep.subr.mxu0 0.0
        %1594 = vmatpush1.msra.mxu0 0.0
        %1595 = vmatprep.subr.mxu0 0.0
        %1596 = vmatpush1.msra.mxu0 0.0
        %1597 = vmatprep.subr.mxu0 0.0
        %1598 = vmatpush1.msra.mxu0 0.0
        %1599 = vmatprep.subr.mxu0 0.0
        %1600 = vmatpush1.msra.mxu0 0.0
        %1601 = vmatprep.subr.mxu0 0.0
        %1602 = vmatpush1.msra.mxu0 0.0
        %1603 = vmatprep.subr.mxu0 0.0
        %1604 = vmatpush1.msra.mxu0 0.0
        %1605 = vmatprep.subr.mxu0 0.0
        %1606 = vmatpush1.msra.mxu0 0.0
        %1607 = vmatprep.subr.mxu0 0.0
        %1608 = vmatpush1.msra.mxu0 0.0
        %1609 = vmatprep.subr.mxu0 0.0
        %1610 = vmatpush1.msra.mxu0 0.0
        %1611 = vmatprep.subr.mxu0 0.0
        %1612 = vmatpush1.msra.mxu0 0.0
        %1613 = vmatprep.subr.mxu0 0.0
        %1614 = vmatpush1.msra.mxu0 0.0
        %1615 = vmatprep.subr.mxu0 0.0
        %1616 = vmatpush1.msra.mxu0 0.0
        %1617 = vmatprep.subr.mxu0 0.0
        %1618 = vmatpush1.msra.mxu0 0.0
        %1619 = vmatprep.subr.mxu0 0.0
        %1620 = vmatpush1.msra.mxu0 0.0
        %1621 = vmatprep.mubr.f32.mxu0 0.0
        %1622 = vmatmul.mubr.f32.gmra.mrb[0].mxu0 %v1555
        %v1623 = vpop.f32.mrb[0].mxu0
        %v1624 = vadd.f32 0.0, %v1623
        %v1625 = vpop.f32.mrb[0].mxu0
        %1626 = vdwg.mxu0
        %1627 = vst.msk [vmem:[#allocation2 + $0x8] sm:$0xff] %vm782, %v1624
        %1628 = vrot.lane.b32.xlu0 %v776, 120
        %v1629 = vpop.permute.xlu0 %1628
        %1630 = vrot.lane.b32.xlu0 %v776, 88
        %v1631 = vpop.permute.xlu0 %1630
        %v1632 = vsel %vm782, %v1629, 0
        %v1634 = vsel %vm782, %v1631, 0
        %1636 = vmatprep.subr.mxu0 0.0
        %1637 = vmatpush1.xpose.msra.mxu0 %v1634
        %1638 = vmatprep.subr.mxu0 0.0
        %1639 = vmatpush1.xpose.msra.mxu0 0.0
        %1640 = vmatprep.subr.mxu0 0.0
        %1641 = vmatpush1.xpose.msra.mxu0 0.0
        %1642 = vmatprep.subr.mxu0 0.0
        %1643 = vmatpush1.xpose.msra.mxu0 0.0
        %1644 = vmatprep.subr.mxu0 0.0
        %1645 = vmatpush1.xpose.msra.mxu0 0.0
        %1646 = vmatprep.subr.mxu0 0.0
        %1647 = vmatpush1.xpose.msra.mxu0 0.0
        %1648 = vmatprep.subr.mxu0 0.0
        %1649 = vmatpush1.xpose.msra.mxu0 0.0
        %1650 = vmatprep.subr.mxu0 0.0
        %1651 = vmatpush1.xpose.msra.mxu0 0.0
        %1652 = vmatprep.subr.mxu0 0.0
        %1653 = vmatpush1.xpose.msra.mxu0 0.0
        %1654 = vmatprep.subr.mxu0 0.0
        %1655 = vmatpush1.xpose.msra.mxu0 0.0
        %1656 = vmatprep.subr.mxu0 0.0
        %1657 = vmatpush1.xpose.msra.mxu0 0.0
        %1658 = vmatprep.subr.mxu0 0.0
        %1659 = vmatpush1.xpose.msra.mxu0 0.0
        %1660 = vmatprep.subr.mxu0 0.0
        %1661 = vmatpush1.xpose.msra.mxu0 0.0
        %1662 = vmatprep.subr.mxu0 0.0
        %1663 = vmatpush1.xpose.msra.mxu0 0.0
        %1664 = vmatprep.subr.mxu0 0.0
        %1665 = vmatpush1.xpose.msra.mxu0 0.0
        %1666 = vmatprep.subr.mxu0 0.0
        %1667 = vmatpush1.xpose.msra.mxu0 0.0
        %1668 = vmatprep.subr.mxu0 0.0
        %1669 = vmatpush1.xpose.msra.mxu0 0.0
        %1670 = vmatprep.subr.mxu0 0.0
        %1671 = vmatpush1.xpose.msra.mxu0 0.0
        %1672 = vmatprep.subr.mxu0 0.0
        %1673 = vmatpush1.xpose.msra.mxu0 0.0
        %1674 = vmatprep.subr.mxu0 0.0
        %1675 = vmatpush1.xpose.msra.mxu0 0.0
        %1676 = vmatprep.subr.mxu0 0.0
        %1677 = vmatpush1.xpose.msra.mxu0 0.0
        %1678 = vmatprep.subr.mxu0 0.0
        %1679 = vmatpush1.xpose.msra.mxu0 0.0
        %1680 = vmatprep.subr.mxu0 0.0
        %1681 = vmatpush1.xpose.msra.mxu0 0.0
        %1682 = vmatprep.subr.mxu0 0.0
        %1683 = vmatpush1.xpose.msra.mxu0 0.0
        %1684 = vmatprep.subr.mxu0 0.0
        %1685 = vmatpush1.xpose.msra.mxu0 0.0
        %1686 = vmatprep.subr.mxu0 0.0
        %1687 = vmatpush1.xpose.msra.mxu0 0.0
        %1688 = vmatprep.subr.mxu0 0.0
        %1689 = vmatpush1.xpose.msra.mxu0 0.0
        %1690 = vmatprep.subr.mxu0 0.0
        %1691 = vmatpush1.xpose.msra.mxu0 0.0
        %1692 = vmatprep.subr.mxu0 0.0
        %1693 = vmatpush1.xpose.msra.mxu0 0.0
        %1694 = vmatprep.subr.mxu0 0.0
        %1695 = vmatpush1.xpose.msra.mxu0 0.0
        %1696 = vmatprep.subr.mxu0 0.0
        %1697 = vmatpush1.xpose.msra.mxu0 0.0
        %1698 = vmatprep.subr.mxu0 0.0
        %1699 = vmatpush1.xpose.msra.mxu0 0.0
        %1700 = vmatprep.mubr.f32.mxu0 0.0
        %1701 = vmatmul.mubr.f32.gmra.mrb[0].mxu0 %v1632
        %v1702 = vpop.f32.mrb[0].mxu0
        %v1703 = vadd.f32 0.0, %v1702
        %v1704 = vpop.f32.mrb[0].mxu0
        %1705 = vdwg.mxu0
        %v1706 = vmul.f32 %v1703, 0.35355338
        %v1707 = vsel %vm782, %v1706, -inf
        %1708 = vmax.xlane.f32.xlu0 %v1707
        %v1709 = vpop.xlane.xlu0 %1708
        %v1710 = vsub.f32 %v1706, %v1709
        %v1711 = vmul.f32 %v1710, 1.442695
        %v1712 = vpow.pop %v1711
        %v1713 = vsel %vm782, %v1712, 0.0
        %1714 = vadd.xlane.f32.xlu0 %v1713
        %v1715 = vpop.xlane.xlu0 %1714
        %v1716 = vrcp.pop %v1715
        %v1717 = vmul.f32 %v1712, %v1716
        %1718 = vrot.lane.b32.xlu0 %v776, 56
        %v1719 = vpop.permute.xlu0 %1718
        %v1722 = vsel %vm782, %v1717, 0
        %1724 = vmatprep.subr.mxu0 0.0
        %1725 = vmatpush1.msra.mxu0 %v1719
        %1726 = vmatprep.subr.mxu0 0.0
        %1727 = vmatpush1.msra.mxu0 0.0
        %1728 = vmatprep.subr.mxu0 0.0
        %1729 = vmatpush1.msra.mxu0 0.0
        %1730 = vmatprep.subr.mxu0 0.0
        %1731 = vmatpush1.msra.mxu0 0.0
        %1732 = vmatprep.subr.mxu0 0.0
        %1733 = vmatpush1.msra.mxu0 0.0
        %1734 = vmatprep.subr.mxu0 0.0
        %1735 = vmatpush1.msra.mxu0 0.0
        %1736 = vmatprep.subr.mxu0 0.0
        %1737 = vmatpush1.msra.mxu0 0.0
        %1738 = vmatprep.subr.mxu0 0.0
        %1739 = vmatpush1.msra.mxu0 0.0
        %1740 = vmatprep.subr.mxu0 0.0
        %1741 = vmatpush1.msra.mxu0 0.0
        %1742 = vmatprep.subr.mxu0 0.0
        %1743 = vmatpush1.msra.mxu0 0.0
        %1744 = vmatprep.subr.mxu0 0.0
        %1745 = vmatpush1.msra.mxu0 0.0
        %1746 = vmatprep.subr.mxu0 0.0
        %1747 = vmatpush1.msra.mxu0 0.0
        %1748 = vmatprep.subr.mxu0 0.0
        %1749 = vmatpush1.msra.mxu0 0.0
        %1750 = vmatprep.subr.mxu0 0.0
        %1751 = vmatpush1.msra.mxu0 0.0
        %1752 = vmatprep.subr.mxu0 0.0
        %1753 = vmatpush1.msra.mxu0 0.0
        %1754 = vmatprep.subr.mxu0 0.0
        %1755 = vmatpush1.msra.mxu0 0.0
        %1756 = vmatprep.subr.mxu0 0.0
        %1757 = vmatpush1.msra.mxu0 0.0
        %1758 = vmatprep.subr.mxu0 0.0
        %1759 = vmatpush1.msra.mxu0 0.0
        %1760 = vmatprep.subr.mxu0 0.0
        %1761 = vmatpush1.msra.mxu0 0.0
        %1762 = vmatprep.subr.mxu0 0.0
        %1763 = vmatpush1.msra.mxu0 0.0
        %1764 = vmatprep.subr.mxu0 0.0
        %1765 = vmatpush1.msra.mxu0 0.0
        %1766 = vmatprep.subr.mxu0 0.0
        %1767 = vmatpush1.msra.mxu0 0.0
        %1768 = vmatprep.subr.mxu0 0.0
        %1769 = vmatpush1.msra.mxu0 0.0
        %1770 = vmatprep.subr.mxu0 0.0
        %1771 = vmatpush1.msra.mxu0 0.0
        %1772 = vmatprep.subr.mxu0 0.0
        %1773 = vmatpush1.msra.mxu0 0.0
        %1774 = vmatprep.subr.mxu0 0.0
        %1775 = vmatpush1.msra.mxu0 0.0
        %1776 = vmatprep.subr.mxu0 0.0
        %1777 = vmatpush1.msra.mxu0 0.0
        %1778 = vmatprep.subr.mxu0 0.0
        %1779 = vmatpush1.msra.mxu0 0.0
        %1780 = vmatprep.subr.mxu0 0.0
        %1781 = vmatpush1.msra.mxu0 0.0
        %1782 = vmatprep.subr.mxu0 0.0
        %1783 = vmatpush1.msra.mxu0 0.0
        %1784 = vmatprep.subr.mxu0 0.0
        %1785 = vmatpush1.msra.mxu0 0.0
        %1786 = vmatprep.subr.mxu0 0.0
        %1787 = vmatpush1.msra.mxu0 0.0
        %1788 = vmatprep.mubr.f32.mxu0 0.0
        %1789 = vmatmul.mubr.f32.gmra.mrb[0].mxu0 %v1722
        %v1790 = vpop.f32.mrb[0].mxu0
        %v1791 = vadd.f32 0.0, %v1790
        %v1792 = vpop.f32.mrb[0].mxu0
        %1793 = vdwg.mxu0
        %1795 = vrot.lane.b32.xlu0 %v1791, 8
        %v1796 = vpop.permute.xlu0 %1795
        %1798 = vst.msk [vmem:[#allocation2 + $0x8] sm:$0xff] %vm1116, %v1796
        %1799 = vrot.lane.b32.xlu0 %v776, 112
        %v1800 = vpop.permute.xlu0 %1799
        %1801 = vrot.lane.b32.xlu0 %v776, 80
        %v1802 = vpop.permute.xlu0 %1801
        %v1803 = vsel %vm782, %v1800, 0
        %v1805 = vsel %vm782, %v1802, 0
        %1807 = vmatprep.subr.mxu0 0.0
        %1808 = vmatpush1.xpose.msra.mxu0 %v1805
        %1809 = vmatprep.subr.mxu0 0.0
        %1810 = vmatpush1.xpose.msra.mxu0 0.0
        %1811 = vmatprep.subr.mxu0 0.0
        %1812 = vmatpush1.xpose.msra.mxu0 0.0
        %1813 = vmatprep.subr.mxu0 0.0
        %1814 = vmatpush1.xpose.msra.mxu0 0.0
        %1815 = vmatprep.subr.mxu0 0.0
        %1816 = vmatpush1.xpose.msra.mxu0 0.0
        %1817 = vmatprep.subr.mxu0 0.0
        %1818 = vmatpush1.xpose.msra.mxu0 0.0
        %1819 = vmatprep.subr.mxu0 0.0
        %1820 = vmatpush1.xpose.msra.mxu0 0.0
        %1821 = vmatprep.subr.mxu0 0.0
        %1822 = vmatpush1.xpose.msra.mxu0 0.0
        %1823 = vmatprep.subr.mxu0 0.0
        %1824 = vmatpush1.xpose.msra.mxu0 0.0
        %1825 = vmatprep.subr.mxu0 0.0
        %1826 = vmatpush1.xpose.msra.mxu0 0.0
        %1827 = vmatprep.subr.mxu0 0.0
        %1828 = vmatpush1.xpose.msra.mxu0 0.0
        %1829 = vmatprep.subr.mxu0 0.0
        %1830 = vmatpush1.xpose.msra.mxu0 0.0
        %1831 = vmatprep.subr.mxu0 0.0
        %1832 = vmatpush1.xpose.msra.mxu0 0.0
        %1833 = vmatprep.subr.mxu0 0.0
        %1834 = vmatpush1.xpose.msra.mxu0 0.0
        %1835 = vmatprep.subr.mxu0 0.0
        %1836 = vmatpush1.xpose.msra.mxu0 0.0
        %1837 = vmatprep.subr.mxu0 0.0
        %1838 = vmatpush1.xpose.msra.mxu0 0.0
        %1839 = vmatprep.subr.mxu0 0.0
        %1840 = vmatpush1.xpose.msra.mxu0 0.0
        %1841 = vmatprep.subr.mxu0 0.0
        %1842 = vmatpush1.xpose.msra.mxu0 0.0
        %1843 = vmatprep.subr.mxu0 0.0
        %1844 = vmatpush1.xpose.msra.mxu0 0.0
        %1845 = vmatprep.subr.mxu0 0.0
        %1846 = vmatpush1.xpose.msra.mxu0 0.0
        %1847 = vmatprep.subr.mxu0 0.0
        %1848 = vmatpush1.xpose.msra.mxu0 0.0
        %1849 = vmatprep.subr.mxu0 0.0
        %1850 = vmatpush1.xpose.msra.mxu0 0.0
        %1851 = vmatprep.subr.mxu0 0.0
        %1852 = vmatpush1.xpose.msra.mxu0 0.0
        %1853 = vmatprep.subr.mxu0 0.0
        %1854 = vmatpush1.xpose.msra.mxu0 0.0
        %1855 = vmatprep.subr.mxu0 0.0
        %1856 = vmatpush1.xpose.msra.mxu0 0.0
        %1857 = vmatprep.subr.mxu0 0.0
        %1858 = vmatpush1.xpose.msra.mxu0 0.0
        %1859 = vmatprep.subr.mxu0 0.0
        %1860 = vmatpush1.xpose.msra.mxu0 0.0
        %1861 = vmatprep.subr.mxu0 0.0
        %1862 = vmatpush1.xpose.msra.mxu0 0.0
        %1863 = vmatprep.subr.mxu0 0.0
        %1864 = vmatpush1.xpose.msra.mxu0 0.0
        %1865 = vmatprep.subr.mxu0 0.0
        %1866 = vmatpush1.xpose.msra.mxu0 0.0
        %1867 = vmatprep.subr.mxu0 0.0
        %1868 = vmatpush1.xpose.msra.mxu0 0.0
        %1869 = vmatprep.subr.mxu0 0.0
        %1870 = vmatpush1.xpose.msra.mxu0 0.0
        %1871 = vmatprep.mubr.f32.mxu0 0.0
        %1872 = vmatmul.mubr.f32.gmra.mrb[0].mxu0 %v1803
        %v1873 = vpop.f32.mrb[0].mxu0
        %v1874 = vadd.f32 0.0, %v1873
        %v1875 = vpop.f32.mrb[0].mxu0
        %1876 = vdwg.mxu0
        %v1877 = vmul.f32 %v1874, 0.35355338
        %v1878 = vsel %vm782, %v1877, -inf
        %1879 = vmax.xlane.f32.xlu0 %v1878
        %v1880 = vpop.xlane.xlu0 %1879
        %v1881 = vsub.f32 %v1877, %v1880
        %v1882 = vmul.f32 %v1881, 1.442695
        %v1883 = vpow.pop %v1882
        %v1884 = vsel %vm782, %v1883, 0.0
        %1885 = vadd.xlane.f32.xlu0 %v1884
        %v1886 = vpop.xlane.xlu0 %1885
        %v1887 = vrcp.pop %v1886
        %v1888 = vmul.f32 %v1883, %v1887
        %1889 = vrot.lane.b32.xlu0 %v776, 48
        %v1890 = vpop.permute.xlu0 %1889
        %v1893 = vsel %vm782, %v1888, 0
        %1895 = vmatprep.subr.mxu0 0.0
        %1896 = vmatpush1.msra.mxu0 %v1890
        %1897 = vmatprep.subr.mxu0 0.0
        %1898 = vmatpush1.msra.mxu0 0.0
        %1899 = vmatprep.subr.mxu0 0.0
        %1900 = vmatpush1.msra.mxu0 0.0
        %1901 = vmatprep.subr.mxu0 0.0
        %1902 = vmatpush1.msra.mxu0 0.0
        %1903 = vmatprep.subr.mxu0 0.0
        %1904 = vmatpush1.msra.mxu0 0.0
        %1905 = vmatprep.subr.mxu0 0.0
        %1906 = vmatpush1.msra.mxu0 0.0
        %1907 = vmatprep.subr.mxu0 0.0
        %1908 = vmatpush1.msra.mxu0 0.0
        %1909 = vmatprep.subr.mxu0 0.0
        %1910 = vmatpush1.msra.mxu0 0.0
        %1911 = vmatprep.subr.mxu0 0.0
        %1912 = vmatpush1.msra.mxu0 0.0
        %1913 = vmatprep.subr.mxu0 0.0
        %1914 = vmatpush1.msra.mxu0 0.0
        %1915 = vmatprep.subr.mxu0 0.0
        %1916 = vmatpush1.msra.mxu0 0.0
        %1917 = vmatprep.subr.mxu0 0.0
        %1918 = vmatpush1.msra.mxu0 0.0
        %1919 = vmatprep.subr.mxu0 0.0
        %1920 = vmatpush1.msra.mxu0 0.0
        %1921 = vmatprep.subr.mxu0 0.0
        %1922 = vmatpush1.msra.mxu0 0.0
        %1923 = vmatprep.subr.mxu0 0.0
        %1924 = vmatpush1.msra.mxu0 0.0
        %1925 = vmatprep.subr.mxu0 0.0
        %1926 = vmatpush1.msra.mxu0 0.0
        %1927 = vmatprep.subr.mxu0 0.0
        %1928 = vmatpush1.msra.mxu0 0.0
        %1929 = vmatprep.subr.mxu0 0.0
        %1930 = vmatpush1.msra.mxu0 0.0
        %1931 = vmatprep.subr.mxu0 0.0
        %1932 = vmatpush1.msra.mxu0 0.0
        %1933 = vmatprep.subr.mxu0 0.0
        %1934 = vmatpush1.msra.mxu0 0.0
        %1935 = vmatprep.subr.mxu0 0.0
        %1936 = vmatpush1.msra.mxu0 0.0
        %1937 = vmatprep.subr.mxu0 0.0
        %1938 = vmatpush1.msra.mxu0 0.0
        %1939 = vmatprep.subr.mxu0 0.0
        %1940 = vmatpush1.msra.mxu0 0.0
        %1941 = vmatprep.subr.mxu0 0.0
        %1942 = vmatpush1.msra.mxu0 0.0
        %1943 = vmatprep.subr.mxu0 0.0
        %1944 = vmatpush1.msra.mxu0 0.0
        %1945 = vmatprep.subr.mxu0 0.0
        %1946 = vmatpush1.msra.mxu0 0.0
        %1947 = vmatprep.subr.mxu0 0.0
        %1948 = vmatpush1.msra.mxu0 0.0
        %1949 = vmatprep.subr.mxu0 0.0
        %1950 = vmatpush1.msra.mxu0 0.0
        %1951 = vmatprep.subr.mxu0 0.0
        %1952 = vmatpush1.msra.mxu0 0.0
        %1953 = vmatprep.subr.mxu0 0.0
        %1954 = vmatpush1.msra.mxu0 0.0
        %1955 = vmatprep.subr.mxu0 0.0
        %1956 = vmatpush1.msra.mxu0 0.0
        %1957 = vmatprep.subr.mxu0 0.0
        %1958 = vmatpush1.msra.mxu0 0.0
        %1959 = vmatprep.mubr.f32.mxu0 0.0
        %1960 = vmatmul.mubr.f32.gmra.mrb[0].mxu0 %v1893
        %v1961 = vpop.f32.mrb[0].mxu0
        %v1962 = vadd.f32 0.0, %v1961
        %v1963 = vpop.f32.mrb[0].mxu0
        %1964 = vdwg.mxu0
        %1966 = vrot.lane.b32.xlu0 %v1962, 16
        %v1967 = vpop.permute.xlu0 %1966
        %1969 = vst.msk [vmem:[#allocation2 + $0x8] sm:$0xff] %vm1288, %v1967
        %1970 = vrot.lane.b32.xlu0 %v776, 104
        %v1971 = vpop.permute.xlu0 %1970
        %1972 = vrot.lane.b32.xlu0 %v776, 72
        %v1973 = vpop.permute.xlu0 %1972
        %v1974 = vsel %vm782, %v1971, 0
        %v1976 = vsel %vm782, %v1973, 0
        %1978 = vmatprep.subr.mxu0 0.0
        %1979 = vmatpush1.xpose.msra.mxu0 %v1976
        %1980 = vmatprep.subr.mxu0 0.0
        %1981 = vmatpush1.xpose.msra.mxu0 0.0
        %1982 = vmatprep.subr.mxu0 0.0
        %1983 = vmatpush1.xpose.msra.mxu0 0.0
        %1984 = vmatprep.subr.mxu0 0.0
        %1985 = vmatpush1.xpose.msra.mxu0 0.0
        %1986 = vmatprep.subr.mxu0 0.0
        %1987 = vmatpush1.xpose.msra.mxu0 0.0
        %1988 = vmatprep.subr.mxu0 0.0
        %1989 = vmatpush1.xpose.msra.mxu0 0.0
        %1990 = vmatprep.subr.mxu0 0.0
        %1991 = vmatpush1.xpose.msra.mxu0 0.0
        %1992 = vmatprep.subr.mxu0 0.0
        %1993 = vmatpush1.xpose.msra.mxu0 0.0
        %1994 = vmatprep.subr.mxu0 0.0
        %1995 = vmatpush1.xpose.msra.mxu0 0.0
        %1996 = vmatprep.subr.mxu0 0.0
        %1997 = vmatpush1.xpose.msra.mxu0 0.0
        %1998 = vmatprep.subr.mxu0 0.0
        %1999 = vmatpush1.xpose.msra.mxu0 0.0
        %2000 = vmatprep.subr.mxu0 0.0
        %2001 = vmatpush1.xpose.msra.mxu0 0.0
        %2002 = vmatprep.subr.mxu0 0.0
        %2003 = vmatpush1.xpose.msra.mxu0 0.0
        %2004 = vmatprep.subr.mxu0 0.0
        %2005 = vmatpush1.xpose.msra.mxu0 0.0
        %2006 = vmatprep.subr.mxu0 0.0
        %2007 = vmatpush1.xpose.msra.mxu0 0.0
        %2008 = vmatprep.subr.mxu0 0.0
        %2009 = vmatpush1.xpose.msra.mxu0 0.0
        %2010 = vmatprep.subr.mxu0 0.0
        %2011 = vmatpush1.xpose.msra.mxu0 0.0
        %2012 = vmatprep.subr.mxu0 0.0
        %2013 = vmatpush1.xpose.msra.mxu0 0.0
        %2014 = vmatprep.subr.mxu0 0.0
        %2015 = vmatpush1.xpose.msra.mxu0 0.0
        %2016 = vmatprep.subr.mxu0 0.0
        %2017 = vmatpush1.xpose.msra.mxu0 0.0
        %2018 = vmatprep.subr.mxu0 0.0
        %2019 = vmatpush1.xpose.msra.mxu0 0.0
        %2020 = vmatprep.subr.mxu0 0.0
        %2021 = vmatpush1.xpose.msra.mxu0 0.0
        %2022 = vmatprep.subr.mxu0 0.0
        %2023 = vmatpush1.xpose.msra.mxu0 0.0
        %2024 = vmatprep.subr.mxu0 0.0
        %2025 = vmatpush1.xpose.msra.mxu0 0.0
        %2026 = vmatprep.subr.mxu0 0.0
        %2027 = vmatpush1.xpose.msra.mxu0 0.0
        %2028 = vmatprep.subr.mxu0 0.0
        %2029 = vmatpush1.xpose.msra.mxu0 0.0
        %2030 = vmatprep.subr.mxu0 0.0
        %2031 = vmatpush1.xpose.msra.mxu0 0.0
        %2032 = vmatprep.subr.mxu0 0.0
        %2033 = vmatpush1.xpose.msra.mxu0 0.0
        %2034 = vmatprep.subr.mxu0 0.0
        %2035 = vmatpush1.xpose.msra.mxu0 0.0
        %2036 = vmatprep.subr.mxu0 0.0
        %2037 = vmatpush1.xpose.msra.mxu0 0.0
        %2038 = vmatprep.subr.mxu0 0.0
        %2039 = vmatpush1.xpose.msra.mxu0 0.0
        %2040 = vmatprep.subr.mxu0 0.0
        %2041 = vmatpush1.xpose.msra.mxu0 0.0
        %2042 = vmatprep.mubr.f32.mxu0 0.0
        %2043 = vmatmul.mubr.f32.gmra.mrb[0].mxu0 %v1974
        %v2044 = vpop.f32.mrb[0].mxu0
        %v2045 = vadd.f32 0.0, %v2044
        %v2046 = vpop.f32.mrb[0].mxu0
        %2047 = vdwg.mxu0
        %v2048 = vmul.f32 %v2045, 0.35355338
        %v2049 = vsel %vm782, %v2048, -inf
        %2050 = vmax.xlane.f32.xlu0 %v2049
        %v2051 = vpop.xlane.xlu0 %2050
        %v2052 = vsub.f32 %v2048, %v2051
        %v2053 = vmul.f32 %v2052, 1.442695
        %v2054 = vpow.pop %v2053
        %v2055 = vsel %vm782, %v2054, 0.0
        %2056 = vadd.xlane.f32.xlu0 %v2055
        %v2057 = vpop.xlane.xlu0 %2056
        %v2058 = vrcp.pop %v2057
        %v2059 = vmul.f32 %v2054, %v2058
        %2060 = vrot.lane.b32.xlu0 %v776, 40
        %v2061 = vpop.permute.xlu0 %2060
        %v2064 = vsel %vm782, %v2059, 0
        %2066 = vmatprep.subr.mxu0 0.0
        %2067 = vmatpush1.msra.mxu0 %v2061
        %2068 = vmatprep.subr.mxu0 0.0
        %2069 = vmatpush1.msra.mxu0 0.0
        %2070 = vmatprep.subr.mxu0 0.0
        %2071 = vmatpush1.msra.mxu0 0.0
        %2072 = vmatprep.subr.mxu0 0.0
        %2073 = vmatpush1.msra.mxu0 0.0
        %2074 = vmatprep.subr.mxu0 0.0
        %2075 = vmatpush1.msra.mxu0 0.0
        %2076 = vmatprep.subr.mxu0 0.0
        %2077 = vmatpush1.msra.mxu0 0.0
        %2078 = vmatprep.subr.mxu0 0.0
        %2079 = vmatpush1.msra.mxu0 0.0
        %2080 = vmatprep.subr.mxu0 0.0
        %2081 = vmatpush1.msra.mxu0 0.0
        %2082 = vmatprep.subr.mxu0 0.0
        %2083 = vmatpush1.msra.mxu0 0.0
        %2084 = vmatprep.subr.mxu0 0.0
        %2085 = vmatpush1.msra.mxu0 0.0
        %2086 = vmatprep.subr.mxu0 0.0
        %2087 = vmatpush1.msra.mxu0 0.0
        %2088 = vmatprep.subr.mxu0 0.0
        %2089 = vmatpush1.msra.mxu0 0.0
        %2090 = vmatprep.subr.mxu0 0.0
        %2091 = vmatpush1.msra.mxu0 0.0
        %2092 = vmatprep.subr.mxu0 0.0
        %2093 = vmatpush1.msra.mxu0 0.0
        %2094 = vmatprep.subr.mxu0 0.0
        %2095 = vmatpush1.msra.mxu0 0.0
        %2096 = vmatprep.subr.mxu0 0.0
        %2097 = vmatpush1.msra.mxu0 0.0
        %2098 = vmatprep.subr.mxu0 0.0
        %2099 = vmatpush1.msra.mxu0 0.0
        %2100 = vmatprep.subr.mxu0 0.0
        %2101 = vmatpush1.msra.mxu0 0.0
        %2102 = vmatprep.subr.mxu0 0.0
        %2103 = vmatpush1.msra.mxu0 0.0
        %2104 = vmatprep.subr.mxu0 0.0
        %2105 = vmatpush1.msra.mxu0 0.0
        %2106 = vmatprep.subr.mxu0 0.0
        %2107 = vmatpush1.msra.mxu0 0.0
        %2108 = vmatprep.subr.mxu0 0.0
        %2109 = vmatpush1.msra.mxu0 0.0
        %2110 = vmatprep.subr.mxu0 0.0
        %2111 = vmatpush1.msra.mxu0 0.0
        %2112 = vmatprep.subr.mxu0 0.0
        %2113 = vmatpush1.msra.mxu0 0.0
        %2114 = vmatprep.subr.mxu0 0.0
        %2115 = vmatpush1.msra.mxu0 0.0
        %2116 = vmatprep.subr.mxu0 0.0
        %2117 = vmatpush1.msra.mxu0 0.0
        %2118 = vmatprep.subr.mxu0 0.0
        %2119 = vmatpush1.msra.mxu0 0.0
        %2120 = vmatprep.subr.mxu0 0.0
        %2121 = vmatpush1.msra.mxu0 0.0
        %2122 = vmatprep.subr.mxu0 0.0
        %2123 = vmatpush1.msra.mxu0 0.0
        %2124 = vmatprep.subr.mxu0 0.0
        %2125 = vmatpush1.msra.mxu0 0.0
        %2126 = vmatprep.subr.mxu0 0.0
        %2127 = vmatpush1.msra.mxu0 0.0
        %2128 = vmatprep.subr.mxu0 0.0
        %2129 = vmatpush1.msra.mxu0 0.0
        %2130 = vmatprep.mubr.f32.mxu0 0.0
        %2131 = vmatmul.mubr.f32.gmra.mrb[0].mxu0 %v2064
        %v2132 = vpop.f32.mrb[0].mxu0
        %v2133 = vadd.f32 0.0, %v2132
        %v2134 = vpop.f32.mrb[0].mxu0
        %2135 = vdwg.mxu0
        %2137 = vrot.lane.b32.xlu0 %v2133, 24
        %v2138 = vpop.permute.xlu0 %2137
        %2140 = vst.msk [vmem:[#allocation2 + $0x8] sm:$0xff] %vm1460, %v2138
        %v2141 = vld [vmem:[#allocation2] sm:$0xff]
        %v2142 = vld [vmem:[#allocation2 + $0x8] sm:$0xff]
        %v2143 = vpack.c.bf16 %v2142, %v2141
        %v2144 = vld [vmem:[%s621] sm:$0xf]
        %v2145 = vld [vmem:[%s621 + $0x4] sm:$0xf]
        %v2146 = vld [vmem:[%s621 + $0x8] sm:$0xf]
        %v2147 = vld [vmem:[%s621 + $0xc] sm:$0xf]
        %v2148 = vld [vmem:[%s624] sm:$0x1]
        %v2150 = vlaneseq
        %v2151 = vshrl.u32 %v2150, 7
        %v2152 = vsub.s32 0, %v2151
        %v2153 = vrot.slane %v2148, %v2152
        %v2159 = vunpack.c.l.b16 %v2144
        %v2160 = vunpack.c.l.b16 %v2145
        %v2161 = vunpack.c.l.b16 %v2146
        %v2162 = vunpack.c.l.b16 %v2147
        %v2163 = vpack.c.b16 %v2160, %v2159
        %v2164 = vpack.c.b16 %v2162, %v2161
        %v2168 = vsel %vm734, %v2143, 0
        %2170 = vmatprep.subr.bf16.mxu0 0
        %2171 = vmatpush1.bf16.msra.mxu0 %v2163
        %2172 = vmatprep.subr.bf16.mxu0 0
        %2173 = vmatpush1.bf16.msra.mxu0 %v2164
        %2174 = vmatprep.subr.bf16.mxu0 0
        %2175 = vmatpush1.bf16.msra.mxu0 0
        %2176 = vmatprep.subr.bf16.mxu0 0
        %2177 = vmatpush1.bf16.msra.mxu0 0
        %2178 = vmatprep.subr.bf16.mxu0 0
        %2179 = vmatpush1.bf16.msra.mxu0 0
        %2180 = vmatprep.subr.bf16.mxu0 0
        %2181 = vmatpush1.bf16.msra.mxu0 0
        %2182 = vmatprep.subr.bf16.mxu0 0
        %2183 = vmatpush1.bf16.msra.mxu0 0
        %2184 = vmatprep.subr.bf16.mxu0 0
        %2185 = vmatpush1.bf16.msra.mxu0 0
        %2186 = vmatprep.subr.bf16.mxu0 0
        %2187 = vmatpush1.bf16.msra.mxu0 0
        %2188 = vmatprep.subr.bf16.mxu0 0
        %2189 = vmatpush1.bf16.msra.mxu0 0
        %2190 = vmatprep.subr.bf16.mxu0 0
        %2191 = vmatpush1.bf16.msra.mxu0 0
        %2192 = vmatprep.subr.bf16.mxu0 0
        %2193 = vmatpush1.bf16.msra.mxu0 0
        %2194 = vmatprep.subr.bf16.mxu0 0
        %2195 = vmatpush1.bf16.msra.mxu0 0
        %2196 = vmatprep.subr.bf16.mxu0 0
        %2197 = vmatpush1.bf16.msra.mxu0 0
        %2198 = vmatprep.subr.bf16.mxu0 0
        %2199 = vmatpush1.bf16.msra.mxu0 0
        %2200 = vmatprep.subr.bf16.mxu0 0
        %2201 = vmatpush1.bf16.msra.mxu0 0
        %2202 = vmatprep.mubr.bf16.mxu0 0
        %2203 = vmatmul.mubr.bf16.gmra.mrb[0].mxu0 %v2168
        %v2204 = vpop.f32.mrb[0].mxu0
        %v2205 = vadd.f32 %v2153, %v2204
        %v2206 = vpop.f32.mrb[0].mxu0
        %v2207 = vpop.f32.mrb[0].mxu0
        %v2208 = vadd.f32 %v2153, %v2207
        %v2209 = vpop.f32.mrb[0].mxu0
        %2210 = vdwg.mxu0
        %v2211 = vadd.f32 %v708, %v2205
        %v2212 = vadd.f32 %v709, %v2208
        %v2213 = vld [vmem:[%s627] sm:$0x1]
        %v2214 = vld [vmem:[%s630] sm:$0x1]
        %v2215 = vsel %vm734, %v2211, 0.0
        %2216 = vadd.xlane.f32.xlu0 %v2215
        %v2217 = vpop.xlane.xlu0 %2216
        %v2218 = vsel %vm734, %v2212, 0.0
        %2219 = vadd.xlane.f32.xlu0 %v2218
        %v2220 = vpop.xlane.xlu0 %2219
        %v2221 = vrcp.pop 32.0
        %v2222 = vmul.f32 %v2217, %v2221
        %v2223 = vmul.f32 %v2220, %v2221
        %v2224 = vsub.f32 %v2211, %v2222
        %v2225 = vsub.f32 %v2212, %v2223
        %v2226 = vmul.f32 %v2224, %v2224
        %v2227 = vmul.f32 %v2225, %v2225
        %v2228 = vsel %vm734, %v2226, 0.0
        %2229 = vadd.xlane.f32.xlu0 %v2228
        %v2230 = vpop.xlane.xlu0 %2229
        %v2231 = vsel %vm734, %v2227, 0.0
        %2232 = vadd.xlane.f32.xlu0 %v2231
        %v2233 = vpop.xlane.xlu0 %2232
        %v2234 = vmul.f32 %v2230, %v2221
        %v2235 = vmul.f32 %v2233, %v2221
        %v2236 = vadd.f32 %v2234, 1e-12
        %v2237 = vadd.f32 %v2235, 1e-12
        %v2238 = vrsqrt.pop %v2236
        %v2239 = vrsqrt.pop %v2237
        %v2240 = vmul.f32 %v2224, %v2238
        %v2241 = vmul.f32 %v2225, %v2239
        %v2243 = vlaneseq
        %v2244 = vshrl.u32 %v2243, 7
        %v2245 = vsub.s32 0, %v2244
        %v2246 = vrot.slane %v2213, %v2245
        %v2248 = vmul.f32 %v2240, %v2246
        %v2249 = vmul.f32 %v2241, %v2246
        %v2251 = vlaneseq
        %v2252 = vshrl.u32 %v2251, 7
        %v2253 = vsub.s32 0, %v2252
        %v2254 = vrot.slane %v2214, %v2253
        %v2256 = vadd.f32 %v2248, %v2254
        %v2257 = vadd.f32 %v2249, %v2254
        %v2258 = vpack.c.bf16 %v2257, %v2256
        %v2259 = vld [vmem:[%s635] sm:$0xf]
        %v2260 = vld [vmem:[%s635 + $0x4] sm:$0xf]
        %v2261 = vld [vmem:[%s635 + $0x8] sm:$0xf]
        %v2262 = vld [vmem:[%s635 + $0xc] sm:$0xf]
        %v2263 = vld [vmem:[%s638] sm:$0x1]
        %v2265 = vlaneseq
        %v2266 = vshrl.u32 %v2265, 7
        %v2267 = vsub.s32 0, %v2266
        %v2268 = vrot.slane %v2263, %v2267
        %v2274 = vunpack.c.l.b16 %v2259
        %v2275 = vunpack.c.l.b16 %v2260
        %v2276 = vunpack.c.l.b16 %v2261
        %v2277 = vunpack.c.l.b16 %v2262
        %v2278 = vpack.c.b16 %v2275, %v2274
        %v2279 = vpack.c.b16 %v2277, %v2276
        %v2283 = vsel %vm734, %v2258, 0
        %2285 = vmatprep.subr.bf16.mxu0 0
        %2286 = vmatpush1.bf16.msra.mxu0 %v2278
        %2287 = vmatprep.subr.bf16.mxu0 0
        %2288 = vmatpush1.bf16.msra.mxu0 %v2279
        %2289 = vmatprep.subr.bf16.mxu0 0
        %2290 = vmatpush1.bf16.msra.mxu0 0
        %2291 = vmatprep.subr.bf16.mxu0 0
        %2292 = vmatpush1.bf16.msra.mxu0 0
        %2293 = vmatprep.subr.bf16.mxu0 0
        %2294 = vmatpush1.bf16.msra.mxu0 0
        %2295 = vmatprep.subr.bf16.mxu0 0
        %2296 = vmatpush1.bf16.msra.mxu0 0
        %2297 = vmatprep.subr.bf16.mxu0 0
        %2298 = vmatpush1.bf16.msra.mxu0 0
        %2299 = vmatprep.subr.bf16.mxu0 0
        %2300 = vmatpush1.bf16.msra.mxu0 0
        %2301 = vmatprep.subr.bf16.mxu0 0
        %2302 = vmatpush1.bf16.msra.mxu0 0
        %2303 = vmatprep.subr.bf16.mxu0 0
        %2304 = vmatpush1.bf16.msra.mxu0 0
        %2305 = vmatprep.subr.bf16.mxu0 0
        %2306 = vmatpush1.bf16.msra.mxu0 0
        %2307 = vmatprep.subr.bf16.mxu0 0
        %2308 = vmatpush1.bf16.msra.mxu0 0
        %2309 = vmatprep.subr.bf16.mxu0 0
        %2310 = vmatpush1.bf16.msra.mxu0 0
        %2311 = vmatprep.subr.bf16.mxu0 0
        %2312 = vmatpush1.bf16.msra.mxu0 0
        %2313 = vmatprep.subr.bf16.mxu0 0
        %2314 = vmatpush1.bf16.msra.mxu0 0
        %2315 = vmatprep.subr.bf16.mxu0 0
        %2316 = vmatpush1.bf16.msra.mxu0 0
        %2317 = vmatprep.mubr.bf16.mxu0 0
        %2318 = vmatmul.mubr.bf16.gmra.mrb[0].mxu0 %v2283
        %v2319 = vpop.f32.mrb[0].mxu0
        %v2320 = vadd.f32 %v2268, %v2319
        %v2321 = vpop.f32.mrb[0].mxu0
        %v2322 = vpop.f32.mrb[0].mxu0
        %v2323 = vadd.f32 %v2268, %v2322
        %v2324 = vpop.f32.mrb[0].mxu0
        %2325 = vdwg.mxu0
        %v2326 = vmul.f32 %v2320, 0.5
        %v2327 = vmul.f32 %v2323, 0.5
        %v2328 = vmul.f32 %v2320, 0.70710677
        %v2329 = vmul.f32 %v2323, 0.70710677
        %v2330 = verf.f32.pop %v2328
        %v2331 = verf.f32.pop %v2329
        %v2332 = vadd.f32 %v2330, 1.0
        %v2333 = vadd.f32 %v2331, 1.0
        %v2334 = vmul.f32 %v2326, %v2332
        %v2335 = vmul.f32 %v2327, %v2333
        %v2336 = vpack.c.bf16 %v2335, %v2334
        %v2337 = vld [vmem:[%s643] sm:$0xf]
        %v2338 = vld [vmem:[%s643 + $0x4] sm:$0xf]
        %v2339 = vld [vmem:[%s643 + $0x8] sm:$0xf]
        %v2340 = vld [vmem:[%s643 + $0xc] sm:$0xf]
        %v2341 = vld [vmem:[%s643 + $0x10] sm:$0xf]
        %v2342 = vld [vmem:[%s643 + $0x14] sm:$0xf]
        %v2343 = vld [vmem:[%s643 + $0x18] sm:$0xf]
        %v2344 = vld [vmem:[%s643 + $0x1c] sm:$0xf]
        %v2345 = vld [vmem:[%s643 + $0x20] sm:$0xf]
        %v2346 = vld [vmem:[%s643 + $0x24] sm:$0xf]
        %v2347 = vld [vmem:[%s643 + $0x28] sm:$0xf]
        %v2348 = vld [vmem:[%s643 + $0x2c] sm:$0xf]
        %v2349 = vld [vmem:[%s643 + $0x30] sm:$0xf]
        %v2350 = vld [vmem:[%s643 + $0x34] sm:$0xf]
        %v2351 = vld [vmem:[%s643 + $0x38] sm:$0xf]
        %v2352 = vld [vmem:[%s643 + $0x3c] sm:$0xf]
        %v2353 = vld [vmem:[%s646] sm:$0x1]
        %v2355 = vlaneseq
        %v2356 = vshrl.u32 %v2355, 7
        %v2357 = vsub.s32 0, %v2356
        %v2358 = vrot.slane %v2353, %v2357
        %v2376 = vunpack.c.l.b16 %v2337
        %v2377 = vunpack.c.l.b16 %v2338
        %v2378 = vunpack.c.l.b16 %v2339
        %v2379 = vunpack.c.l.b16 %v2340
        %v2380 = vunpack.c.l.b16 %v2341
        %v2381 = vunpack.c.l.b16 %v2342
        %v2382 = vunpack.c.l.b16 %v2343
        %v2383 = vunpack.c.l.b16 %v2344
        %v2384 = vunpack.c.l.b16 %v2345
        %v2385 = vunpack.c.l.b16 %v2346
        %v2386 = vunpack.c.l.b16 %v2347
        %v2387 = vunpack.c.l.b16 %v2348
        %v2388 = vunpack.c.l.b16 %v2349
        %v2389 = vunpack.c.l.b16 %v2350
        %v2390 = vunpack.c.l.b16 %v2351
        %v2391 = vunpack.c.l.b16 %v2352
        %v2392 = vpack.c.b16 %v2377, %v2376
        %v2393 = vpack.c.b16 %v2379, %v2378
        %v2394 = vpack.c.b16 %v2381, %v2380
        %v2395 = vpack.c.b16 %v2383, %v2382
        %v2396 = vpack.c.b16 %v2385, %v2384
        %v2397 = vpack.c.b16 %v2387, %v2386
        %v2398 = vpack.c.b16 %v2389, %v2388
        %v2399 = vpack.c.b16 %v2391, %v2390
        %2408 = vmatprep.subr.bf16.mxu0 0
        %2409 = vmatpush1.bf16.msra.mxu0 %v2392
        %2410 = vmatprep.subr.bf16.mxu0 0
        %2411 = vmatpush1.bf16.msra.mxu0 %v2393
        %2412 = vmatprep.subr.bf16.mxu0 0
        %2413 = vmatpush1.bf16.msra.mxu0 %v2394
        %2414 = vmatprep.subr.bf16.mxu0 0
        %2415 = vmatpush1.bf16.msra.mxu0 %v2395
        %2416 = vmatprep.subr.bf16.mxu0 0
        %2417 = vmatpush1.bf16.msra.mxu0 %v2396
        %2418 = vmatprep.subr.bf16.mxu0 0
        %2419 = vmatpush1.bf16.msra.mxu0 %v2397
        %2420 = vmatprep.subr.bf16.mxu0 0
        %2421 = vmatpush1.bf16.msra.mxu0 %v2398
        %2422 = vmatprep.subr.bf16.mxu0 0
        %2423 = vmatpush1.bf16.msra.mxu0 %v2399
        %2424 = vmatprep.subr.bf16.mxu0 0
        %2425 = vmatpush1.bf16.msra.mxu0 0
        %2426 = vmatprep.subr.bf16.mxu0 0
        %2427 = vmatpush1.bf16.msra.mxu0 0
        %2428 = vmatprep.subr.bf16.mxu0 0
        %2429 = vmatpush1.bf16.msra.mxu0 0
        %2430 = vmatprep.subr.bf16.mxu0 0
        %2431 = vmatpush1.bf16.msra.mxu0 0
        %2432 = vmatprep.subr.bf16.mxu0 0
        %2433 = vmatpush1.bf16.msra.mxu0 0
        %2434 = vmatprep.subr.bf16.mxu0 0
        %2435 = vmatpush1.bf16.msra.mxu0 0
        %2436 = vmatprep.subr.bf16.mxu0 0
        %2437 = vmatpush1.bf16.msra.mxu0 0
        %2438 = vmatprep.subr.bf16.mxu0 0
        %2439 = vmatpush1.bf16.msra.mxu0 0
        %2440 = vmatprep.mubr.bf16.mxu0 0
        %2441 = vmatmul.mubr.bf16.gmra.mrb[0].mxu0 %v2336
        %v2442 = vpop.f32.mrb[0].mxu0
        %v2443 = vadd.f32 %v2358, %v2442
        %v2444 = vpop.f32.mrb[0].mxu0
        %v2445 = vpop.f32.mrb[0].mxu0
        %v2446 = vadd.f32 %v2358, %v2445
        %v2447 = vpop.f32.mrb[0].mxu0
        %2448 = vdwg.mxu0
        %v2449 = vadd.f32 %v2256, %v2443
        %v2450 = vadd.f32 %v2257, %v2446
        %v2451 = vld [vmem:[%s649] sm:$0x1]
        %v2452 = vld [vmem:[%s652] sm:$0x1]
        %v2453 = vsel %vm734, %v2449, 0.0
        %2454 = vadd.xlane.f32.xlu0 %v2453
        %v2455 = vpop.xlane.xlu0 %2454
        %v2456 = vsel %vm734, %v2450, 0.0
        %2457 = vadd.xlane.f32.xlu0 %v2456
        %v2458 = vpop.xlane.xlu0 %2457
        %v2459 = vmul.f32 %v2455, %v2221
        %v2460 = vmul.f32 %v2458, %v2221
        %v2461 = vsub.f32 %v2449, %v2459
        %v2462 = vsub.f32 %v2450, %v2460
        %v2463 = vmul.f32 %v2461, %v2461
        %v2464 = vmul.f32 %v2462, %v2462
        %v2465 = vsel %vm734, %v2463, 0.0
        %2466 = vadd.xlane.f32.xlu0 %v2465
        %v2467 = vpop.xlane.xlu0 %2466
        %v2468 = vsel %vm734, %v2464, 0.0
        %2469 = vadd.xlane.f32.xlu0 %v2468
        %v2470 = vpop.xlane.xlu0 %2469
        %v2471 = vmul.f32 %v2467, %v2221
        %v2472 = vmul.f32 %v2470, %v2221
        %v2473 = vadd.f32 %v2471, 1e-12
        %v2474 = vadd.f32 %v2472, 1e-12
        %v2475 = vrsqrt.pop %v2473
        %v2476 = vrsqrt.pop %v2474
        %v2477 = vmul.f32 %v2461, %v2475
        %v2478 = vmul.f32 %v2462, %v2476
        %v2480 = vlaneseq
        %v2481 = vshrl.u32 %v2480, 7
        %v2482 = vsub.s32 0, %v2481
        %v2483 = vrot.slane %v2451, %v2482
        %v2485 = vmul.f32 %v2477, %v2483
        %v2486 = vmul.f32 %v2478, %v2483
        %v2488 = vlaneseq
        %v2489 = vshrl.u32 %v2488, 7
        %v2490 = vsub.s32 0, %v2489
        %v2491 = vrot.slane %v2452, %v2490
        %v2493 = vadd.f32 %v2485, %v2491
        %v2494 = vadd.f32 %v2486, %v2491
        %2495 = vst.msk [vmem:[#allocation3] sm:$0xff] %vm734, %v2493
        %2496 = vst.msk [vmem:[#allocation3 + $0x8] sm:$0xff] %vm734, %v2494
        // Predicated region
        $region85: #{tpu_custom_call.1} parent=79 // pred_check
          %p2497 = pneg %p415
        $region86: #{tpu_custom_call.1} parent=79 // pred_check_branch
          %2499 = sbr.rel (%p2497) target = $region88
        $region87: #{tpu_custom_call.1} parent=79 // pred_region
          %s2501 = ssub.s32 256, 256
          %2502 = vsyncadd [#allocation4], %s2501
          %s2503 = sshll.u32 [#allocation3], 4
          %s2504 = int_to_ptr.vmem [resolvable:$true] %s2503
          %2509 = dma.vmem_to_hbm [thread:$0]  %s2504, 256, %s15, [#allocation4], 128, 128, 8
        $region88: #{tpu_custom_call.1} parent=79 // pred_fallthru
          _
        // Predicated region
        $region89: #{tpu_custom_call.1} parent=79 // pred_check
          %p2510 = pneg %p415
        $region90: #{tpu_custom_call.1} parent=79 // pred_check_branch
          %2512 = sbr.rel (%p2510) target = $region92
        $region91: #{tpu_custom_call.1} parent=79 // pred_region
          %2513 = dma.done [#allocation4], 256
        $region92: #{tpu_custom_call.1} parent=79 // pred_fallthru
          _
      $region80: #{tpu_custom_call.1} parent=5 // pred_fallthru
        _
      %p2514 = scmp.le.s32.totalorder 2, %s22
      // Predicated region
      $region93: #{tpu_custom_call.1} parent=5 // pred_check
        %p2515 = pneg %p2514
      $region94: #{tpu_custom_call.1} parent=5 // pred_check_branch
        %2517 = sbr.rel (%p2515) target = $region96
      $region95: #{tpu_custom_call.1} parent=5 // pred_region
        %s2518 = ssub.s32 %s22, 2
      $region96: #{tpu_custom_call.1} parent=5 // pred_fallthru
        _
    $region6: #{tpu_custom_call.1} parent=1 // loop_footer
      %s26 = sadd.s32 1, %s22
    $region7: #{tpu_custom_call.1} parent=1 // loop_footer_branch
      %21 = sbr.rel target = $region3
    $region8: #{tpu_custom_call.1} parent=1 // loop_exit
      _
    %2519 = vsyncpa [#allocation4], 1
    %s2520 = scalar_lea.sflag [#allocation4], 1
    %2521 = vsyncpa %s2520, 1

</llo_original>
